<compile_context>
chip_gen: v7x
topology: tpu7x:2x2x1
jax: 0.10.0
libtpu: 0.0.40
codegen_flags: <defaults>
</compile_context>

<pallas_src>
import functools

import jax
import jax.numpy as jnp
import numpy as np
from jax.experimental import pallas as pl
from jax.experimental.pallas import tpu as pltpu


# ----------------------------------------------------------------------------
# Pallas kernel: one grid step processes Bb batch elements, channel-major.
#   f_ref    : (2, T)       shared TSF temporal attention filters (f32)
#   x_ref    : (Bb, D, T)   per-frame features, original NCDHW-derived layout
#   supw_ref : (2, D, Cp)   sigmoid(cls_wts)-folded, transposed, zero-padded sup_mat
#   wpf_ref  : (Cp, D)      per_frame 1x1x1 conv weight, zero-padded rows
#   bias_ref : (1, Cp)      per_frame bias, zero-padded (f32)
#   out_ref  : (Bb, Cp, T)  channel-major output (== PyTorch layout, Cp padded)
# ----------------------------------------------------------------------------
def super_event_kernel(f_ref, x_ref, supw_ref, wpf_ref, bias_ref, out_ref):
    Bb = x_ref.shape[0]
    cdt = supw_ref.dtype                                   # compute dtype (bf16/f32)

    x = x_ref[...].astype(cdt)                             # (Bb, D, T)
    f = jnp.broadcast_to(f_ref[...].astype(cdt)[None],
                         (Bb,) + f_ref.shape)              # (Bb, 2, T), tiny

    # TSF temporal pooling: se[b, n, d] = sum_t f[n, t] * x[b, d, t]
    # (same batched dot_general pattern as 'bqd,bkd->bqk' -> supported lowering)
    se = jnp.einsum("bnt,bdt->bnd", f, x,
                    preferred_element_type=jnp.float32).astype(cdt)   # (Bb, 2, D)

    # Super-event projection.  sigmoid(cls_wts) mixing is folded into supw in
    # the wrapper, so these are two plain (Bb, D) @ (D, Cp) MXU matmuls.
    se_out = (
        jnp.dot(se[:, 0, :], supw_ref[0], preferred_element_type=jnp.float32)
        + jnp.dot(se[:, 1, :], supw_ref[1], preferred_element_type=jnp.float32)
    )                                                      # (Bb, Cp) f32

    adds = se_out + bias_ref[...]                          # (Bb, Cp) f32 epilogue
    wpf = wpf_ref[...]                                     # (Cp, D), resident

    # per_frame 1x1x1 Conv3d == (Cp, D) @ (D, T) per batch element; static
    # unroll over Bb (Bb <= 16) keeps every dot a plain 2-D MXU matmul.
    for b in range(Bb):
        pf_b = jnp.dot(wpf, x[b], preferred_element_type=jnp.float32)   # (Cp, T)
        add_col = jnp.transpose(adds[b:b + 1, :])                       # (Cp, 1)
        out_ref[b] = (pf_b + add_col).astype(out_ref.dtype)


# ----------------------------------------------------------------------------
# TSF filter construction (tiny scalar math -> plain JAX in the wrapper).
# Returns a single normalized temporal attention of shape (T,).
# ----------------------------------------------------------------------------
def tsf_filter(center, delta, gamma, T):
    c = jnp.tanh(center)                          # (N,)
    d = jnp.tanh(delta)
    g = jnp.tanh(gamma)
    length = jnp.float32(T)
    centers = (length - 1.0) * (c + 1.0) / 2.0    # (N,)
    gammas = jnp.exp(1.5 - 2.0 * jnp.abs(g))      # (N,)
    _ = length * (1.0 - jnp.abs(d))               # deltas (stride term unused, as in reference)
    t = jnp.arange(T, dtype=jnp.float32)          # (T,)
    z = (t[None, :] - centers[:, None]) / gammas[:, None]
    f = 1.0 / (jnp.pi * gammas[:, None] * (z * z + 1.0))          # Cauchy, (N, T)
    f = f / (jnp.sum(f, axis=1, keepdims=True) + 1e-6)
    return jnp.mean(f, axis=0)                    # collapse N filters -> (T,)


def _round_up(x, m):
    return ((x + m - 1) // m) * m


def _num_tensorcores():
    """Best-effort TensorCore count (2 on v7x, 1 on v5e/v6e); never raises."""
    try:
        info = pltpu.get_tpu_info()
        for name in ("num_cores", "core_count", "tensor_core_count", "num_tensorcores"):
            v = getattr(info, name, None)
            if isinstance(v, int) and v > 0:
                return v
    except Exception:
        pass
    try:
        return int(getattr(jax.devices()[0], "num_cores", 1) or 1)
    except Exception:
        return 1


def _choose_block_b(B, T, D, Cp, x_bytes, cdt_bytes, out_bytes,
                    budget_bytes=20 * 2 ** 20, bb_cap=16):
    """Largest divisor of B whose block fits a conservative VMEM budget."""
    # Per batch row: double-buffered x + out pipeline blocks, the in-kernel
    # compute-dtype copy of x and the f32 per_frame tile.
    per_b = D * T * (2 * x_bytes + cdt_bytes) + Cp * T * (2 * out_bytes + 4)
    # VMEM-resident weights (constant index_maps; Pallas double-buffers them;
    # only ~1.5 MiB in bf16 so single-buffering (pl.Buffered(1)) is not needed).
    weights = 3 * D * Cp * cdt_bytes * 2 + Cp * 4 * 4
    avail = max(budget_bytes - weights, per_b)
    bb = int(max(1, min(bb_cap, B, avail // per_b)))
    while B % bb:
        bb -= 1
    return bb


# ----------------------------------------------------------------------------
# Wrapper: parameter plumbing + pallas_call.
# ----------------------------------------------------------------------------
def super_event_forward(features, params, *, compute_dtype=jnp.bfloat16,
                        out_dtype=None):
    """features: (B, 1024, T, 1, 1), NCDHW as in the PyTorch module."""
    B, D, T = int(features.shape[0]), int(features.shape[1]), int(features.shape[2])
    C = params["sup_mat"].shape[1]
    Cp = _round_up(C, 128)                 # lane-dense weights/output: pad classes 65 -> 128
    out_dtype = features.dtype if out_dtype is None else out_dtype

    # (B, 1024, T, 1, 1) -> (B, D, T): pure metadata reshape, no HBM traffic.
    x = features.reshape(B, D, T)

    # TSF temporal attention filters (batch independent, tiny -> plain JAX, f32).
    f1 = tsf_filter(params["tsf1_center"], params["tsf1_delta"], params["tsf1_gamma"], T)
    f2 = tsf_filter(params["tsf2_center"], params["tsf2_delta"], params["tsf2_gamma"], T)
    f = jnp.stack([f1, f2], axis=0).astype(jnp.float32)                       # (2, T)

    # Fold sigmoid(cls_wts) into a transposed, zero-padded super-event matrix:
    #   supw[0] = (sigmoid(w) * sup_mat[0]).T ; supw[1] = ((1-sigmoid(w)) * sup_mat[0]).T
    w = jax.nn.sigmoid(params["cls_wts"].astype(jnp.float32))                 # (C,)
    sup = params["sup_mat"][0].astype(jnp.float32)                            # (C, D)
    supw = jnp.stack([jnp.transpose(sup * w[:, None]),
                      jnp.transpose(sup * (1.0 - w)[:, None])], axis=0)       # (2, D, C)
    supw = jnp.pad(supw, ((0, 0), (0, 0), (0, Cp - C))).astype(compute_dtype)  # (2, D, Cp)

    wpf = params["pf_weight"].reshape(C, D).astype(jnp.float32)               # (C, D)
    wpf = jnp.pad(wpf, ((0, Cp - C), (0, 0))).astype(compute_dtype)           # (Cp, D)
    bias = jnp.pad(params["pf_bias"].astype(jnp.float32), (0, Cp - C)).reshape(1, Cp)

    x_bytes = jnp.dtype(features.dtype).itemsize
    cdt_bytes = jnp.dtype(compute_dtype).itemsize
    out_bytes = jnp.dtype(out_dtype).itemsize
    Bb = _choose_block_b(B, T, D, Cp, x_bytes, cdt_bytes, out_bytes)
    # v7x only: keep >= 2 grid steps so the 'parallel' batch axis can be
    # megacore-sharded; on single-TC v5e/v6e we keep the largest tile instead.
    if _num_tensorcores() >= 2 and B // Bb < 2:
        for cand in range(Bb // 2, 0, -1):
            if B % cand == 0 and cand * T >= 512:
                Bb = cand
                break

    out = pl.pallas_call(
        super_event_kernel,
        out_shape=jax.ShapeDtypeStruct((B, Cp, T), out_dtype),
        grid=(B // Bb,),
        in_specs=[
            pl.BlockSpec((2, T), lambda b: (0, 0)),            # shared TSF filters
            pl.BlockSpec((Bb, D, T), lambda b: (b, 0, 0)),     # features
            # Constant index maps -> weights stay VMEM-resident across steps.
            pl.BlockSpec((2, D, Cp), lambda b: (0, 0, 0)),     # folded sup_mat
            pl.BlockSpec((Cp, D), lambda b: (0, 0)),           # per_frame weight
            pl.BlockSpec((1, Cp), lambda b: (0, 0)),           # per_frame bias
        ],
        out_specs=pl.BlockSpec((Bb, Cp, T), lambda b: (b, 0, 0)),
        compiler_params=pltpu.CompilerParams(
            dimension_semantics=("parallel",),
            vmem_limit_bytes=32 * 1024 * 1024,
        ),
    )(f, x, supw, wpf, bias)

    # Drop class padding; (B, C, T) is already the PyTorch channel-major layout.
    return out[:, :C, :][..., None, None]


# ----------------------------------------------------------------------------
# Pure-JAX reference (mirrors the PyTorch forward, eval-mode dropout).
# ----------------------------------------------------------------------------
def super_event_reference(features, params):
    B, D, T = features.shape[0], features.shape[1], features.shape[2]
    C = params["sup_mat"].shape[1]
    hp = jax.lax.Precision.HIGHEST
    x = features.reshape(B, D, T).astype(jnp.float32)                          # (B, D, T)

    f1 = tsf_filter(params["tsf1_center"], params["tsf1_delta"], params["tsf1_gamma"], T)
    f2 = tsf_filter(params["tsf2_center"], params["tsf2_delta"], params["tsf2_gamma"], T)
    se1 = jnp.einsum("t,bdt->bd", f1, x, precision=hp)
    se2 = jnp.einsum("t,bdt->bd", f2, x, precision=hp)
    sef = jnp.stack([se1, se2], axis=1)                                        # (B, 2, D)

    w = jax.nn.sigmoid(params["cls_wts"])
    cw = jnp.stack([w, 1.0 - w], axis=1)                                       # (C, 2)
    sup = jnp.einsum("ck,bkd->bcd", cw, sef, precision=hp)                     # (B, C, D)
    se_out = jnp.sum(params["sup_mat"] * sup, axis=2)                          # (B, C)

    W = params["pf_weight"].reshape(C, D)
    pf = jnp.einsum("cd,bdt->bct", W, x, precision=hp) + params["pf_bias"][None, :, None]
    return (se_out[:, :, None] + pf)[..., None, None]                          # (B, C, T, 1, 1)


def init_params(key, classes=65, dim=1024):
    stdv = 1.0 / np.sqrt(dim)
    ks = jax.random.split(key, 10)
    return {
        "cls_wts": jax.random.normal(ks[0], (classes,), jnp.float32),
        "sup_mat": jax.random.uniform(ks[1], (1, classes, dim), jnp.float32, -stdv, stdv),
        "pf_weight": jax.random.uniform(ks[2], (classes, dim, 1, 1, 1), jnp.float32, -stdv, stdv),
        "pf_bias": jax.random.uniform(ks[3], (classes,), jnp.float32, -stdv, stdv),
        "tsf1_center": 0.5 * jax.random.normal(ks[4], (3,), jnp.float32),
        "tsf1_delta": 0.01 * jax.random.normal(ks[5], (3,), jnp.float32),
        "tsf1_gamma": 0.0001 * jax.random.normal(ks[6], (3,), jnp.float32),
        "tsf2_center": 0.5 * jax.random.normal(ks[7], (3,), jnp.float32),
        "tsf2_delta": 0.01 * jax.random.normal(ks[8], (3,), jnp.float32),
        "tsf2_gamma": 0.0001 * jax.random.normal(ks[9], (3,), jnp.float32),
    }


if __name__ == "__main__":
    B, D, T, C = 2, 1024, 8, 65   # D=1024 is hard-coded by the module
    key = jax.random.PRNGKey(0)
    k_feat, k_par = jax.random.split(key)
    features = jax.random.normal(k_feat, (B, D, T, 1, 1), jnp.float32)
    params = init_params(k_par, classes=C, dim=D)

    ref = super_event_reference(features, params)

    # Default bf16 compute path (HBM-bound kernel; bf16 halves the big streams).
    out_bf16 = jax.block_until_ready(jax.jit(super_event_forward)(features, params))
    assert out_bf16.shape == (B, C, T, 1, 1), out_bf16.shape
    np.testing.assert_allclose(np.asarray(out_bf16), np.asarray(ref), rtol=3e-2, atol=3e-2)

    # f32 compute path: tight check of the kernel semantics.
    fwd_f32 = jax.jit(functools.partial(super_event_forward, compute_dtype=jnp.float32))
    out_f32 = jax.block_until_ready(fwd_f32(features, params))
    assert out_f32.shape == (B, C, T, 1, 1), out_f32.shape
    np.testing.assert_allclose(np.asarray(out_f32), np.asarray(ref), rtol=5e-3, atol=5e-3)

    print("KERNEL_OK")
</pallas_src>

<mosaic_0001>
module attributes {stable_mosaic.version = 11 : i64} {
  func.func @super_event_kernel(%arg0: i32, %arg1: memref<2x8xf32, #tpu.memory_space<vmem>>, %arg2: memref<2x1024x8xf32, #tpu.memory_space<vmem>>, %arg3: memref<2x1024x128xbf16, #tpu.memory_space<vmem>>, %arg4: memref<128x1024xbf16, #tpu.memory_space<vmem>>, %arg5: memref<1x128xf32, #tpu.memory_space<vmem>>, %arg6: memref<2x128x8xf32, #tpu.memory_space<vmem>>) attributes {dimension_semantics = [#tpu.dimension_semantics<parallel>], iteration_bounds = array<i64: 1>, scalar_prefetch = 0 : i64, scratch_operands = 0 : i64, tpu.core_type = #tpu.core_type<tc>, window_params = [{pipeline_mode = #tpu.pipeline_mode<synchronous>, transform_indices = @transform_0, window_bounds = array<i64: 2, 8>}, {transform_indices = @transform_1, window_bounds = array<i64: 2, 1024, 8>}, {pipeline_mode = #tpu.pipeline_mode<synchronous>, transform_indices = @transform_2, window_bounds = array<i64: 2, 1024, 128>}, {pipeline_mode = #tpu.pipeline_mode<synchronous>, transform_indices = @transform_3, window_bounds = array<i64: 128, 1024>}, {pipeline_mode = #tpu.pipeline_mode<synchronous>, transform_indices = @transform_4, window_bounds = array<i64: 1, 128>}, {transform_indices = @transform_5, window_bounds = array<i64: 2, 128, 8>}]} {
    %c0 = arith.constant 0 : index
    %c0_0 = arith.constant 0 : index
    %c0_1 = arith.constant 0 : index
    %0 = vector.load %arg2[%c0, %c0_0, %c0_1] : memref<2x1024x8xf32, #tpu.memory_space<vmem>>, vector<2x1024x8xf32>
    %1 = arith.truncf %0 : vector<2x1024x8xf32> to vector<2x1024x8xbf16>
    %c0_2 = arith.constant 0 : index
    %c0_3 = arith.constant 0 : index
    %2 = vector.load %arg1[%c0_2, %c0_3] : memref<2x8xf32, #tpu.memory_space<vmem>>, vector<2x8xf32>
    %3 = arith.truncf %2 : vector<2x8xf32> to vector<2x8xbf16>
    %4 = vector.shape_cast %3 : vector<2x8xbf16> to vector<1x2x8xbf16>
    %5 = vector.shape_cast %4 : vector<1x2x8xbf16> to vector<1x2x8xbf16>
    %6 = vector.broadcast %5 : vector<1x2x8xbf16> to vector<2x2x8xbf16>
    "tpu.trace_start"() <{level = 10 : i32, message = "bnt,bdt->bnd"}> : () -> ()
    %cst = arith.constant dense<0.000000e+00> : vector<2x2x1024xf32>
    %7 = tpu.matmul %6, %1, %cst {dimension_numbers = #tpu.dot_dimension_numbers<[2], [2], [1], [1], [0, 0, 0, 1, 1, 1], [0], [0]>} : vector<2x2x8xbf16>, vector<2x1024x8xbf16>, vector<2x2x1024xf32> -> vector<2x2x1024xf32>
    "tpu.trace_stop"() : () -> ()
    %8 = arith.truncf %7 : vector<2x2x1024xf32> to vector<2x2x1024xbf16>
    %9 = vector.extract_strided_slice %8 {offsets = [0, 0, 0], sizes = [2, 1, 1024], strides = [1, 1, 1]} : vector<2x2x1024xbf16> to vector<2x1x1024xbf16>
    %10 = vector.shape_cast %9 : vector<2x1x1024xbf16> to vector<2x1024xbf16>
    %c0_4 = arith.constant 0 : index
    %c0_5 = arith.constant 0 : index
    %c0_6 = arith.constant 0 : index
    %11 = vector.load %arg3[%c0_4, %c0_5, %c0_6] : memref<2x1024x128xbf16, #tpu.memory_space<vmem>>, vector<1x1024x128xbf16>
    %12 = vector.shape_cast %11 : vector<1x1024x128xbf16> to vector<1024x128xbf16>
    %cst_7 = arith.constant dense<0.000000e+00> : vector<2x128xf32>
    %13 = tpu.matmul %10, %12, %cst_7 {dimension_numbers = #tpu.dot_dimension_numbers<[1], [0], [0], [1], [0, 0, 1, 1], [], []>} : vector<2x1024xbf16>, vector<1024x128xbf16>, vector<2x128xf32> -> vector<2x128xf32>
    %14 = vector.extract_strided_slice %8 {offsets = [0, 1, 0], sizes = [2, 1, 1024], strides = [1, 1, 1]} : vector<2x2x1024xbf16> to vector<2x1x1024xbf16>
    %15 = vector.shape_cast %14 : vector<2x1x1024xbf16> to vector<2x1024xbf16>
    %c1 = arith.constant 1 : index
    %c0_8 = arith.constant 0 : index
    %c0_9 = arith.constant 0 : index
    %16 = vector.load %arg3[%c1, %c0_8, %c0_9] : memref<2x1024x128xbf16, #tpu.memory_space<vmem>>, vector<1x1024x128xbf16>
    %17 = vector.shape_cast %16 : vector<1x1024x128xbf16> to vector<1024x128xbf16>
    %cst_10 = arith.constant dense<0.000000e+00> : vector<2x128xf32>
    %18 = tpu.matmul %15, %17, %cst_10 {dimension_numbers = #tpu.dot_dimension_numbers<[1], [0], [0], [1], [0, 0, 1, 1], [], []>} : vector<2x1024xbf16>, vector<1024x128xbf16>, vector<2x128xf32> -> vector<2x128xf32>
    %19 = arith.addf %13, %18 : vector<2x128xf32>
    %c0_11 = arith.constant 0 : index
    %c0_12 = arith.constant 0 : index
    %20 = vector.load %arg5[%c0_11, %c0_12] : memref<1x128xf32, #tpu.memory_space<vmem>>, vector<1x128xf32>
    %21 = vector.broadcast %20 : vector<1x128xf32> to vector<2x128xf32>
    %22 = arith.addf %19, %21 : vector<2x128xf32>
    %c0_13 = arith.constant 0 : index
    %c0_14 = arith.constant 0 : index
    %23 = vector.load %arg4[%c0_13, %c0_14] : memref<128x1024xbf16, #tpu.memory_space<vmem>>, vector<128x1024xbf16>
    %24 = vector.extract_strided_slice %1 {offsets = [0, 0, 0], sizes = [1, 1024, 8], strides = [1, 1, 1]} : vector<2x1024x8xbf16> to vector<1x1024x8xbf16>
    %25 = vector.shape_cast %24 : vector<1x1024x8xbf16> to vector<1024x8xbf16>
    %cst_15 = arith.constant dense<0.000000e+00> : vector<128x8xf32>
    %26 = tpu.matmul %23, %25, %cst_15 {dimension_numbers = #tpu.dot_dimension_numbers<[1], [0], [0], [1], [0, 0, 1, 1], [], []>} : vector<128x1024xbf16>, vector<1024x8xbf16>, vector<128x8xf32> -> vector<128x8xf32>
    %27 = vector.extract_strided_slice %22 {offsets = [0, 0], sizes = [1, 128], strides = [1, 1]} : vector<2x128xf32> to vector<1x128xf32>
    %28 = tpu.transpose %27, [1, 0] : vector<1x128xf32> -> vector<128x1xf32>
    %29 = vector.broadcast %28 : vector<128x1xf32> to vector<128x8xf32>
    %30 = arith.addf %26, %29 : vector<128x8xf32>
    %c0_16 = arith.constant 0 : index
    %c0_17 = arith.constant 0 : index
    %c0_18 = arith.constant 0 : index
    %31 = vector.load %arg6[%c0_16, %c0_17, %c0_18] : memref<2x128x8xf32, #tpu.memory_space<vmem>>, vector<1x128x8xf32>
    %32 = vector.shape_cast %31 : vector<1x128x8xf32> to vector<128x8xf32>
    %33 = vector.shape_cast %30 : vector<128x8xf32> to vector<1x128x8xf32>
    tpu.vector_store %arg6[%c0_16, %c0_17, %c0_18], %33 {strides = array<i32>} : memref<2x128x8xf32, #tpu.memory_space<vmem>>, vector<1x128x8xf32>,
    %34 = vector.extract_strided_slice %1 {offsets = [1, 0, 0], sizes = [1, 1024, 8], strides = [1, 1, 1]} : vector<2x1024x8xbf16> to vector<1x1024x8xbf16>
    %35 = vector.shape_cast %34 : vector<1x1024x8xbf16> to vector<1024x8xbf16>
    %cst_19 = arith.constant dense<0.000000e+00> : vector<128x8xf32>
    %36 = tpu.matmul %23, %35, %cst_19 {dimension_numbers = #tpu.dot_dimension_numbers<[1], [0], [0], [1], [0, 0, 1, 1], [], []>} : vector<128x1024xbf16>, vector<1024x8xbf16>, vector<128x8xf32> -> vector<128x8xf32>
    %37 = vector.extract_strided_slice %22 {offsets = [1, 0], sizes = [1, 128], strides = [1, 1]} : vector<2x128xf32> to vector<1x128xf32>
    %38 = tpu.transpose %37, [1, 0] : vector<1x128xf32> -> vector<128x1xf32>
    %39 = vector.broadcast %38 : vector<128x1xf32> to vector<128x8xf32>
    %40 = arith.addf %36, %39 : vector<128x8xf32>
    %c1_20 = arith.constant 1 : index
    %c0_21 = arith.constant 0 : index
    %c0_22 = arith.constant 0 : index
    %41 = vector.load %arg6[%c1_20, %c0_21, %c0_22] : memref<2x128x8xf32, #tpu.memory_space<vmem>>, vector<1x128x8xf32>
    %42 = vector.shape_cast %41 : vector<1x128x8xf32> to vector<128x8xf32>
    %43 = vector.shape_cast %40 : vector<128x8xf32> to vector<1x128x8xf32>
    tpu.vector_store %arg6[%c1_20, %c0_21, %c0_22], %43 {strides = array<i32>} : memref<2x128x8xf32, #tpu.memory_space<vmem>>, vector<1x128x8xf32>,
    return
  }
  func.func @transform_0(%arg0: i32) -> (i32, i32) {
    %c0_i32 = arith.constant 0 : i32
    %c0_i32_0 = arith.constant 0 : i32
    %c0_i32_1 = arith.constant 0 : i32
    return %c0_i32, %c0_i32_0 : i32, i32
  }
  func.func @transform_1(%arg0: i32) -> (i32, i32, i32) {
    %c0_i32 = arith.constant 0 : i32
    %c0_i32_0 = arith.constant 0 : i32
    %c0_i32_1 = arith.constant 0 : i32
    return %arg0, %c0_i32, %c0_i32_0 : i32, i32, i32
  }
  func.func @transform_2(%arg0: i32) -> (i32, i32, i32) {
    %c0_i32 = arith.constant 0 : i32
    %c0_i32_0 = arith.constant 0 : i32
    %c0_i32_1 = arith.constant 0 : i32
    %c0_i32_2 = arith.constant 0 : i32
    return %c0_i32, %c0_i32_0, %c0_i32_1 : i32, i32, i32
  }
  func.func @transform_3(%arg0: i32) -> (i32, i32) {
    %c0_i32 = arith.constant 0 : i32
    %c0_i32_0 = arith.constant 0 : i32
    %c0_i32_1 = arith.constant 0 : i32
    return %c0_i32, %c0_i32_0 : i32, i32
  }
  func.func @transform_4(%arg0: i32) -> (i32, i32) {
    %c0_i32 = arith.constant 0 : i32
    %c0_i32_0 = arith.constant 0 : i32
    %c0_i32_1 = arith.constant 0 : i32
    return %c0_i32, %c0_i32_0 : i32, i32
  }
  func.func @transform_5(%arg0: i32) -> (i32, i32, i32) {
    %c0_i32 = arith.constant 0 : i32
    %c0_i32_0 = arith.constant 0 : i32
    %c0_i32_1 = arith.constant 0 : i32
    return %arg0, %c0_i32, %c0_i32_0 : i32, i32, i32
  }
}

</mosaic_0001>

<llo_original>
// kernel: super_event_forward.1
$region0: #{super_event_forward.1}
  #allocation0 [shape = 'u32[]', space=smem, size = 0x4, offset = 0x4, fixed_abs, tag = 'smem constant byte address 0x4 - core index']
  #allocation1 [shape = 'u32[144,128]{1,0:T(1,128)}', space=vmem, size = 0x12000, scoped, tag = 'internal scratch']
  %s0 = inlined_call_operand.vmem [shape: f32[2,8], index: 0, kind: input, shape index: {}]
  %s1 = inlined_call_operand.vmem [shape: f32[2,1024,8], index: 1, kind: input, shape index: {}]
  %s2 = inlined_call_operand.vmem [shape: bf16[2,1024,128], index: 2, kind: input, shape index: {}]
  %s3 = inlined_call_operand.vmem [shape: bf16[128,1024], index: 3, kind: input, shape index: {}]
  %s4 = inlined_call_operand.vmem [shape: f32[1,128], index: 4, kind: input, shape index: {}]
  %s5 = inlined_call_operand.vmem [shape: f32[2,128,8], index: 5, kind: output, shape index: {}]
  %s6 = sld [smem:[#allocation0]]
  $region30: #{super_event_forward.1} parent=0
    _
  %s8 = ssub.s32 1, %s6
  %s9 = scalar_select 0, %s8, %s6
  // Predicated region
  $region2: #{super_event_forward.1} parent=0 // pred_check
    _
  $region3: #{super_event_forward.1} parent=0 // pred_check_branch
    %11 = sbr.rel (0) target = $region5
  $region4: #{super_event_forward.1} parent=0 // pred_region
    _
  $region5: #{super_event_forward.1} parent=0 // pred_fallthru
    _
  // Predicated region
  $region6: #{super_event_forward.1} parent=0 // pred_check
    _
  $region7: #{super_event_forward.1} parent=0 // pred_check_branch
    %13 = sbr.rel (0) target = $region9
  $region8: #{super_event_forward.1} parent=0 // pred_region
    _
  $region9: #{super_event_forward.1} parent=0 // pred_fallthru
    _
  // Predicated region
  $region10: #{super_event_forward.1} parent=0 // pred_check
    _
  $region11: #{super_event_forward.1} parent=0 // pred_check_branch
    %15 = sbr.rel (0) target = $region13
  $region12: #{super_event_forward.1} parent=0 // pred_region
    _
  $region13: #{super_event_forward.1} parent=0 // pred_fallthru
    _
  // Predicated region
  $region14: #{super_event_forward.1} parent=0 // pred_check
    _
  $region15: #{super_event_forward.1} parent=0 // pred_check_branch
    %17 = sbr.rel (0) target = $region17
  $region16: #{super_event_forward.1} parent=0 // pred_region
    _
  $region17: #{super_event_forward.1} parent=0 // pred_fallthru
    _
  // Predicated region
  $region18: #{super_event_forward.1} parent=0 // pred_check
    _
  $region19: #{super_event_forward.1} parent=0 // pred_check_branch
    %19 = sbr.rel (0) target = $region21
  $region20: #{super_event_forward.1} parent=0 // pred_region
    _
  $region21: #{super_event_forward.1} parent=0 // pred_fallthru
    _
  %v21 = vld [vmem:[%s1] sm:$0xff]
  %v22 = vld [vmem:[%s1 + $0x8] sm:$0xff]
  %v23 = vld [vmem:[%s1 + $0x10] sm:$0xff]
  %v24 = vld [vmem:[%s1 + $0x18] sm:$0xff]
  %v25 = vld [vmem:[%s1 + $0x20] sm:$0xff]
  %v26 = vld [vmem:[%s1 + $0x28] sm:$0xff]
  %v27 = vld [vmem:[%s1 + $0x30] sm:$0xff]
  %v28 = vld [vmem:[%s1 + $0x38] sm:$0xff]
  %v29 = vld [vmem:[%s1 + $0x40] sm:$0xff]
  %v30 = vld [vmem:[%s1 + $0x48] sm:$0xff]
  %v31 = vld [vmem:[%s1 + $0x50] sm:$0xff]
  %v32 = vld [vmem:[%s1 + $0x58] sm:$0xff]
  %v33 = vld [vmem:[%s1 + $0x60] sm:$0xff]
  %v34 = vld [vmem:[%s1 + $0x68] sm:$0xff]
  %v35 = vld [vmem:[%s1 + $0x70] sm:$0xff]
  %v36 = vld [vmem:[%s1 + $0x78] sm:$0xff]
  %v37 = vld [vmem:[%s1 + $0x80] sm:$0xff]
  %v38 = vld [vmem:[%s1 + $0x88] sm:$0xff]
  %v39 = vld [vmem:[%s1 + $0x90] sm:$0xff]
  %v40 = vld [vmem:[%s1 + $0x98] sm:$0xff]
  %v41 = vld [vmem:[%s1 + $0xa0] sm:$0xff]
  %v42 = vld [vmem:[%s1 + $0xa8] sm:$0xff]
  %v43 = vld [vmem:[%s1 + $0xb0] sm:$0xff]
  %v44 = vld [vmem:[%s1 + $0xb8] sm:$0xff]
  %v45 = vld [vmem:[%s1 + $0xc0] sm:$0xff]
  %v46 = vld [vmem:[%s1 + $0xc8] sm:$0xff]
  %v47 = vld [vmem:[%s1 + $0xd0] sm:$0xff]
  %v48 = vld [vmem:[%s1 + $0xd8] sm:$0xff]
  %v49 = vld [vmem:[%s1 + $0xe0] sm:$0xff]
  %v50 = vld [vmem:[%s1 + $0xe8] sm:$0xff]
  %v51 = vld [vmem:[%s1 + $0xf0] sm:$0xff]
  %v52 = vld [vmem:[%s1 + $0xf8] sm:$0xff]
  %v53 = vld [vmem:[%s1 + $0x100] sm:$0xff]
  %v54 = vld [vmem:[%s1 + $0x108] sm:$0xff]
  %v55 = vld [vmem:[%s1 + $0x110] sm:$0xff]
  %v56 = vld [vmem:[%s1 + $0x118] sm:$0xff]
  %v57 = vld [vmem:[%s1 + $0x120] sm:$0xff]
  %v58 = vld [vmem:[%s1 + $0x128] sm:$0xff]
  %v59 = vld [vmem:[%s1 + $0x130] sm:$0xff]
  %v60 = vld [vmem:[%s1 + $0x138] sm:$0xff]
  %v61 = vld [vmem:[%s1 + $0x140] sm:$0xff]
  %v62 = vld [vmem:[%s1 + $0x148] sm:$0xff]
  %v63 = vld [vmem:[%s1 + $0x150] sm:$0xff]
  %v64 = vld [vmem:[%s1 + $0x158] sm:$0xff]
  %v65 = vld [vmem:[%s1 + $0x160] sm:$0xff]
  %v66 = vld [vmem:[%s1 + $0x168] sm:$0xff]
  %v67 = vld [vmem:[%s1 + $0x170] sm:$0xff]
  %v68 = vld [vmem:[%s1 + $0x178] sm:$0xff]
  %v69 = vld [vmem:[%s1 + $0x180] sm:$0xff]
  %v70 = vld [vmem:[%s1 + $0x188] sm:$0xff]
  %v71 = vld [vmem:[%s1 + $0x190] sm:$0xff]
  %v72 = vld [vmem:[%s1 + $0x198] sm:$0xff]
  %v73 = vld [vmem:[%s1 + $0x1a0] sm:$0xff]
  %v74 = vld [vmem:[%s1 + $0x1a8] sm:$0xff]
  %v75 = vld [vmem:[%s1 + $0x1b0] sm:$0xff]
  %v76 = vld [vmem:[%s1 + $0x1b8] sm:$0xff]
  %v77 = vld [vmem:[%s1 + $0x1c0] sm:$0xff]
  %v78 = vld [vmem:[%s1 + $0x1c8] sm:$0xff]
  %v79 = vld [vmem:[%s1 + $0x1d0] sm:$0xff]
  %v80 = vld [vmem:[%s1 + $0x1d8] sm:$0xff]
  %v81 = vld [vmem:[%s1 + $0x1e0] sm:$0xff]
  %v82 = vld [vmem:[%s1 + $0x1e8] sm:$0xff]
  %v83 = vld [vmem:[%s1 + $0x1f0] sm:$0xff]
  %v84 = vld [vmem:[%s1 + $0x1f8] sm:$0xff]
  %v85 = vld [vmem:[%s1 + $0x200] sm:$0xff]
  %v86 = vld [vmem:[%s1 + $0x208] sm:$0xff]
  %v87 = vld [vmem:[%s1 + $0x210] sm:$0xff]
  %v88 = vld [vmem:[%s1 + $0x218] sm:$0xff]
  %v89 = vld [vmem:[%s1 + $0x220] sm:$0xff]
  %v90 = vld [vmem:[%s1 + $0x228] sm:$0xff]
  %v91 = vld [vmem:[%s1 + $0x230] sm:$0xff]
  %v92 = vld [vmem:[%s1 + $0x238] sm:$0xff]
  %v93 = vld [vmem:[%s1 + $0x240] sm:$0xff]
  %v94 = vld [vmem:[%s1 + $0x248] sm:$0xff]
  %v95 = vld [vmem:[%s1 + $0x250] sm:$0xff]
  %v96 = vld [vmem:[%s1 + $0x258] sm:$0xff]
  %v97 = vld [vmem:[%s1 + $0x260] sm:$0xff]
  %v98 = vld [vmem:[%s1 + $0x268] sm:$0xff]
  %v99 = vld [vmem:[%s1 + $0x270] sm:$0xff]
  %v100 = vld [vmem:[%s1 + $0x278] sm:$0xff]
  %v101 = vld [vmem:[%s1 + $0x280] sm:$0xff]
  %v102 = vld [vmem:[%s1 + $0x288] sm:$0xff]
  %v103 = vld [vmem:[%s1 + $0x290] sm:$0xff]
  %v104 = vld [vmem:[%s1 + $0x298] sm:$0xff]
  %v105 = vld [vmem:[%s1 + $0x2a0] sm:$0xff]
  %v106 = vld [vmem:[%s1 + $0x2a8] sm:$0xff]
  %v107 = vld [vmem:[%s1 + $0x2b0] sm:$0xff]
  %v108 = vld [vmem:[%s1 + $0x2b8] sm:$0xff]
  %v109 = vld [vmem:[%s1 + $0x2c0] sm:$0xff]
  %v110 = vld [vmem:[%s1 + $0x2c8] sm:$0xff]
  %v111 = vld [vmem:[%s1 + $0x2d0] sm:$0xff]
  %v112 = vld [vmem:[%s1 + $0x2d8] sm:$0xff]
  %v113 = vld [vmem:[%s1 + $0x2e0] sm:$0xff]
  %v114 = vld [vmem:[%s1 + $0x2e8] sm:$0xff]
  %v115 = vld [vmem:[%s1 + $0x2f0] sm:$0xff]
  %v116 = vld [vmem:[%s1 + $0x2f8] sm:$0xff]
  %v117 = vld [vmem:[%s1 + $0x300] sm:$0xff]
  %v118 = vld [vmem:[%s1 + $0x308] sm:$0xff]
  %v119 = vld [vmem:[%s1 + $0x310] sm:$0xff]
  %v120 = vld [vmem:[%s1 + $0x318] sm:$0xff]
  %v121 = vld [vmem:[%s1 + $0x320] sm:$0xff]
  %v122 = vld [vmem:[%s1 + $0x328] sm:$0xff]
  %v123 = vld [vmem:[%s1 + $0x330] sm:$0xff]
  %v124 = vld [vmem:[%s1 + $0x338] sm:$0xff]
  %v125 = vld [vmem:[%s1 + $0x340] sm:$0xff]
  %v126 = vld [vmem:[%s1 + $0x348] sm:$0xff]
  %v127 = vld [vmem:[%s1 + $0x350] sm:$0xff]
  %v128 = vld [vmem:[%s1 + $0x358] sm:$0xff]
  %v129 = vld [vmem:[%s1 + $0x360] sm:$0xff]
  %v130 = vld [vmem:[%s1 + $0x368] sm:$0xff]
  %v131 = vld [vmem:[%s1 + $0x370] sm:$0xff]
  %v132 = vld [vmem:[%s1 + $0x378] sm:$0xff]
  %v133 = vld [vmem:[%s1 + $0x380] sm:$0xff]
  %v134 = vld [vmem:[%s1 + $0x388] sm:$0xff]
  %v135 = vld [vmem:[%s1 + $0x390] sm:$0xff]
  %v136 = vld [vmem:[%s1 + $0x398] sm:$0xff]
  %v137 = vld [vmem:[%s1 + $0x3a0] sm:$0xff]
  %v138 = vld [vmem:[%s1 + $0x3a8] sm:$0xff]
  %v139 = vld [vmem:[%s1 + $0x3b0] sm:$0xff]
  %v140 = vld [vmem:[%s1 + $0x3b8] sm:$0xff]
  %v141 = vld [vmem:[%s1 + $0x3c0] sm:$0xff]
  %v142 = vld [vmem:[%s1 + $0x3c8] sm:$0xff]
  %v143 = vld [vmem:[%s1 + $0x3d0] sm:$0xff]
  %v144 = vld [vmem:[%s1 + $0x3d8] sm:$0xff]
  %v145 = vld [vmem:[%s1 + $0x3e0] sm:$0xff]
  %v146 = vld [vmem:[%s1 + $0x3e8] sm:$0xff]
  %v147 = vld [vmem:[%s1 + $0x3f0] sm:$0xff]
  %v148 = vld [vmem:[%s1 + $0x3f8] sm:$0xff]
  %v149 = vld [vmem:[%s1 + $0x400] sm:$0xff]
  %v150 = vld [vmem:[%s1 + $0x408] sm:$0xff]
  %v151 = vld [vmem:[%s1 + $0x410] sm:$0xff]
  %v152 = vld [vmem:[%s1 + $0x418] sm:$0xff]
  %v153 = vld [vmem:[%s1 + $0x420] sm:$0xff]
  %v154 = vld [vmem:[%s1 + $0x428] sm:$0xff]
  %v155 = vld [vmem:[%s1 + $0x430] sm:$0xff]
  %v156 = vld [vmem:[%s1 + $0x438] sm:$0xff]
  %v157 = vld [vmem:[%s1 + $0x440] sm:$0xff]
  %v158 = vld [vmem:[%s1 + $0x448] sm:$0xff]
  %v159 = vld [vmem:[%s1 + $0x450] sm:$0xff]
  %v160 = vld [vmem:[%s1 + $0x458] sm:$0xff]
  %v161 = vld [vmem:[%s1 + $0x460] sm:$0xff]
  %v162 = vld [vmem:[%s1 + $0x468] sm:$0xff]
  %v163 = vld [vmem:[%s1 + $0x470] sm:$0xff]
  %v164 = vld [vmem:[%s1 + $0x478] sm:$0xff]
  %v165 = vld [vmem:[%s1 + $0x480] sm:$0xff]
  %v166 = vld [vmem:[%s1 + $0x488] sm:$0xff]
  %v167 = vld [vmem:[%s1 + $0x490] sm:$0xff]
  %v168 = vld [vmem:[%s1 + $0x498] sm:$0xff]
  %v169 = vld [vmem:[%s1 + $0x4a0] sm:$0xff]
  %v170 = vld [vmem:[%s1 + $0x4a8] sm:$0xff]
  %v171 = vld [vmem:[%s1 + $0x4b0] sm:$0xff]
  %v172 = vld [vmem:[%s1 + $0x4b8] sm:$0xff]
  %v173 = vld [vmem:[%s1 + $0x4c0] sm:$0xff]
  %v174 = vld [vmem:[%s1 + $0x4c8] sm:$0xff]
  %v175 = vld [vmem:[%s1 + $0x4d0] sm:$0xff]
  %v176 = vld [vmem:[%s1 + $0x4d8] sm:$0xff]
  %v177 = vld [vmem:[%s1 + $0x4e0] sm:$0xff]
  %v178 = vld [vmem:[%s1 + $0x4e8] sm:$0xff]
  %v179 = vld [vmem:[%s1 + $0x4f0] sm:$0xff]
  %v180 = vld [vmem:[%s1 + $0x4f8] sm:$0xff]
  %v181 = vld [vmem:[%s1 + $0x500] sm:$0xff]
  %v182 = vld [vmem:[%s1 + $0x508] sm:$0xff]
  %v183 = vld [vmem:[%s1 + $0x510] sm:$0xff]
  %v184 = vld [vmem:[%s1 + $0x518] sm:$0xff]
  %v185 = vld [vmem:[%s1 + $0x520] sm:$0xff]
  %v186 = vld [vmem:[%s1 + $0x528] sm:$0xff]
  %v187 = vld [vmem:[%s1 + $0x530] sm:$0xff]
  %v188 = vld [vmem:[%s1 + $0x538] sm:$0xff]
  %v189 = vld [vmem:[%s1 + $0x540] sm:$0xff]
  %v190 = vld [vmem:[%s1 + $0x548] sm:$0xff]
  %v191 = vld [vmem:[%s1 + $0x550] sm:$0xff]
  %v192 = vld [vmem:[%s1 + $0x558] sm:$0xff]
  %v193 = vld [vmem:[%s1 + $0x560] sm:$0xff]
  %v194 = vld [vmem:[%s1 + $0x568] sm:$0xff]
  %v195 = vld [vmem:[%s1 + $0x570] sm:$0xff]
  %v196 = vld [vmem:[%s1 + $0x578] sm:$0xff]
  %v197 = vld [vmem:[%s1 + $0x580] sm:$0xff]
  %v198 = vld [vmem:[%s1 + $0x588] sm:$0xff]
  %v199 = vld [vmem:[%s1 + $0x590] sm:$0xff]
  %v200 = vld [vmem:[%s1 + $0x598] sm:$0xff]
  %v201 = vld [vmem:[%s1 + $0x5a0] sm:$0xff]
  %v202 = vld [vmem:[%s1 + $0x5a8] sm:$0xff]
  %v203 = vld [vmem:[%s1 + $0x5b0] sm:$0xff]
  %v204 = vld [vmem:[%s1 + $0x5b8] sm:$0xff]
  %v205 = vld [vmem:[%s1 + $0x5c0] sm:$0xff]
  %v206 = vld [vmem:[%s1 + $0x5c8] sm:$0xff]
  %v207 = vld [vmem:[%s1 + $0x5d0] sm:$0xff]
  %v208 = vld [vmem:[%s1 + $0x5d8] sm:$0xff]
  %v209 = vld [vmem:[%s1 + $0x5e0] sm:$0xff]
  %v210 = vld [vmem:[%s1 + $0x5e8] sm:$0xff]
  %v211 = vld [vmem:[%s1 + $0x5f0] sm:$0xff]
  %v212 = vld [vmem:[%s1 + $0x5f8] sm:$0xff]
  %v213 = vld [vmem:[%s1 + $0x600] sm:$0xff]
  %v214 = vld [vmem:[%s1 + $0x608] sm:$0xff]
  %v215 = vld [vmem:[%s1 + $0x610] sm:$0xff]
  %v216 = vld [vmem:[%s1 + $0x618] sm:$0xff]
  %v217 = vld [vmem:[%s1 + $0x620] sm:$0xff]
  %v218 = vld [vmem:[%s1 + $0x628] sm:$0xff]
  %v219 = vld [vmem:[%s1 + $0x630] sm:$0xff]
  %v220 = vld [vmem:[%s1 + $0x638] sm:$0xff]
  %v221 = vld [vmem:[%s1 + $0x640] sm:$0xff]
  %v222 = vld [vmem:[%s1 + $0x648] sm:$0xff]
  %v223 = vld [vmem:[%s1 + $0x650] sm:$0xff]
  %v224 = vld [vmem:[%s1 + $0x658] sm:$0xff]
  %v225 = vld [vmem:[%s1 + $0x660] sm:$0xff]
  %v226 = vld [vmem:[%s1 + $0x668] sm:$0xff]
  %v227 = vld [vmem:[%s1 + $0x670] sm:$0xff]
  %v228 = vld [vmem:[%s1 + $0x678] sm:$0xff]
  %v229 = vld [vmem:[%s1 + $0x680] sm:$0xff]
  %v230 = vld [vmem:[%s1 + $0x688] sm:$0xff]
  %v231 = vld [vmem:[%s1 + $0x690] sm:$0xff]
  %v232 = vld [vmem:[%s1 + $0x698] sm:$0xff]
  %v233 = vld [vmem:[%s1 + $0x6a0] sm:$0xff]
  %v234 = vld [vmem:[%s1 + $0x6a8] sm:$0xff]
  %v235 = vld [vmem:[%s1 + $0x6b0] sm:$0xff]
  %v236 = vld [vmem:[%s1 + $0x6b8] sm:$0xff]
  %v237 = vld [vmem:[%s1 + $0x6c0] sm:$0xff]
  %v238 = vld [vmem:[%s1 + $0x6c8] sm:$0xff]
  %v239 = vld [vmem:[%s1 + $0x6d0] sm:$0xff]
  %v240 = vld [vmem:[%s1 + $0x6d8] sm:$0xff]
  %v241 = vld [vmem:[%s1 + $0x6e0] sm:$0xff]
  %v242 = vld [vmem:[%s1 + $0x6e8] sm:$0xff]
  %v243 = vld [vmem:[%s1 + $0x6f0] sm:$0xff]
  %v244 = vld [vmem:[%s1 + $0x6f8] sm:$0xff]
  %v245 = vld [vmem:[%s1 + $0x700] sm:$0xff]
  %v246 = vld [vmem:[%s1 + $0x708] sm:$0xff]
  %v247 = vld [vmem:[%s1 + $0x710] sm:$0xff]
  %v248 = vld [vmem:[%s1 + $0x718] sm:$0xff]
  %v249 = vld [vmem:[%s1 + $0x720] sm:$0xff]
  %v250 = vld [vmem:[%s1 + $0x728] sm:$0xff]
  %v251 = vld [vmem:[%s1 + $0x730] sm:$0xff]
  %v252 = vld [vmem:[%s1 + $0x738] sm:$0xff]
  %v253 = vld [vmem:[%s1 + $0x740] sm:$0xff]
  %v254 = vld [vmem:[%s1 + $0x748] sm:$0xff]
  %v255 = vld [vmem:[%s1 + $0x750] sm:$0xff]
  %v256 = vld [vmem:[%s1 + $0x758] sm:$0xff]
  %v257 = vld [vmem:[%s1 + $0x760] sm:$0xff]
  %v258 = vld [vmem:[%s1 + $0x768] sm:$0xff]
  %v259 = vld [vmem:[%s1 + $0x770] sm:$0xff]
  %v260 = vld [vmem:[%s1 + $0x778] sm:$0xff]
  %v261 = vld [vmem:[%s1 + $0x780] sm:$0xff]
  %v262 = vld [vmem:[%s1 + $0x788] sm:$0xff]
  %v263 = vld [vmem:[%s1 + $0x790] sm:$0xff]
  %v264 = vld [vmem:[%s1 + $0x798] sm:$0xff]
  %v265 = vld [vmem:[%s1 + $0x7a0] sm:$0xff]
  %v266 = vld [vmem:[%s1 + $0x7a8] sm:$0xff]
  %v267 = vld [vmem:[%s1 + $0x7b0] sm:$0xff]
  %v268 = vld [vmem:[%s1 + $0x7b8] sm:$0xff]
  %v269 = vld [vmem:[%s1 + $0x7c0] sm:$0xff]
  %v270 = vld [vmem:[%s1 + $0x7c8] sm:$0xff]
  %v271 = vld [vmem:[%s1 + $0x7d0] sm:$0xff]
  %v272 = vld [vmem:[%s1 + $0x7d8] sm:$0xff]
  %v273 = vld [vmem:[%s1 + $0x7e0] sm:$0xff]
  %v274 = vld [vmem:[%s1 + $0x7e8] sm:$0xff]
  %v275 = vld [vmem:[%s1 + $0x7f0] sm:$0xff]
  %v276 = vld [vmem:[%s1 + $0x7f8] sm:$0xff]
  %v277 = vpack.c.bf16 %v22, %v21
  %v278 = vpack.c.bf16 %v24, %v23
  %v279 = vpack.c.bf16 %v26, %v25
  %v280 = vpack.c.bf16 %v28, %v27
  %v281 = vpack.c.bf16 %v30, %v29
  %v282 = vpack.c.bf16 %v32, %v31
  %v283 = vpack.c.bf16 %v34, %v33
  %v284 = vpack.c.bf16 %v36, %v35
  %v285 = vpack.c.bf16 %v38, %v37
  %v286 = vpack.c.bf16 %v40, %v39
  %v287 = vpack.c.bf16 %v42, %v41
  %v288 = vpack.c.bf16 %v44, %v43
  %v289 = vpack.c.bf16 %v46, %v45
  %v290 = vpack.c.bf16 %v48, %v47
  %v291 = vpack.c.bf16 %v50, %v49
  %v292 = vpack.c.bf16 %v52, %v51
  %v293 = vpack.c.bf16 %v54, %v53
  %v294 = vpack.c.bf16 %v56, %v55
  %v295 = vpack.c.bf16 %v58, %v57
  %v296 = vpack.c.bf16 %v60, %v59
  %v297 = vpack.c.bf16 %v62, %v61
  %v298 = vpack.c.bf16 %v64, %v63
  %v299 = vpack.c.bf16 %v66, %v65
  %v300 = vpack.c.bf16 %v68, %v67
  %v301 = vpack.c.bf16 %v70, %v69
  %v302 = vpack.c.bf16 %v72, %v71
  %v303 = vpack.c.bf16 %v74, %v73
  %v304 = vpack.c.bf16 %v76, %v75
  %v305 = vpack.c.bf16 %v78, %v77
  %v306 = vpack.c.bf16 %v80, %v79
  %v307 = vpack.c.bf16 %v82, %v81
  %v308 = vpack.c.bf16 %v84, %v83
  %v309 = vpack.c.bf16 %v86, %v85
  %v310 = vpack.c.bf16 %v88, %v87
  %v311 = vpack.c.bf16 %v90, %v89
  %v312 = vpack.c.bf16 %v92, %v91
  %v313 = vpack.c.bf16 %v94, %v93
  %v314 = vpack.c.bf16 %v96, %v95
  %v315 = vpack.c.bf16 %v98, %v97
  %v316 = vpack.c.bf16 %v100, %v99
  %v317 = vpack.c.bf16 %v102, %v101
  %v318 = vpack.c.bf16 %v104, %v103
  %v319 = vpack.c.bf16 %v106, %v105
  %v320 = vpack.c.bf16 %v108, %v107
  %v321 = vpack.c.bf16 %v110, %v109
  %v322 = vpack.c.bf16 %v112, %v111
  %v323 = vpack.c.bf16 %v114, %v113
  %v324 = vpack.c.bf16 %v116, %v115
  %v325 = vpack.c.bf16 %v118, %v117
  %v326 = vpack.c.bf16 %v120, %v119
  %v327 = vpack.c.bf16 %v122, %v121
  %v328 = vpack.c.bf16 %v124, %v123
  %v329 = vpack.c.bf16 %v126, %v125
  %v330 = vpack.c.bf16 %v128, %v127
  %v331 = vpack.c.bf16 %v130, %v129
  %v332 = vpack.c.bf16 %v132, %v131
  %v333 = vpack.c.bf16 %v134, %v133
  %v334 = vpack.c.bf16 %v136, %v135
  %v335 = vpack.c.bf16 %v138, %v137
  %v336 = vpack.c.bf16 %v140, %v139
  %v337 = vpack.c.bf16 %v142, %v141
  %v338 = vpack.c.bf16 %v144, %v143
  %v339 = vpack.c.bf16 %v146, %v145
  %v340 = vpack.c.bf16 %v148, %v147
  %v341 = vpack.c.bf16 %v150, %v149
  %v342 = vpack.c.bf16 %v152, %v151
  %v343 = vpack.c.bf16 %v154, %v153
  %v344 = vpack.c.bf16 %v156, %v155
  %v345 = vpack.c.bf16 %v158, %v157
  %v346 = vpack.c.bf16 %v160, %v159
  %v347 = vpack.c.bf16 %v162, %v161
  %v348 = vpack.c.bf16 %v164, %v163
  %v349 = vpack.c.bf16 %v166, %v165
  %v350 = vpack.c.bf16 %v168, %v167
  %v351 = vpack.c.bf16 %v170, %v169
  %v352 = vpack.c.bf16 %v172, %v171
  %v353 = vpack.c.bf16 %v174, %v173
  %v354 = vpack.c.bf16 %v176, %v175
  %v355 = vpack.c.bf16 %v178, %v177
  %v356 = vpack.c.bf16 %v180, %v179
  %v357 = vpack.c.bf16 %v182, %v181
  %v358 = vpack.c.bf16 %v184, %v183
  %v359 = vpack.c.bf16 %v186, %v185
  %v360 = vpack.c.bf16 %v188, %v187
  %v361 = vpack.c.bf16 %v190, %v189
  %v362 = vpack.c.bf16 %v192, %v191
  %v363 = vpack.c.bf16 %v194, %v193
  %v364 = vpack.c.bf16 %v196, %v195
  %v365 = vpack.c.bf16 %v198, %v197
  %v366 = vpack.c.bf16 %v200, %v199
  %v367 = vpack.c.bf16 %v202, %v201
  %v368 = vpack.c.bf16 %v204, %v203
  %v369 = vpack.c.bf16 %v206, %v205
  %v370 = vpack.c.bf16 %v208, %v207
  %v371 = vpack.c.bf16 %v210, %v209
  %v372 = vpack.c.bf16 %v212, %v211
  %v373 = vpack.c.bf16 %v214, %v213
  %v374 = vpack.c.bf16 %v216, %v215
  %v375 = vpack.c.bf16 %v218, %v217
  %v376 = vpack.c.bf16 %v220, %v219
  %v377 = vpack.c.bf16 %v222, %v221
  %v378 = vpack.c.bf16 %v224, %v223
  %v379 = vpack.c.bf16 %v226, %v225
  %v380 = vpack.c.bf16 %v228, %v227
  %v381 = vpack.c.bf16 %v230, %v229
  %v382 = vpack.c.bf16 %v232, %v231
  %v383 = vpack.c.bf16 %v234, %v233
  %v384 = vpack.c.bf16 %v236, %v235
  %v385 = vpack.c.bf16 %v238, %v237
  %v386 = vpack.c.bf16 %v240, %v239
  %v387 = vpack.c.bf16 %v242, %v241
  %v388 = vpack.c.bf16 %v244, %v243
  %v389 = vpack.c.bf16 %v246, %v245
  %v390 = vpack.c.bf16 %v248, %v247
  %v391 = vpack.c.bf16 %v250, %v249
  %v392 = vpack.c.bf16 %v252, %v251
  %v393 = vpack.c.bf16 %v254, %v253
  %v394 = vpack.c.bf16 %v256, %v255
  %v395 = vpack.c.bf16 %v258, %v257
  %v396 = vpack.c.bf16 %v260, %v259
  %v397 = vpack.c.bf16 %v262, %v261
  %v398 = vpack.c.bf16 %v264, %v263
  %v399 = vpack.c.bf16 %v266, %v265
  %v400 = vpack.c.bf16 %v268, %v267
  %v401 = vpack.c.bf16 %v270, %v269
  %v402 = vpack.c.bf16 %v272, %v271
  %v403 = vpack.c.bf16 %v274, %v273
  %v404 = vpack.c.bf16 %v276, %v275
  %v405 = vld [vmem:[%s0] sm:$0x3]
  %v406 = vpack.c.bf16 %v405, %v405
  %vm407 = vcmask 64512
  %v409 = vsel %vm407, %v406, 0
  %v412 = vsel %vm407, %v277, 0
  %v415 = vsel %vm407, %v278, 0
  %v418 = vsel %vm407, %v279, 0
  %v421 = vsel %vm407, %v280, 0
  %v424 = vsel %vm407, %v281, 0
  %v427 = vsel %vm407, %v282, 0
  %v430 = vsel %vm407, %v283, 0
  %v433 = vsel %vm407, %v284, 0
  %v436 = vsel %vm407, %v285, 0
  %v439 = vsel %vm407, %v286, 0
  %v442 = vsel %vm407, %v287, 0
  %v445 = vsel %vm407, %v288, 0
  %v448 = vsel %vm407, %v289, 0
  %v451 = vsel %vm407, %v290, 0
  %v454 = vsel %vm407, %v291, 0
  %v457 = vsel %vm407, %v292, 0
  %v460 = vsel %vm407, %v293, 0
  %v463 = vsel %vm407, %v294, 0
  %v466 = vsel %vm407, %v295, 0
  %v469 = vsel %vm407, %v296, 0
  %v472 = vsel %vm407, %v297, 0
  %v475 = vsel %vm407, %v298, 0
  %v478 = vsel %vm407, %v299, 0
  %v481 = vsel %vm407, %v300, 0
  %v484 = vsel %vm407, %v301, 0
  %v487 = vsel %vm407, %v302, 0
  %v490 = vsel %vm407, %v303, 0
  %v493 = vsel %vm407, %v304, 0
  %v496 = vsel %vm407, %v305, 0
  %v499 = vsel %vm407, %v306, 0
  %v502 = vsel %vm407, %v307, 0
  %v505 = vsel %vm407, %v308, 0
  %v508 = vsel %vm407, %v309, 0
  %v511 = vsel %vm407, %v310, 0
  %v514 = vsel %vm407, %v311, 0
  %v517 = vsel %vm407, %v312, 0
  %v520 = vsel %vm407, %v313, 0
  %v523 = vsel %vm407, %v314, 0
  %v526 = vsel %vm407, %v315, 0
  %v529 = vsel %vm407, %v316, 0
  %v532 = vsel %vm407, %v317, 0
  %v535 = vsel %vm407, %v318, 0
  %v538 = vsel %vm407, %v319, 0
  %v541 = vsel %vm407, %v320, 0
  %v544 = vsel %vm407, %v321, 0
  %v547 = vsel %vm407, %v322, 0
  %v550 = vsel %vm407, %v323, 0
  %v553 = vsel %vm407, %v324, 0
  %v556 = vsel %vm407, %v325, 0
  %v559 = vsel %vm407, %v326, 0
  %v562 = vsel %vm407, %v327, 0
  %v565 = vsel %vm407, %v328, 0
  %v568 = vsel %vm407, %v329, 0
  %v571 = vsel %vm407, %v330, 0
  %v574 = vsel %vm407, %v331, 0
  %v577 = vsel %vm407, %v332, 0
  %v580 = vsel %vm407, %v333, 0
  %v583 = vsel %vm407, %v334, 0
  %v586 = vsel %vm407, %v335, 0
  %v589 = vsel %vm407, %v336, 0
  %v592 = vsel %vm407, %v337, 0
  %v595 = vsel %vm407, %v338, 0
  %v598 = vsel %vm407, %v339, 0
  %v601 = vsel %vm407, %v340, 0
  %603 = vmatprep.subr.bf16.mxu0 0
  %604 = vmatpush1.bf16.xpose.msra.mxu0 %v412
  %605 = vmatprep.subr.bf16.mxu0 0
  %606 = vmatpush1.bf16.xpose.msra.mxu0 %v415
  %607 = vmatprep.subr.bf16.mxu0 0
  %608 = vmatpush1.bf16.xpose.msra.mxu0 %v418
  %609 = vmatprep.subr.bf16.mxu0 0
  %610 = vmatpush1.bf16.xpose.msra.mxu0 %v421
  %611 = vmatprep.subr.bf16.mxu0 0
  %612 = vmatpush1.bf16.xpose.msra.mxu0 %v424
  %613 = vmatprep.subr.bf16.mxu0 0
  %614 = vmatpush1.bf16.xpose.msra.mxu0 %v427
  %615 = vmatprep.subr.bf16.mxu0 0
  %616 = vmatpush1.bf16.xpose.msra.mxu0 %v430
  %617 = vmatprep.subr.bf16.mxu0 0
  %618 = vmatpush1.bf16.xpose.msra.mxu0 %v433
  %619 = vmatprep.subr.bf16.mxu0 0
  %620 = vmatpush1.bf16.xpose.msra.mxu0 %v436
  %621 = vmatprep.subr.bf16.mxu0 0
  %622 = vmatpush1.bf16.xpose.msra.mxu0 %v439
  %623 = vmatprep.subr.bf16.mxu0 0
  %624 = vmatpush1.bf16.xpose.msra.mxu0 %v442
  %625 = vmatprep.subr.bf16.mxu0 0
  %626 = vmatpush1.bf16.xpose.msra.mxu0 %v445
  %627 = vmatprep.subr.bf16.mxu0 0
  %628 = vmatpush1.bf16.xpose.msra.mxu0 %v448
  %629 = vmatprep.subr.bf16.mxu0 0
  %630 = vmatpush1.bf16.xpose.msra.mxu0 %v451
  %631 = vmatprep.subr.bf16.mxu0 0
  %632 = vmatpush1.bf16.xpose.msra.mxu0 %v454
  %633 = vmatprep.subr.bf16.mxu0 0
  %634 = vmatpush1.bf16.xpose.msra.mxu0 %v457
  %635 = vmatprep.mubr.bf16.mxu0 0
  %636 = vmatmul.mubr.bf16.gmra.mrb[0].mxu0 %v409
  %v637 = vpop.f32.mrb[0].mxu0
  %v638 = vadd.f32 0.0, %v637
  %v639 = vpop.f32.mrb[0].mxu0
  %v640 = vadd.f32 0.0, %v639
  %v641 = vpop.f32.mrb[0].mxu0
  %v642 = vpop.f32.mrb[0].mxu0
  %643 = vdwg.mxu0
  %644 = vmatprep.subr.bf16.mxu0 0
  %645 = vmatpush1.bf16.xpose.msra.mxu0 %v460
  %646 = vmatprep.subr.bf16.mxu0 0
  %647 = vmatpush1.bf16.xpose.msra.mxu0 %v463
  %648 = vmatprep.subr.bf16.mxu0 0
  %649 = vmatpush1.bf16.xpose.msra.mxu0 %v466
  %650 = vmatprep.subr.bf16.mxu0 0
  %651 = vmatpush1.bf16.xpose.msra.mxu0 %v469
  %652 = vmatprep.subr.bf16.mxu0 0
  %653 = vmatpush1.bf16.xpose.msra.mxu0 %v472
  %654 = vmatprep.subr.bf16.mxu0 0
  %655 = vmatpush1.bf16.xpose.msra.mxu0 %v475
  %656 = vmatprep.subr.bf16.mxu0 0
  %657 = vmatpush1.bf16.xpose.msra.mxu0 %v478
  %658 = vmatprep.subr.bf16.mxu0 0
  %659 = vmatpush1.bf16.xpose.msra.mxu0 %v481
  %660 = vmatprep.subr.bf16.mxu0 0
  %661 = vmatpush1.bf16.xpose.msra.mxu0 %v484
  %662 = vmatprep.subr.bf16.mxu0 0
  %663 = vmatpush1.bf16.xpose.msra.mxu0 %v487
  %664 = vmatprep.subr.bf16.mxu0 0
  %665 = vmatpush1.bf16.xpose.msra.mxu0 %v490
  %666 = vmatprep.subr.bf16.mxu0 0
  %667 = vmatpush1.bf16.xpose.msra.mxu0 %v493
  %668 = vmatprep.subr.bf16.mxu0 0
  %669 = vmatpush1.bf16.xpose.msra.mxu0 %v496
  %670 = vmatprep.subr.bf16.mxu0 0
  %671 = vmatpush1.bf16.xpose.msra.mxu0 %v499
  %672 = vmatprep.subr.bf16.mxu0 0
  %673 = vmatpush1.bf16.xpose.msra.mxu0 %v502
  %674 = vmatprep.subr.bf16.mxu0 0
  %675 = vmatpush1.bf16.xpose.msra.mxu0 %v505
  %676 = vmatprep.mubr.bf16.mxu0 0
  %677 = vmatmul.mubr.bf16.gmra.mrb[0].mxu0 %v409
  %v678 = vpop.f32.mrb[0].mxu0
  %v679 = vadd.f32 0.0, %v678
  %v680 = vpop.f32.mrb[0].mxu0
  %v681 = vadd.f32 0.0, %v680
  %v682 = vpop.f32.mrb[0].mxu0
  %v683 = vpop.f32.mrb[0].mxu0
  %684 = vdwg.mxu0
  %685 = vmatprep.subr.bf16.mxu0 0
  %686 = vmatpush1.bf16.xpose.msra.mxu0 %v508
  %687 = vmatprep.subr.bf16.mxu0 0
  %688 = vmatpush1.bf16.xpose.msra.mxu0 %v511
  %689 = vmatprep.subr.bf16.mxu0 0
  %690 = vmatpush1.bf16.xpose.msra.mxu0 %v514
  %691 = vmatprep.subr.bf16.mxu0 0
  %692 = vmatpush1.bf16.xpose.msra.mxu0 %v517
  %693 = vmatprep.subr.bf16.mxu0 0
  %694 = vmatpush1.bf16.xpose.msra.mxu0 %v520
  %695 = vmatprep.subr.bf16.mxu0 0
  %696 = vmatpush1.bf16.xpose.msra.mxu0 %v523
  %697 = vmatprep.subr.bf16.mxu0 0
  %698 = vmatpush1.bf16.xpose.msra.mxu0 %v526
  %699 = vmatprep.subr.bf16.mxu0 0
  %700 = vmatpush1.bf16.xpose.msra.mxu0 %v529
  %701 = vmatprep.subr.bf16.mxu0 0
  %702 = vmatpush1.bf16.xpose.msra.mxu0 %v532
  %703 = vmatprep.subr.bf16.mxu0 0
  %704 = vmatpush1.bf16.xpose.msra.mxu0 %v535
  %705 = vmatprep.subr.bf16.mxu0 0
  %706 = vmatpush1.bf16.xpose.msra.mxu0 %v538
  %707 = vmatprep.subr.bf16.mxu0 0
  %708 = vmatpush1.bf16.xpose.msra.mxu0 %v541
  %709 = vmatprep.subr.bf16.mxu0 0
  %710 = vmatpush1.bf16.xpose.msra.mxu0 %v544
  %711 = vmatprep.subr.bf16.mxu0 0
  %712 = vmatpush1.bf16.xpose.msra.mxu0 %v547
  %713 = vmatprep.subr.bf16.mxu0 0
  %714 = vmatpush1.bf16.xpose.msra.mxu0 %v550
  %715 = vmatprep.subr.bf16.mxu0 0
  %716 = vmatpush1.bf16.xpose.msra.mxu0 %v553
  %717 = vmatprep.mubr.bf16.mxu0 0
  %718 = vmatmul.mubr.bf16.gmra.mrb[0].mxu0 %v409
  %v719 = vpop.f32.mrb[0].mxu0
  %v720 = vadd.f32 0.0, %v719
  %v721 = vpop.f32.mrb[0].mxu0
  %v722 = vadd.f32 0.0, %v721
  %v723 = vpop.f32.mrb[0].mxu0
  %v724 = vpop.f32.mrb[0].mxu0
  %725 = vdwg.mxu0
  %726 = vmatprep.subr.bf16.mxu0 0
  %727 = vmatpush1.bf16.xpose.msra.mxu0 %v556
  %728 = vmatprep.subr.bf16.mxu0 0
  %729 = vmatpush1.bf16.xpose.msra.mxu0 %v559
  %730 = vmatprep.subr.bf16.mxu0 0
  %731 = vmatpush1.bf16.xpose.msra.mxu0 %v562
  %732 = vmatprep.subr.bf16.mxu0 0
  %733 = vmatpush1.bf16.xpose.msra.mxu0 %v565
  %734 = vmatprep.subr.bf16.mxu0 0
  %735 = vmatpush1.bf16.xpose.msra.mxu0 %v568
  %736 = vmatprep.subr.bf16.mxu0 0
  %737 = vmatpush1.bf16.xpose.msra.mxu0 %v571
  %738 = vmatprep.subr.bf16.mxu0 0
  %739 = vmatpush1.bf16.xpose.msra.mxu0 %v574
  %740 = vmatprep.subr.bf16.mxu0 0
  %741 = vmatpush1.bf16.xpose.msra.mxu0 %v577
  %742 = vmatprep.subr.bf16.mxu0 0
  %743 = vmatpush1.bf16.xpose.msra.mxu0 %v580
  %744 = vmatprep.subr.bf16.mxu0 0
  %745 = vmatpush1.bf16.xpose.msra.mxu0 %v583
  %746 = vmatprep.subr.bf16.mxu0 0
  %747 = vmatpush1.bf16.xpose.msra.mxu0 %v586
  %748 = vmatprep.subr.bf16.mxu0 0
  %749 = vmatpush1.bf16.xpose.msra.mxu0 %v589
  %750 = vmatprep.subr.bf16.mxu0 0
  %751 = vmatpush1.bf16.xpose.msra.mxu0 %v592
  %752 = vmatprep.subr.bf16.mxu0 0
  %753 = vmatpush1.bf16.xpose.msra.mxu0 %v595
  %754 = vmatprep.subr.bf16.mxu0 0
  %755 = vmatpush1.bf16.xpose.msra.mxu0 %v598
  %756 = vmatprep.subr.bf16.mxu0 0
  %757 = vmatpush1.bf16.xpose.msra.mxu0 %v601
  %758 = vmatprep.mubr.bf16.mxu0 0
  %759 = vmatmul.mubr.bf16.gmra.mrb[0].mxu0 %v409
  %v760 = vpop.f32.mrb[0].mxu0
  %v761 = vadd.f32 0.0, %v760
  %v762 = vpop.f32.mrb[0].mxu0
  %v763 = vadd.f32 0.0, %v762
  %v764 = vpop.f32.mrb[0].mxu0
  %v765 = vpop.f32.mrb[0].mxu0
  %766 = vdwg.mxu0
  %v768 = vsel %vm407, %v341, 0
  %v771 = vsel %vm407, %v342, 0
  %v774 = vsel %vm407, %v343, 0
  %v777 = vsel %vm407, %v344, 0
  %v780 = vsel %vm407, %v345, 0
  %v783 = vsel %vm407, %v346, 0
  %v786 = vsel %vm407, %v347, 0
  %v789 = vsel %vm407, %v348, 0
  %v792 = vsel %vm407, %v349, 0
  %v795 = vsel %vm407, %v350, 0
  %v798 = vsel %vm407, %v351, 0
  %v801 = vsel %vm407, %v352, 0
  %v804 = vsel %vm407, %v353, 0
  %v807 = vsel %vm407, %v354, 0
  %v810 = vsel %vm407, %v355, 0
  %v813 = vsel %vm407, %v356, 0
  %v816 = vsel %vm407, %v357, 0
  %v819 = vsel %vm407, %v358, 0
  %v822 = vsel %vm407, %v359, 0
  %v825 = vsel %vm407, %v360, 0
  %v828 = vsel %vm407, %v361, 0
  %v831 = vsel %vm407, %v362, 0
  %v834 = vsel %vm407, %v363, 0
  %v837 = vsel %vm407, %v364, 0
  %v840 = vsel %vm407, %v365, 0
  %v843 = vsel %vm407, %v366, 0
  %v846 = vsel %vm407, %v367, 0
  %v849 = vsel %vm407, %v368, 0
  %v852 = vsel %vm407, %v369, 0
  %v855 = vsel %vm407, %v370, 0
  %v858 = vsel %vm407, %v371, 0
  %v861 = vsel %vm407, %v372, 0
  %v864 = vsel %vm407, %v373, 0
  %v867 = vsel %vm407, %v374, 0
  %v870 = vsel %vm407, %v375, 0
  %v873 = vsel %vm407, %v376, 0
  %v876 = vsel %vm407, %v377, 0
  %v879 = vsel %vm407, %v378, 0
  %v882 = vsel %vm407, %v379, 0
  %v885 = vsel %vm407, %v380, 0
  %v888 = vsel %vm407, %v381, 0
  %v891 = vsel %vm407, %v382, 0
  %v894 = vsel %vm407, %v383, 0
  %v897 = vsel %vm407, %v384, 0
  %v900 = vsel %vm407, %v385, 0
  %v903 = vsel %vm407, %v386, 0
  %v906 = vsel %vm407, %v387, 0
  %v909 = vsel %vm407, %v388, 0
  %v912 = vsel %vm407, %v389, 0
  %v915 = vsel %vm407, %v390, 0
  %v918 = vsel %vm407, %v391, 0
  %v921 = vsel %vm407, %v392, 0
  %v924 = vsel %vm407, %v393, 0
  %v927 = vsel %vm407, %v394, 0
  %v930 = vsel %vm407, %v395, 0
  %v933 = vsel %vm407, %v396, 0
  %v936 = vsel %vm407, %v397, 0
  %v939 = vsel %vm407, %v398, 0
  %v942 = vsel %vm407, %v399, 0
  %v945 = vsel %vm407, %v400, 0
  %v948 = vsel %vm407, %v401, 0
  %v951 = vsel %vm407, %v402, 0
  %v954 = vsel %vm407, %v403, 0
  %v957 = vsel %vm407, %v404, 0
  %959 = vmatprep.subr.bf16.mxu0 0
  %960 = vmatpush1.bf16.xpose.msra.mxu0 %v768
  %961 = vmatprep.subr.bf16.mxu0 0
  %962 = vmatpush1.bf16.xpose.msra.mxu0 %v771
  %963 = vmatprep.subr.bf16.mxu0 0
  %964 = vmatpush1.bf16.xpose.msra.mxu0 %v774
  %965 = vmatprep.subr.bf16.mxu0 0
  %966 = vmatpush1.bf16.xpose.msra.mxu0 %v777
  %967 = vmatprep.subr.bf16.mxu0 0
  %968 = vmatpush1.bf16.xpose.msra.mxu0 %v780
  %969 = vmatprep.subr.bf16.mxu0 0
  %970 = vmatpush1.bf16.xpose.msra.mxu0 %v783
  %971 = vmatprep.subr.bf16.mxu0 0
  %972 = vmatpush1.bf16.xpose.msra.mxu0 %v786
  %973 = vmatprep.subr.bf16.mxu0 0
  %974 = vmatpush1.bf16.xpose.msra.mxu0 %v789
  %975 = vmatprep.subr.bf16.mxu0 0
  %976 = vmatpush1.bf16.xpose.msra.mxu0 %v792
  %977 = vmatprep.subr.bf16.mxu0 0
  %978 = vmatpush1.bf16.xpose.msra.mxu0 %v795
  %979 = vmatprep.subr.bf16.mxu0 0
  %980 = vmatpush1.bf16.xpose.msra.mxu0 %v798
  %981 = vmatprep.subr.bf16.mxu0 0
  %982 = vmatpush1.bf16.xpose.msra.mxu0 %v801
  %983 = vmatprep.subr.bf16.mxu0 0
  %984 = vmatpush1.bf16.xpose.msra.mxu0 %v804
  %985 = vmatprep.subr.bf16.mxu0 0
  %986 = vmatpush1.bf16.xpose.msra.mxu0 %v807
  %987 = vmatprep.subr.bf16.mxu0 0
  %988 = vmatpush1.bf16.xpose.msra.mxu0 %v810
  %989 = vmatprep.subr.bf16.mxu0 0
  %990 = vmatpush1.bf16.xpose.msra.mxu0 %v813
  %991 = vmatprep.mubr.bf16.mxu0 0
  %992 = vmatmul.mubr.bf16.gmra.mrb[0].mxu0 %v409
  %v993 = vpop.f32.mrb[0].mxu0
  %v994 = vadd.f32 0.0, %v993
  %v995 = vpop.f32.mrb[0].mxu0
  %v996 = vadd.f32 0.0, %v995
  %v997 = vpop.f32.mrb[0].mxu0
  %v998 = vpop.f32.mrb[0].mxu0
  %999 = vdwg.mxu0
  %1000 = vmatprep.subr.bf16.mxu0 0
  %1001 = vmatpush1.bf16.xpose.msra.mxu0 %v816
  %1002 = vmatprep.subr.bf16.mxu0 0
  %1003 = vmatpush1.bf16.xpose.msra.mxu0 %v819
  %1004 = vmatprep.subr.bf16.mxu0 0
  %1005 = vmatpush1.bf16.xpose.msra.mxu0 %v822
  %1006 = vmatprep.subr.bf16.mxu0 0
  %1007 = vmatpush1.bf16.xpose.msra.mxu0 %v825
  %1008 = vmatprep.subr.bf16.mxu0 0
  %1009 = vmatpush1.bf16.xpose.msra.mxu0 %v828
  %1010 = vmatprep.subr.bf16.mxu0 0
  %1011 = vmatpush1.bf16.xpose.msra.mxu0 %v831
  %1012 = vmatprep.subr.bf16.mxu0 0
  %1013 = vmatpush1.bf16.xpose.msra.mxu0 %v834
  %1014 = vmatprep.subr.bf16.mxu0 0
  %1015 = vmatpush1.bf16.xpose.msra.mxu0 %v837
  %1016 = vmatprep.subr.bf16.mxu0 0
  %1017 = vmatpush1.bf16.xpose.msra.mxu0 %v840
  %1018 = vmatprep.subr.bf16.mxu0 0
  %1019 = vmatpush1.bf16.xpose.msra.mxu0 %v843
  %1020 = vmatprep.subr.bf16.mxu0 0
  %1021 = vmatpush1.bf16.xpose.msra.mxu0 %v846
  %1022 = vmatprep.subr.bf16.mxu0 0
  %1023 = vmatpush1.bf16.xpose.msra.mxu0 %v849
  %1024 = vmatprep.subr.bf16.mxu0 0
  %1025 = vmatpush1.bf16.xpose.msra.mxu0 %v852
  %1026 = vmatprep.subr.bf16.mxu0 0
  %1027 = vmatpush1.bf16.xpose.msra.mxu0 %v855
  %1028 = vmatprep.subr.bf16.mxu0 0
  %1029 = vmatpush1.bf16.xpose.msra.mxu0 %v858
  %1030 = vmatprep.subr.bf16.mxu0 0
  %1031 = vmatpush1.bf16.xpose.msra.mxu0 %v861
  %1032 = vmatprep.mubr.bf16.mxu0 0
  %1033 = vmatmul.mubr.bf16.gmra.mrb[0].mxu0 %v409
  %v1034 = vpop.f32.mrb[0].mxu0
  %v1035 = vadd.f32 0.0, %v1034
  %v1036 = vpop.f32.mrb[0].mxu0
  %v1037 = vadd.f32 0.0, %v1036
  %v1038 = vpop.f32.mrb[0].mxu0
  %v1039 = vpop.f32.mrb[0].mxu0
  %1040 = vdwg.mxu0
  %1041 = vmatprep.subr.bf16.mxu0 0
  %1042 = vmatpush1.bf16.xpose.msra.mxu0 %v864
  %1043 = vmatprep.subr.bf16.mxu0 0
  %1044 = vmatpush1.bf16.xpose.msra.mxu0 %v867
  %1045 = vmatprep.subr.bf16.mxu0 0
  %1046 = vmatpush1.bf16.xpose.msra.mxu0 %v870
  %1047 = vmatprep.subr.bf16.mxu0 0
  %1048 = vmatpush1.bf16.xpose.msra.mxu0 %v873
  %1049 = vmatprep.subr.bf16.mxu0 0
  %1050 = vmatpush1.bf16.xpose.msra.mxu0 %v876
  %1051 = vmatprep.subr.bf16.mxu0 0
  %1052 = vmatpush1.bf16.xpose.msra.mxu0 %v879
  %1053 = vmatprep.subr.bf16.mxu0 0
  %1054 = vmatpush1.bf16.xpose.msra.mxu0 %v882
  %1055 = vmatprep.subr.bf16.mxu0 0
  %1056 = vmatpush1.bf16.xpose.msra.mxu0 %v885
  %1057 = vmatprep.subr.bf16.mxu0 0
  %1058 = vmatpush1.bf16.xpose.msra.mxu0 %v888
  %1059 = vmatprep.subr.bf16.mxu0 0
  %1060 = vmatpush1.bf16.xpose.msra.mxu0 %v891
  %1061 = vmatprep.subr.bf16.mxu0 0
  %1062 = vmatpush1.bf16.xpose.msra.mxu0 %v894
  %1063 = vmatprep.subr.bf16.mxu0 0
  %1064 = vmatpush1.bf16.xpose.msra.mxu0 %v897
  %1065 = vmatprep.subr.bf16.mxu0 0
  %1066 = vmatpush1.bf16.xpose.msra.mxu0 %v900
  %1067 = vmatprep.subr.bf16.mxu0 0
  %1068 = vmatpush1.bf16.xpose.msra.mxu0 %v903
  %1069 = vmatprep.subr.bf16.mxu0 0
  %1070 = vmatpush1.bf16.xpose.msra.mxu0 %v906
  %1071 = vmatprep.subr.bf16.mxu0 0
  %1072 = vmatpush1.bf16.xpose.msra.mxu0 %v909
  %1073 = vmatprep.mubr.bf16.mxu0 0
  %1074 = vmatmul.mubr.bf16.gmra.mrb[0].mxu0 %v409
  %v1075 = vpop.f32.mrb[0].mxu0
  %v1076 = vadd.f32 0.0, %v1075
  %v1077 = vpop.f32.mrb[0].mxu0
  %v1078 = vadd.f32 0.0, %v1077
  %v1079 = vpop.f32.mrb[0].mxu0
  %v1080 = vpop.f32.mrb[0].mxu0
  %1081 = vdwg.mxu0
  %1082 = vmatprep.subr.bf16.mxu0 0
  %1083 = vmatpush1.bf16.xpose.msra.mxu0 %v912
  %1084 = vmatprep.subr.bf16.mxu0 0
  %1085 = vmatpush1.bf16.xpose.msra.mxu0 %v915
  %1086 = vmatprep.subr.bf16.mxu0 0
  %1087 = vmatpush1.bf16.xpose.msra.mxu0 %v918
  %1088 = vmatprep.subr.bf16.mxu0 0
  %1089 = vmatpush1.bf16.xpose.msra.mxu0 %v921
  %1090 = vmatprep.subr.bf16.mxu0 0
  %1091 = vmatpush1.bf16.xpose.msra.mxu0 %v924
  %1092 = vmatprep.subr.bf16.mxu0 0
  %1093 = vmatpush1.bf16.xpose.msra.mxu0 %v927
  %1094 = vmatprep.subr.bf16.mxu0 0
  %1095 = vmatpush1.bf16.xpose.msra.mxu0 %v930
  %1096 = vmatprep.subr.bf16.mxu0 0
  %1097 = vmatpush1.bf16.xpose.msra.mxu0 %v933
  %1098 = vmatprep.subr.bf16.mxu0 0
  %1099 = vmatpush1.bf16.xpose.msra.mxu0 %v936
  %1100 = vmatprep.subr.bf16.mxu0 0
  %1101 = vmatpush1.bf16.xpose.msra.mxu0 %v939
  %1102 = vmatprep.subr.bf16.mxu0 0
  %1103 = vmatpush1.bf16.xpose.msra.mxu0 %v942
  %1104 = vmatprep.subr.bf16.mxu0 0
  %1105 = vmatpush1.bf16.xpose.msra.mxu0 %v945
  %1106 = vmatprep.subr.bf16.mxu0 0
  %1107 = vmatpush1.bf16.xpose.msra.mxu0 %v948
  %1108 = vmatprep.subr.bf16.mxu0 0
  %1109 = vmatpush1.bf16.xpose.msra.mxu0 %v951
  %1110 = vmatprep.subr.bf16.mxu0 0
  %1111 = vmatpush1.bf16.xpose.msra.mxu0 %v954
  %1112 = vmatprep.subr.bf16.mxu0 0
  %1113 = vmatpush1.bf16.xpose.msra.mxu0 %v957
  %1114 = vmatprep.mubr.bf16.mxu0 0
  %1115 = vmatmul.mubr.bf16.gmra.mrb[0].mxu0 %v409
  %v1116 = vpop.f32.mrb[0].mxu0
  %v1117 = vadd.f32 0.0, %v1116
  %v1118 = vpop.f32.mrb[0].mxu0
  %v1119 = vadd.f32 0.0, %v1118
  %v1120 = vpop.f32.mrb[0].mxu0
  %v1121 = vpop.f32.mrb[0].mxu0
  %1122 = vdwg.mxu0
  %v1123 = vpack.c.bf16 %v638, %v638
  %v1124 = vpack.c.bf16 %v640, %v640
  %v1125 = vpack.c.bf16 %v679, %v679
  %v1126 = vpack.c.bf16 %v681, %v681
  %v1127 = vpack.c.bf16 %v720, %v720
  %v1128 = vpack.c.bf16 %v722, %v722
  %v1129 = vpack.c.bf16 %v761, %v761
  %v1130 = vpack.c.bf16 %v763, %v763
  %v1131 = vpack.c.bf16 %v994, %v994
  %v1132 = vpack.c.bf16 %v996, %v996
  %v1133 = vpack.c.bf16 %v1035, %v1035
  %v1134 = vpack.c.bf16 %v1037, %v1037
  %v1135 = vpack.c.bf16 %v1076, %v1076
  %v1136 = vpack.c.bf16 %v1078, %v1078
  %v1137 = vpack.c.bf16 %v1117, %v1117
  %v1138 = vpack.c.bf16 %v1119, %v1119
  %v1139 = vld [vmem:[%s2] sm:$0xf]
  %v1140 = vld [vmem:[%s2 + $0x4] sm:$0xf]
  %v1141 = vld [vmem:[%s2 + $0x8] sm:$0xf]
  %v1142 = vld [vmem:[%s2 + $0xc] sm:$0xf]
  %v1143 = vld [vmem:[%s2 + $0x10] sm:$0xf]
  %v1144 = vld [vmem:[%s2 + $0x14] sm:$0xf]
  %v1145 = vld [vmem:[%s2 + $0x18] sm:$0xf]
  %v1146 = vld [vmem:[%s2 + $0x1c] sm:$0xf]
  %v1147 = vld [vmem:[%s2 + $0x20] sm:$0xf]
  %v1148 = vld [vmem:[%s2 + $0x24] sm:$0xf]
  %v1149 = vld [vmem:[%s2 + $0x28] sm:$0xf]
  %v1150 = vld [vmem:[%s2 + $0x2c] sm:$0xf]
  %v1151 = vld [vmem:[%s2 + $0x30] sm:$0xf]
  %v1152 = vld [vmem:[%s2 + $0x34] sm:$0xf]
  %v1153 = vld [vmem:[%s2 + $0x38] sm:$0xf]
  %v1154 = vld [vmem:[%s2 + $0x3c] sm:$0xf]
  %v1155 = vld [vmem:[%s2 + $0x40] sm:$0xf]
  %v1156 = vld [vmem:[%s2 + $0x44] sm:$0xf]
  %v1157 = vld [vmem:[%s2 + $0x48] sm:$0xf]
  %v1158 = vld [vmem:[%s2 + $0x4c] sm:$0xf]
  %v1159 = vld [vmem:[%s2 + $0x50] sm:$0xf]
  %v1160 = vld [vmem:[%s2 + $0x54] sm:$0xf]
  %v1161 = vld [vmem:[%s2 + $0x58] sm:$0xf]
  %v1162 = vld [vmem:[%s2 + $0x5c] sm:$0xf]
  %v1163 = vld [vmem:[%s2 + $0x60] sm:$0xf]
  %v1164 = vld [vmem:[%s2 + $0x64] sm:$0xf]
  %v1165 = vld [vmem:[%s2 + $0x68] sm:$0xf]
  %v1166 = vld [vmem:[%s2 + $0x6c] sm:$0xf]
  %v1167 = vld [vmem:[%s2 + $0x70] sm:$0xf]
  %v1168 = vld [vmem:[%s2 + $0x74] sm:$0xf]
  %v1169 = vld [vmem:[%s2 + $0x78] sm:$0xf]
  %v1170 = vld [vmem:[%s2 + $0x7c] sm:$0xf]
  %v1171 = vld [vmem:[%s2 + $0x80] sm:$0xf]
  %v1172 = vld [vmem:[%s2 + $0x84] sm:$0xf]
  %v1173 = vld [vmem:[%s2 + $0x88] sm:$0xf]
  %v1174 = vld [vmem:[%s2 + $0x8c] sm:$0xf]
  %v1175 = vld [vmem:[%s2 + $0x90] sm:$0xf]
  %v1176 = vld [vmem:[%s2 + $0x94] sm:$0xf]
  %v1177 = vld [vmem:[%s2 + $0x98] sm:$0xf]
  %v1178 = vld [vmem:[%s2 + $0x9c] sm:$0xf]
  %v1179 = vld [vmem:[%s2 + $0xa0] sm:$0xf]
  %v1180 = vld [vmem:[%s2 + $0xa4] sm:$0xf]
  %v1181 = vld [vmem:[%s2 + $0xa8] sm:$0xf]
  %v1182 = vld [vmem:[%s2 + $0xac] sm:$0xf]
  %v1183 = vld [vmem:[%s2 + $0xb0] sm:$0xf]
  %v1184 = vld [vmem:[%s2 + $0xb4] sm:$0xf]
  %v1185 = vld [vmem:[%s2 + $0xb8] sm:$0xf]
  %v1186 = vld [vmem:[%s2 + $0xbc] sm:$0xf]
  %v1187 = vld [vmem:[%s2 + $0xc0] sm:$0xf]
  %v1188 = vld [vmem:[%s2 + $0xc4] sm:$0xf]
  %v1189 = vld [vmem:[%s2 + $0xc8] sm:$0xf]
  %v1190 = vld [vmem:[%s2 + $0xcc] sm:$0xf]
  %v1191 = vld [vmem:[%s2 + $0xd0] sm:$0xf]
  %v1192 = vld [vmem:[%s2 + $0xd4] sm:$0xf]
  %v1193 = vld [vmem:[%s2 + $0xd8] sm:$0xf]
  %v1194 = vld [vmem:[%s2 + $0xdc] sm:$0xf]
  %v1195 = vld [vmem:[%s2 + $0xe0] sm:$0xf]
  %v1196 = vld [vmem:[%s2 + $0xe4] sm:$0xf]
  %v1197 = vld [vmem:[%s2 + $0xe8] sm:$0xf]
  %v1198 = vld [vmem:[%s2 + $0xec] sm:$0xf]
  %v1199 = vld [vmem:[%s2 + $0xf0] sm:$0xf]
  %v1200 = vld [vmem:[%s2 + $0xf4] sm:$0xf]
  %v1201 = vld [vmem:[%s2 + $0xf8] sm:$0xf]
  %v1202 = vld [vmem:[%s2 + $0xfc] sm:$0xf]
  %v1203 = vld [vmem:[%s2 + $0x100] sm:$0xf]
  %v1204 = vld [vmem:[%s2 + $0x104] sm:$0xf]
  %v1205 = vld [vmem:[%s2 + $0x108] sm:$0xf]
  %v1206 = vld [vmem:[%s2 + $0x10c] sm:$0xf]
  %v1207 = vld [vmem:[%s2 + $0x110] sm:$0xf]
  %v1208 = vld [vmem:[%s2 + $0x114] sm:$0xf]
  %v1209 = vld [vmem:[%s2 + $0x118] sm:$0xf]
  %v1210 = vld [vmem:[%s2 + $0x11c] sm:$0xf]
  %v1211 = vld [vmem:[%s2 + $0x120] sm:$0xf]
  %v1212 = vld [vmem:[%s2 + $0x124] sm:$0xf]
  %v1213 = vld [vmem:[%s2 + $0x128] sm:$0xf]
  %v1214 = vld [vmem:[%s2 + $0x12c] sm:$0xf]
  %v1215 = vld [vmem:[%s2 + $0x130] sm:$0xf]
  %v1216 = vld [vmem:[%s2 + $0x134] sm:$0xf]
  %v1217 = vld [vmem:[%s2 + $0x138] sm:$0xf]
  %v1218 = vld [vmem:[%s2 + $0x13c] sm:$0xf]
  %v1219 = vld [vmem:[%s2 + $0x140] sm:$0xf]
  %v1220 = vld [vmem:[%s2 + $0x144] sm:$0xf]
  %v1221 = vld [vmem:[%s2 + $0x148] sm:$0xf]
  %v1222 = vld [vmem:[%s2 + $0x14c] sm:$0xf]
  %v1223 = vld [vmem:[%s2 + $0x150] sm:$0xf]
  %v1224 = vld [vmem:[%s2 + $0x154] sm:$0xf]
  %v1225 = vld [vmem:[%s2 + $0x158] sm:$0xf]
  %v1226 = vld [vmem:[%s2 + $0x15c] sm:$0xf]
  %v1227 = vld [vmem:[%s2 + $0x160] sm:$0xf]
  %v1228 = vld [vmem:[%s2 + $0x164] sm:$0xf]
  %v1229 = vld [vmem:[%s2 + $0x168] sm:$0xf]
  %v1230 = vld [vmem:[%s2 + $0x16c] sm:$0xf]
  %v1231 = vld [vmem:[%s2 + $0x170] sm:$0xf]
  %v1232 = vld [vmem:[%s2 + $0x174] sm:$0xf]
  %v1233 = vld [vmem:[%s2 + $0x178] sm:$0xf]
  %v1234 = vld [vmem:[%s2 + $0x17c] sm:$0xf]
  %v1235 = vld [vmem:[%s2 + $0x180] sm:$0xf]
  %v1236 = vld [vmem:[%s2 + $0x184] sm:$0xf]
  %v1237 = vld [vmem:[%s2 + $0x188] sm:$0xf]
  %v1238 = vld [vmem:[%s2 + $0x18c] sm:$0xf]
  %v1239 = vld [vmem:[%s2 + $0x190] sm:$0xf]
  %v1240 = vld [vmem:[%s2 + $0x194] sm:$0xf]
  %v1241 = vld [vmem:[%s2 + $0x198] sm:$0xf]
  %v1242 = vld [vmem:[%s2 + $0x19c] sm:$0xf]
  %v1243 = vld [vmem:[%s2 + $0x1a0] sm:$0xf]
  %v1244 = vld [vmem:[%s2 + $0x1a4] sm:$0xf]
  %v1245 = vld [vmem:[%s2 + $0x1a8] sm:$0xf]
  %v1246 = vld [vmem:[%s2 + $0x1ac] sm:$0xf]
  %v1247 = vld [vmem:[%s2 + $0x1b0] sm:$0xf]
  %v1248 = vld [vmem:[%s2 + $0x1b4] sm:$0xf]
  %v1249 = vld [vmem:[%s2 + $0x1b8] sm:$0xf]
  %v1250 = vld [vmem:[%s2 + $0x1bc] sm:$0xf]
  %v1251 = vld [vmem:[%s2 + $0x1c0] sm:$0xf]
  %v1252 = vld [vmem:[%s2 + $0x1c4] sm:$0xf]
  %v1253 = vld [vmem:[%s2 + $0x1c8] sm:$0xf]
  %v1254 = vld [vmem:[%s2 + $0x1cc] sm:$0xf]
  %v1255 = vld [vmem:[%s2 + $0x1d0] sm:$0xf]
  %v1256 = vld [vmem:[%s2 + $0x1d4] sm:$0xf]
  %v1257 = vld [vmem:[%s2 + $0x1d8] sm:$0xf]
  %v1258 = vld [vmem:[%s2 + $0x1dc] sm:$0xf]
  %v1259 = vld [vmem:[%s2 + $0x1e0] sm:$0xf]
  %v1260 = vld [vmem:[%s2 + $0x1e4] sm:$0xf]
  %v1261 = vld [vmem:[%s2 + $0x1e8] sm:$0xf]
  %v1262 = vld [vmem:[%s2 + $0x1ec] sm:$0xf]
  %v1263 = vld [vmem:[%s2 + $0x1f0] sm:$0xf]
  %v1264 = vld [vmem:[%s2 + $0x1f4] sm:$0xf]
  %v1265 = vld [vmem:[%s2 + $0x1f8] sm:$0xf]
  %v1266 = vld [vmem:[%s2 + $0x1fc] sm:$0xf]
  %s1267 = scalar_lea.vmem %s2, 512
  %v1268 = vld [vmem:[%s1267] sm:$0xf]
  %v1269 = vld [vmem:[%s1267 + $0x4] sm:$0xf]
  %v1270 = vld [vmem:[%s1267 + $0x8] sm:$0xf]
  %v1271 = vld [vmem:[%s1267 + $0xc] sm:$0xf]
  %v1272 = vld [vmem:[%s1267 + $0x10] sm:$0xf]
  %v1273 = vld [vmem:[%s1267 + $0x14] sm:$0xf]
  %v1274 = vld [vmem:[%s1267 + $0x18] sm:$0xf]
  %v1275 = vld [vmem:[%s1267 + $0x1c] sm:$0xf]
  %v1276 = vld [vmem:[%s1267 + $0x20] sm:$0xf]
  %v1277 = vld [vmem:[%s1267 + $0x24] sm:$0xf]
  %v1278 = vld [vmem:[%s1267 + $0x28] sm:$0xf]
  %v1279 = vld [vmem:[%s1267 + $0x2c] sm:$0xf]
  %v1280 = vld [vmem:[%s1267 + $0x30] sm:$0xf]
  %v1281 = vld [vmem:[%s1267 + $0x34] sm:$0xf]
  %v1282 = vld [vmem:[%s1267 + $0x38] sm:$0xf]
  %v1283 = vld [vmem:[%s1267 + $0x3c] sm:$0xf]
  %v1284 = vld [vmem:[%s1267 + $0x40] sm:$0xf]
  %v1285 = vld [vmem:[%s1267 + $0x44] sm:$0xf]
  %v1286 = vld [vmem:[%s1267 + $0x48] sm:$0xf]
  %v1287 = vld [vmem:[%s1267 + $0x4c] sm:$0xf]
  %v1288 = vld [vmem:[%s1267 + $0x50] sm:$0xf]
  %v1289 = vld [vmem:[%s1267 + $0x54] sm:$0xf]
  %v1290 = vld [vmem:[%s1267 + $0x58] sm:$0xf]
  %v1291 = vld [vmem:[%s1267 + $0x5c] sm:$0xf]
  %v1292 = vld [vmem:[%s1267 + $0x60] sm:$0xf]
  %v1293 = vld [vmem:[%s1267 + $0x64] sm:$0xf]
  %v1294 = vld [vmem:[%s1267 + $0x68] sm:$0xf]
  %v1295 = vld [vmem:[%s1267 + $0x6c] sm:$0xf]
  %v1296 = vld [vmem:[%s1267 + $0x70] sm:$0xf]
  %v1297 = vld [vmem:[%s1267 + $0x74] sm:$0xf]
  %v1298 = vld [vmem:[%s1267 + $0x78] sm:$0xf]
  %v1299 = vld [vmem:[%s1267 + $0x7c] sm:$0xf]
  %v1300 = vld [vmem:[%s1267 + $0x80] sm:$0xf]
  %v1301 = vld [vmem:[%s1267 + $0x84] sm:$0xf]
  %v1302 = vld [vmem:[%s1267 + $0x88] sm:$0xf]
  %v1303 = vld [vmem:[%s1267 + $0x8c] sm:$0xf]
  %v1304 = vld [vmem:[%s1267 + $0x90] sm:$0xf]
  %v1305 = vld [vmem:[%s1267 + $0x94] sm:$0xf]
  %v1306 = vld [vmem:[%s1267 + $0x98] sm:$0xf]
  %v1307 = vld [vmem:[%s1267 + $0x9c] sm:$0xf]
  %v1308 = vld [vmem:[%s1267 + $0xa0] sm:$0xf]
  %v1309 = vld [vmem:[%s1267 + $0xa4] sm:$0xf]
  %v1310 = vld [vmem:[%s1267 + $0xa8] sm:$0xf]
  %v1311 = vld [vmem:[%s1267 + $0xac] sm:$0xf]
  %v1312 = vld [vmem:[%s1267 + $0xb0] sm:$0xf]
  %v1313 = vld [vmem:[%s1267 + $0xb4] sm:$0xf]
  %v1314 = vld [vmem:[%s1267 + $0xb8] sm:$0xf]
  %v1315 = vld [vmem:[%s1267 + $0xbc] sm:$0xf]
  %v1316 = vld [vmem:[%s1267 + $0xc0] sm:$0xf]
  %v1317 = vld [vmem:[%s1267 + $0xc4] sm:$0xf]
  %v1318 = vld [vmem:[%s1267 + $0xc8] sm:$0xf]
  %v1319 = vld [vmem:[%s1267 + $0xcc] sm:$0xf]
  %v1320 = vld [vmem:[%s1267 + $0xd0] sm:$0xf]
  %v1321 = vld [vmem:[%s1267 + $0xd4] sm:$0xf]
  %v1322 = vld [vmem:[%s1267 + $0xd8] sm:$0xf]
  %v1323 = vld [vmem:[%s1267 + $0xdc] sm:$0xf]
  %v1324 = vld [vmem:[%s1267 + $0xe0] sm:$0xf]
  %v1325 = vld [vmem:[%s1267 + $0xe4] sm:$0xf]
  %v1326 = vld [vmem:[%s1267 + $0xe8] sm:$0xf]
  %v1327 = vld [vmem:[%s1267 + $0xec] sm:$0xf]
  %v1328 = vld [vmem:[%s1267 + $0xf0] sm:$0xf]
  %v1329 = vld [vmem:[%s1267 + $0xf4] sm:$0xf]
  %v1330 = vld [vmem:[%s1267 + $0xf8] sm:$0xf]
  %v1331 = vld [vmem:[%s1267 + $0xfc] sm:$0xf]
  %v1332 = vld [vmem:[%s1267 + $0x100] sm:$0xf]
  %v1333 = vld [vmem:[%s1267 + $0x104] sm:$0xf]
  %v1334 = vld [vmem:[%s1267 + $0x108] sm:$0xf]
  %v1335 = vld [vmem:[%s1267 + $0x10c] sm:$0xf]
  %v1336 = vld [vmem:[%s1267 + $0x110] sm:$0xf]
  %v1337 = vld [vmem:[%s1267 + $0x114] sm:$0xf]
  %v1338 = vld [vmem:[%s1267 + $0x118] sm:$0xf]
  %v1339 = vld [vmem:[%s1267 + $0x11c] sm:$0xf]
  %v1340 = vld [vmem:[%s1267 + $0x120] sm:$0xf]
  %v1341 = vld [vmem:[%s1267 + $0x124] sm:$0xf]
  %v1342 = vld [vmem:[%s1267 + $0x128] sm:$0xf]
  %v1343 = vld [vmem:[%s1267 + $0x12c] sm:$0xf]
  %v1344 = vld [vmem:[%s1267 + $0x130] sm:$0xf]
  %v1345 = vld [vmem:[%s1267 + $0x134] sm:$0xf]
  %v1346 = vld [vmem:[%s1267 + $0x138] sm:$0xf]
  %v1347 = vld [vmem:[%s1267 + $0x13c] sm:$0xf]
  %v1348 = vld [vmem:[%s1267 + $0x140] sm:$0xf]
  %v1349 = vld [vmem:[%s1267 + $0x144] sm:$0xf]
  %v1350 = vld [vmem:[%s1267 + $0x148] sm:$0xf]
  %v1351 = vld [vmem:[%s1267 + $0x14c] sm:$0xf]
  %v1352 = vld [vmem:[%s1267 + $0x150] sm:$0xf]
  %v1353 = vld [vmem:[%s1267 + $0x154] sm:$0xf]
  %v1354 = vld [vmem:[%s1267 + $0x158] sm:$0xf]
  %v1355 = vld [vmem:[%s1267 + $0x15c] sm:$0xf]
  %v1356 = vld [vmem:[%s1267 + $0x160] sm:$0xf]
  %v1357 = vld [vmem:[%s1267 + $0x164] sm:$0xf]
  %v1358 = vld [vmem:[%s1267 + $0x168] sm:$0xf]
  %v1359 = vld [vmem:[%s1267 + $0x16c] sm:$0xf]
  %v1360 = vld [vmem:[%s1267 + $0x170] sm:$0xf]
  %v1361 = vld [vmem:[%s1267 + $0x174] sm:$0xf]
  %v1362 = vld [vmem:[%s1267 + $0x178] sm:$0xf]
  %v1363 = vld [vmem:[%s1267 + $0x17c] sm:$0xf]
  %v1364 = vld [vmem:[%s1267 + $0x180] sm:$0xf]
  %v1365 = vld [vmem:[%s1267 + $0x184] sm:$0xf]
  %v1366 = vld [vmem:[%s1267 + $0x188] sm:$0xf]
  %v1367 = vld [vmem:[%s1267 + $0x18c] sm:$0xf]
  %v1368 = vld [vmem:[%s1267 + $0x190] sm:$0xf]
  %v1369 = vld [vmem:[%s1267 + $0x194] sm:$0xf]
  %v1370 = vld [vmem:[%s1267 + $0x198] sm:$0xf]
  %v1371 = vld [vmem:[%s1267 + $0x19c] sm:$0xf]
  %v1372 = vld [vmem:[%s1267 + $0x1a0] sm:$0xf]
  %v1373 = vld [vmem:[%s1267 + $0x1a4] sm:$0xf]
  %v1374 = vld [vmem:[%s1267 + $0x1a8] sm:$0xf]
  %v1375 = vld [vmem:[%s1267 + $0x1ac] sm:$0xf]
  %v1376 = vld [vmem:[%s1267 + $0x1b0] sm:$0xf]
  %v1377 = vld [vmem:[%s1267 + $0x1b4] sm:$0xf]
  %v1378 = vld [vmem:[%s1267 + $0x1b8] sm:$0xf]
  %v1379 = vld [vmem:[%s1267 + $0x1bc] sm:$0xf]
  %v1380 = vld [vmem:[%s1267 + $0x1c0] sm:$0xf]
  %v1381 = vld [vmem:[%s1267 + $0x1c4] sm:$0xf]
  %v1382 = vld [vmem:[%s1267 + $0x1c8] sm:$0xf]
  %v1383 = vld [vmem:[%s1267 + $0x1cc] sm:$0xf]
  %v1384 = vld [vmem:[%s1267 + $0x1d0] sm:$0xf]
  %v1385 = vld [vmem:[%s1267 + $0x1d4] sm:$0xf]
  %v1386 = vld [vmem:[%s1267 + $0x1d8] sm:$0xf]
  %v1387 = vld [vmem:[%s1267 + $0x1dc] sm:$0xf]
  %v1388 = vld [vmem:[%s1267 + $0x1e0] sm:$0xf]
  %v1389 = vld [vmem:[%s1267 + $0x1e4] sm:$0xf]
  %v1390 = vld [vmem:[%s1267 + $0x1e8] sm:$0xf]
  %v1391 = vld [vmem:[%s1267 + $0x1ec] sm:$0xf]
  %v1392 = vld [vmem:[%s1267 + $0x1f0] sm:$0xf]
  %v1393 = vld [vmem:[%s1267 + $0x1f4] sm:$0xf]
  %v1394 = vld [vmem:[%s1267 + $0x1f8] sm:$0xf]
  %v1395 = vld [vmem:[%s1267 + $0x1fc] sm:$0xf]
  %v1412 = vunpack.c.l.b16 %v1123
  %v1413 = vunpack.c.l.b16 %v1124
  %v1414 = vunpack.c.l.b16 %v1125
  %v1415 = vunpack.c.l.b16 %v1126
  %v1416 = vunpack.c.l.b16 %v1127
  %v1417 = vunpack.c.l.b16 %v1128
  %v1418 = vunpack.c.l.b16 %v1129
  %v1419 = vunpack.c.l.b16 %v1130
  %v1420 = vunpack.c.l.b16 %v1131
  %v1421 = vunpack.c.l.b16 %v1132
  %v1422 = vunpack.c.l.b16 %v1133
  %v1423 = vunpack.c.l.b16 %v1134
  %v1424 = vunpack.c.l.b16 %v1135
  %v1425 = vunpack.c.l.b16 %v1136
  %v1426 = vunpack.c.l.b16 %v1137
  %v1427 = vunpack.c.l.b16 %v1138
  %v1428 = vrot.slane %v1412, 1
  %vm1429 = vcmask 1041409
  %v1430 = vsel %vm1429, %v1420, %v1428
  %v1431 = vrot.slane %v1413, 1
  %v1432 = vsel %vm1429, %v1421, %v1431
  %v1433 = vrot.slane %v1414, 1
  %v1434 = vsel %vm1429, %v1422, %v1433
  %v1435 = vrot.slane %v1415, 1
  %v1436 = vsel %vm1429, %v1423, %v1435
  %v1437 = vrot.slane %v1416, 1
  %v1438 = vsel %vm1429, %v1424, %v1437
  %v1439 = vrot.slane %v1417, 1
  %v1440 = vsel %vm1429, %v1425, %v1439
  %v1441 = vrot.slane %v1418, 1
  %v1442 = vsel %vm1429, %v1426, %v1441
  %v1443 = vrot.slane %v1419, 1
  %v1444 = vsel %vm1429, %v1427, %v1443
  %v1445 = vpack.c.b16 %v1430, %v1430
  %v1446 = vpack.c.b16 %v1432, %v1432
  %v1447 = vpack.c.b16 %v1434, %v1434
  %v1448 = vpack.c.b16 %v1436, %v1436
  %v1449 = vpack.c.b16 %v1438, %v1438
  %v1450 = vpack.c.b16 %v1440, %v1440
  %v1451 = vpack.c.b16 %v1442, %v1442
  %v1452 = vpack.c.b16 %v1444, %v1444
  %v1589 = vunpack.c.l.b16 %v1268
  %v1590 = vunpack.c.l.b16 %v1269
  %v1591 = vunpack.c.l.b16 %v1270
  %v1592 = vunpack.c.l.b16 %v1271
  %v1593 = vunpack.c.l.b16 %v1272
  %v1594 = vunpack.c.l.b16 %v1273
  %v1595 = vunpack.c.l.b16 %v1274
  %v1596 = vunpack.c.l.b16 %v1275
  %v1597 = vunpack.c.l.b16 %v1276
  %v1598 = vunpack.c.l.b16 %v1277
  %v1599 = vunpack.c.l.b16 %v1278
  %v1600 = vunpack.c.l.b16 %v1279
  %v1601 = vunpack.c.l.b16 %v1280
  %v1602 = vunpack.c.l.b16 %v1281
  %v1603 = vunpack.c.l.b16 %v1282
  %v1604 = vunpack.c.l.b16 %v1283
  %v1605 = vunpack.c.l.b16 %v1284
  %v1606 = vunpack.c.l.b16 %v1285
  %v1607 = vunpack.c.l.b16 %v1286
  %v1608 = vunpack.c.l.b16 %v1287
  %v1609 = vunpack.c.l.b16 %v1288
  %v1610 = vunpack.c.l.b16 %v1289
  %v1611 = vunpack.c.l.b16 %v1290
  %v1612 = vunpack.c.l.b16 %v1291
  %v1613 = vunpack.c.l.b16 %v1292
  %v1614 = vunpack.c.l.b16 %v1293
  %v1615 = vunpack.c.l.b16 %v1294
  %v1616 = vunpack.c.l.b16 %v1295
  %v1617 = vunpack.c.l.b16 %v1296
  %v1618 = vunpack.c.l.b16 %v1297
  %v1619 = vunpack.c.l.b16 %v1298
  %v1620 = vunpack.c.l.b16 %v1299
  %v1621 = vunpack.c.l.b16 %v1300
  %v1622 = vunpack.c.l.b16 %v1301
  %v1623 = vunpack.c.l.b16 %v1302
  %v1624 = vunpack.c.l.b16 %v1303
  %v1625 = vunpack.c.l.b16 %v1304
  %v1626 = vunpack.c.l.b16 %v1305
  %v1627 = vunpack.c.l.b16 %v1306
  %v1628 = vunpack.c.l.b16 %v1307
  %v1629 = vunpack.c.l.b16 %v1308
  %v1630 = vunpack.c.l.b16 %v1309
  %v1631 = vunpack.c.l.b16 %v1310
  %v1632 = vunpack.c.l.b16 %v1311
  %v1633 = vunpack.c.l.b16 %v1312
  %v1634 = vunpack.c.l.b16 %v1313
  %v1635 = vunpack.c.l.b16 %v1314
  %v1636 = vunpack.c.l.b16 %v1315
  %v1637 = vunpack.c.l.b16 %v1316
  %v1638 = vunpack.c.l.b16 %v1317
  %v1639 = vunpack.c.l.b16 %v1318
  %v1640 = vunpack.c.l.b16 %v1319
  %v1641 = vunpack.c.l.b16 %v1320
  %v1642 = vunpack.c.l.b16 %v1321
  %v1643 = vunpack.c.l.b16 %v1322
  %v1644 = vunpack.c.l.b16 %v1323
  %v1645 = vunpack.c.l.b16 %v1324
  %v1646 = vunpack.c.l.b16 %v1325
  %v1647 = vunpack.c.l.b16 %v1326
  %v1648 = vunpack.c.l.b16 %v1327
  %v1649 = vunpack.c.l.b16 %v1328
  %v1650 = vunpack.c.l.b16 %v1329
  %v1651 = vunpack.c.l.b16 %v1330
  %v1652 = vunpack.c.l.b16 %v1331
  %v1653 = vunpack.c.l.b16 %v1332
  %v1654 = vunpack.c.l.b16 %v1333
  %v1655 = vunpack.c.l.b16 %v1334
  %v1656 = vunpack.c.l.b16 %v1335
  %v1657 = vunpack.c.l.b16 %v1336
  %v1658 = vunpack.c.l.b16 %v1337
  %v1659 = vunpack.c.l.b16 %v1338
  %v1660 = vunpack.c.l.b16 %v1339
  %v1661 = vunpack.c.l.b16 %v1340
  %v1662 = vunpack.c.l.b16 %v1341
  %v1663 = vunpack.c.l.b16 %v1342
  %v1664 = vunpack.c.l.b16 %v1343
  %v1665 = vunpack.c.l.b16 %v1344
  %v1666 = vunpack.c.l.b16 %v1345
  %v1667 = vunpack.c.l.b16 %v1346
  %v1668 = vunpack.c.l.b16 %v1347
  %v1669 = vunpack.c.l.b16 %v1348
  %v1670 = vunpack.c.l.b16 %v1349
  %v1671 = vunpack.c.l.b16 %v1350
  %v1672 = vunpack.c.l.b16 %v1351
  %v1673 = vunpack.c.l.b16 %v1352
  %v1674 = vunpack.c.l.b16 %v1353
  %v1675 = vunpack.c.l.b16 %v1354
  %v1676 = vunpack.c.l.b16 %v1355
  %v1677 = vunpack.c.l.b16 %v1356
  %v1678 = vunpack.c.l.b16 %v1357
  %v1679 = vunpack.c.l.b16 %v1358
  %v1680 = vunpack.c.l.b16 %v1359
  %v1681 = vunpack.c.l.b16 %v1360
  %v1682 = vunpack.c.l.b16 %v1361
  %v1683 = vunpack.c.l.b16 %v1362
  %v1684 = vunpack.c.l.b16 %v1363
  %v1685 = vunpack.c.l.b16 %v1364
  %v1686 = vunpack.c.l.b16 %v1365
  %v1687 = vunpack.c.l.b16 %v1366
  %v1688 = vunpack.c.l.b16 %v1367
  %v1689 = vunpack.c.l.b16 %v1368
  %v1690 = vunpack.c.l.b16 %v1369
  %v1691 = vunpack.c.l.b16 %v1370
  %v1692 = vunpack.c.l.b16 %v1371
  %v1693 = vunpack.c.l.b16 %v1372
  %v1694 = vunpack.c.l.b16 %v1373
  %v1695 = vunpack.c.l.b16 %v1374
  %v1696 = vunpack.c.l.b16 %v1375
  %v1697 = vunpack.c.l.b16 %v1376
  %v1698 = vunpack.c.l.b16 %v1377
  %v1699 = vunpack.c.l.b16 %v1378
  %v1700 = vunpack.c.l.b16 %v1379
  %v1701 = vunpack.c.l.b16 %v1380
  %v1702 = vunpack.c.l.b16 %v1381
  %v1703 = vunpack.c.l.b16 %v1382
  %v1704 = vunpack.c.l.b16 %v1383
  %v1705 = vunpack.c.l.b16 %v1384
  %v1706 = vunpack.c.l.b16 %v1385
  %v1707 = vunpack.c.l.b16 %v1386
  %v1708 = vunpack.c.l.b16 %v1387
  %v1709 = vunpack.c.l.b16 %v1388
  %v1710 = vunpack.c.l.b16 %v1389
  %v1711 = vunpack.c.l.b16 %v1390
  %v1712 = vunpack.c.l.b16 %v1391
  %v1713 = vunpack.c.l.b16 %v1392
  %v1714 = vunpack.c.l.b16 %v1393
  %v1715 = vunpack.c.l.b16 %v1394
  %v1716 = vunpack.c.l.b16 %v1395
  %v1717 = vpack.c.b16 %v1590, %v1589
  %v1718 = vpack.c.b16 %v1592, %v1591
  %v1719 = vpack.c.b16 %v1594, %v1593
  %v1720 = vpack.c.b16 %v1596, %v1595
  %v1721 = vpack.c.b16 %v1598, %v1597
  %v1722 = vpack.c.b16 %v1600, %v1599
  %v1723 = vpack.c.b16 %v1602, %v1601
  %v1724 = vpack.c.b16 %v1604, %v1603
  %v1725 = vpack.c.b16 %v1606, %v1605
  %v1726 = vpack.c.b16 %v1608, %v1607
  %v1727 = vpack.c.b16 %v1610, %v1609
  %v1728 = vpack.c.b16 %v1612, %v1611
  %v1729 = vpack.c.b16 %v1614, %v1613
  %v1730 = vpack.c.b16 %v1616, %v1615
  %v1731 = vpack.c.b16 %v1618, %v1617
  %v1732 = vpack.c.b16 %v1620, %v1619
  %v1733 = vpack.c.b16 %v1622, %v1621
  %v1734 = vpack.c.b16 %v1624, %v1623
  %v1735 = vpack.c.b16 %v1626, %v1625
  %v1736 = vpack.c.b16 %v1628, %v1627
  %v1737 = vpack.c.b16 %v1630, %v1629
  %v1738 = vpack.c.b16 %v1632, %v1631
  %v1739 = vpack.c.b16 %v1634, %v1633
  %v1740 = vpack.c.b16 %v1636, %v1635
  %v1741 = vpack.c.b16 %v1638, %v1637
  %v1742 = vpack.c.b16 %v1640, %v1639
  %v1743 = vpack.c.b16 %v1642, %v1641
  %v1744 = vpack.c.b16 %v1644, %v1643
  %v1745 = vpack.c.b16 %v1646, %v1645
  %v1746 = vpack.c.b16 %v1648, %v1647
  %v1747 = vpack.c.b16 %v1650, %v1649
  %v1748 = vpack.c.b16 %v1652, %v1651
  %v1749 = vpack.c.b16 %v1654, %v1653
  %v1750 = vpack.c.b16 %v1656, %v1655
  %v1751 = vpack.c.b16 %v1658, %v1657
  %v1752 = vpack.c.b16 %v1660, %v1659
  %v1753 = vpack.c.b16 %v1662, %v1661
  %v1754 = vpack.c.b16 %v1664, %v1663
  %v1755 = vpack.c.b16 %v1666, %v1665
  %v1756 = vpack.c.b16 %v1668, %v1667
  %v1757 = vpack.c.b16 %v1670, %v1669
  %v1758 = vpack.c.b16 %v1672, %v1671
  %v1759 = vpack.c.b16 %v1674, %v1673
  %v1760 = vpack.c.b16 %v1676, %v1675
  %v1761 = vpack.c.b16 %v1678, %v1677
  %v1762 = vpack.c.b16 %v1680, %v1679
  %v1763 = vpack.c.b16 %v1682, %v1681
  %v1764 = vpack.c.b16 %v1684, %v1683
  %v1765 = vpack.c.b16 %v1686, %v1685
  %v1766 = vpack.c.b16 %v1688, %v1687
  %v1767 = vpack.c.b16 %v1690, %v1689
  %v1768 = vpack.c.b16 %v1692, %v1691
  %v1769 = vpack.c.b16 %v1694, %v1693
  %v1770 = vpack.c.b16 %v1696, %v1695
  %v1771 = vpack.c.b16 %v1698, %v1697
  %v1772 = vpack.c.b16 %v1700, %v1699
  %v1773 = vpack.c.b16 %v1702, %v1701
  %v1774 = vpack.c.b16 %v1704, %v1703
  %v1775 = vpack.c.b16 %v1706, %v1705
  %v1776 = vpack.c.b16 %v1708, %v1707
  %v1777 = vpack.c.b16 %v1710, %v1709
  %v1778 = vpack.c.b16 %v1712, %v1711
  %v1779 = vpack.c.b16 %v1714, %v1713
  %v1780 = vpack.c.b16 %v1716, %v1715
  %1845 = vmatprep.subr.bf16.mxu0 0
  %1846 = vmatpush1.bf16.msra.mxu0 %v1717
  %1847 = vmatprep.subr.bf16.mxu0 0
  %1848 = vmatpush1.bf16.msra.mxu0 %v1718
  %1849 = vmatprep.subr.bf16.mxu0 0
  %1850 = vmatpush1.bf16.msra.mxu0 %v1719
  %1851 = vmatprep.subr.bf16.mxu0 0
  %1852 = vmatpush1.bf16.msra.mxu0 %v1720
  %1853 = vmatprep.subr.bf16.mxu0 0
  %1854 = vmatpush1.bf16.msra.mxu0 %v1721
  %1855 = vmatprep.subr.bf16.mxu0 0
  %1856 = vmatpush1.bf16.msra.mxu0 %v1722
  %1857 = vmatprep.subr.bf16.mxu0 0
  %1858 = vmatpush1.bf16.msra.mxu0 %v1723
  %1859 = vmatprep.subr.bf16.mxu0 0
  %1860 = vmatpush1.bf16.msra.mxu0 %v1724
  %1861 = vmatprep.subr.bf16.mxu0 0
  %1862 = vmatpush1.bf16.msra.mxu0 %v1725
  %1863 = vmatprep.subr.bf16.mxu0 0
  %1864 = vmatpush1.bf16.msra.mxu0 %v1726
  %1865 = vmatprep.subr.bf16.mxu0 0
  %1866 = vmatpush1.bf16.msra.mxu0 %v1727
  %1867 = vmatprep.subr.bf16.mxu0 0
  %1868 = vmatpush1.bf16.msra.mxu0 %v1728
  %1869 = vmatprep.subr.bf16.mxu0 0
  %1870 = vmatpush1.bf16.msra.mxu0 %v1729
  %1871 = vmatprep.subr.bf16.mxu0 0
  %1872 = vmatpush1.bf16.msra.mxu0 %v1730
  %1873 = vmatprep.subr.bf16.mxu0 0
  %1874 = vmatpush1.bf16.msra.mxu0 %v1731
  %1875 = vmatprep.subr.bf16.mxu0 0
  %1876 = vmatpush1.bf16.msra.mxu0 %v1732
  %1877 = vmatprep.mubr.bf16.mxu0 %v1446
  %1878 = vmatmul.mubr.bf16.gmra.mrb[0].mxu0 %v1445
  %v1879 = vpop.f32.mrb[0].mxu0
  %v1880 = vadd.f32 0.0, %v1879
  %v1881 = vpop.f32.mrb[0].mxu0
  %v1882 = vpop.f32.mrb[0].mxu0
  %v1883 = vpop.f32.mrb[0].mxu0
  %1884 = vdwg.mxu0
  %1885 = vmatprep.subr.bf16.mxu0 0
  %1886 = vmatpush1.bf16.msra.mxu0 %v1733
  %1887 = vmatprep.subr.bf16.mxu0 0
  %1888 = vmatpush1.bf16.msra.mxu0 %v1734
  %1889 = vmatprep.subr.bf16.mxu0 0
  %1890 = vmatpush1.bf16.msra.mxu0 %v1735
  %1891 = vmatprep.subr.bf16.mxu0 0
  %1892 = vmatpush1.bf16.msra.mxu0 %v1736
  %1893 = vmatprep.subr.bf16.mxu0 0
  %1894 = vmatpush1.bf16.msra.mxu0 %v1737
  %1895 = vmatprep.subr.bf16.mxu0 0
  %1896 = vmatpush1.bf16.msra.mxu0 %v1738
  %1897 = vmatprep.subr.bf16.mxu0 0
  %1898 = vmatpush1.bf16.msra.mxu0 %v1739
  %1899 = vmatprep.subr.bf16.mxu0 0
  %1900 = vmatpush1.bf16.msra.mxu0 %v1740
  %1901 = vmatprep.subr.bf16.mxu0 0
  %1902 = vmatpush1.bf16.msra.mxu0 %v1741
  %1903 = vmatprep.subr.bf16.mxu0 0
  %1904 = vmatpush1.bf16.msra.mxu0 %v1742
  %1905 = vmatprep.subr.bf16.mxu0 0
  %1906 = vmatpush1.bf16.msra.mxu0 %v1743
  %1907 = vmatprep.subr.bf16.mxu0 0
  %1908 = vmatpush1.bf16.msra.mxu0 %v1744
  %1909 = vmatprep.subr.bf16.mxu0 0
  %1910 = vmatpush1.bf16.msra.mxu0 %v1745
  %1911 = vmatprep.subr.bf16.mxu0 0
  %1912 = vmatpush1.bf16.msra.mxu0 %v1746
  %1913 = vmatprep.subr.bf16.mxu0 0
  %1914 = vmatpush1.bf16.msra.mxu0 %v1747
  %1915 = vmatprep.subr.bf16.mxu0 0
  %1916 = vmatpush1.bf16.msra.mxu0 %v1748
  %1917 = vmatprep.mubr.bf16.mxu0 %v1448
  %1918 = vmatmul.mubr.bf16.gmra.mrb[0].mxu0 %v1447
  %v1919 = vpop.f32.mrb[0].mxu0
  %v1920 = vadd.f32 %v1880, %v1919
  %v1921 = vpop.f32.mrb[0].mxu0
  %v1922 = vpop.f32.mrb[0].mxu0
  %v1923 = vpop.f32.mrb[0].mxu0
  %1924 = vdwg.mxu0
  %1925 = vmatprep.subr.bf16.mxu0 0
  %1926 = vmatpush1.bf16.msra.mxu0 %v1749
  %1927 = vmatprep.subr.bf16.mxu0 0
  %1928 = vmatpush1.bf16.msra.mxu0 %v1750
  %1929 = vmatprep.subr.bf16.mxu0 0
  %1930 = vmatpush1.bf16.msra.mxu0 %v1751
  %1931 = vmatprep.subr.bf16.mxu0 0
  %1932 = vmatpush1.bf16.msra.mxu0 %v1752
  %1933 = vmatprep.subr.bf16.mxu0 0
  %1934 = vmatpush1.bf16.msra.mxu0 %v1753
  %1935 = vmatprep.subr.bf16.mxu0 0
  %1936 = vmatpush1.bf16.msra.mxu0 %v1754
  %1937 = vmatprep.subr.bf16.mxu0 0
  %1938 = vmatpush1.bf16.msra.mxu0 %v1755
  %1939 = vmatprep.subr.bf16.mxu0 0
  %1940 = vmatpush1.bf16.msra.mxu0 %v1756
  %1941 = vmatprep.subr.bf16.mxu0 0
  %1942 = vmatpush1.bf16.msra.mxu0 %v1757
  %1943 = vmatprep.subr.bf16.mxu0 0
  %1944 = vmatpush1.bf16.msra.mxu0 %v1758
  %1945 = vmatprep.subr.bf16.mxu0 0
  %1946 = vmatpush1.bf16.msra.mxu0 %v1759
  %1947 = vmatprep.subr.bf16.mxu0 0
  %1948 = vmatpush1.bf16.msra.mxu0 %v1760
  %1949 = vmatprep.subr.bf16.mxu0 0
  %1950 = vmatpush1.bf16.msra.mxu0 %v1761
  %1951 = vmatprep.subr.bf16.mxu0 0
  %1952 = vmatpush1.bf16.msra.mxu0 %v1762
  %1953 = vmatprep.subr.bf16.mxu0 0
  %1954 = vmatpush1.bf16.msra.mxu0 %v1763
  %1955 = vmatprep.subr.bf16.mxu0 0
  %1956 = vmatpush1.bf16.msra.mxu0 %v1764
  %1957 = vmatprep.mubr.bf16.mxu0 %v1450
  %1958 = vmatmul.mubr.bf16.gmra.mrb[0].mxu0 %v1449
  %v1959 = vpop.f32.mrb[0].mxu0
  %v1960 = vadd.f32 %v1920, %v1959
  %v1961 = vpop.f32.mrb[0].mxu0
  %v1962 = vpop.f32.mrb[0].mxu0
  %v1963 = vpop.f32.mrb[0].mxu0
  %1964 = vdwg.mxu0
  %1965 = vmatprep.subr.bf16.mxu0 0
  %1966 = vmatpush1.bf16.msra.mxu0 %v1765
  %1967 = vmatprep.subr.bf16.mxu0 0
  %1968 = vmatpush1.bf16.msra.mxu0 %v1766
  %1969 = vmatprep.subr.bf16.mxu0 0
  %1970 = vmatpush1.bf16.msra.mxu0 %v1767
  %1971 = vmatprep.subr.bf16.mxu0 0
  %1972 = vmatpush1.bf16.msra.mxu0 %v1768
  %1973 = vmatprep.subr.bf16.mxu0 0
  %1974 = vmatpush1.bf16.msra.mxu0 %v1769
  %1975 = vmatprep.subr.bf16.mxu0 0
  %1976 = vmatpush1.bf16.msra.mxu0 %v1770
  %1977 = vmatprep.subr.bf16.mxu0 0
  %1978 = vmatpush1.bf16.msra.mxu0 %v1771
  %1979 = vmatprep.subr.bf16.mxu0 0
  %1980 = vmatpush1.bf16.msra.mxu0 %v1772
  %1981 = vmatprep.subr.bf16.mxu0 0
  %1982 = vmatpush1.bf16.msra.mxu0 %v1773
  %1983 = vmatprep.subr.bf16.mxu0 0
  %1984 = vmatpush1.bf16.msra.mxu0 %v1774
  %1985 = vmatprep.subr.bf16.mxu0 0
  %1986 = vmatpush1.bf16.msra.mxu0 %v1775
  %1987 = vmatprep.subr.bf16.mxu0 0
  %1988 = vmatpush1.bf16.msra.mxu0 %v1776
  %1989 = vmatprep.subr.bf16.mxu0 0
  %1990 = vmatpush1.bf16.msra.mxu0 %v1777
  %1991 = vmatprep.subr.bf16.mxu0 0
  %1992 = vmatpush1.bf16.msra.mxu0 %v1778
  %1993 = vmatprep.subr.bf16.mxu0 0
  %1994 = vmatpush1.bf16.msra.mxu0 %v1779
  %1995 = vmatprep.subr.bf16.mxu0 0
  %1996 = vmatpush1.bf16.msra.mxu0 %v1780
  %1997 = vmatprep.mubr.bf16.mxu0 %v1452
  %1998 = vmatmul.mubr.bf16.gmra.mrb[0].mxu0 %v1451
  %v1999 = vpop.f32.mrb[0].mxu0
  %v2000 = vadd.f32 %v1960, %v1999
  %v2001 = vpop.f32.mrb[0].mxu0
  %v2002 = vpop.f32.mrb[0].mxu0
  %v2003 = vpop.f32.mrb[0].mxu0
  %2004 = vdwg.mxu0
  %v2005 = vrot.slane %v1420, 7
  %v2006 = vsel %vm1429, %v2005, %v1412
  %v2007 = vrot.slane %v1421, 7
  %v2008 = vsel %vm1429, %v2007, %v1413
  %v2009 = vrot.slane %v1422, 7
  %v2010 = vsel %vm1429, %v2009, %v1414
  %v2011 = vrot.slane %v1423, 7
  %v2012 = vsel %vm1429, %v2011, %v1415
  %v2013 = vrot.slane %v1424, 7
  %v2014 = vsel %vm1429, %v2013, %v1416
  %v2015 = vrot.slane %v1425, 7
  %v2016 = vsel %vm1429, %v2015, %v1417
  %v2017 = vrot.slane %v1426, 7
  %v2018 = vsel %vm1429, %v2017, %v1418
  %v2019 = vrot.slane %v1427, 7
  %v2020 = vsel %vm1429, %v2019, %v1419
  %v2021 = vpack.c.b16 %v2006, %v2006
  %v2022 = vpack.c.b16 %v2008, %v2008
  %v2023 = vpack.c.b16 %v2010, %v2010
  %v2024 = vpack.c.b16 %v2012, %v2012
  %v2025 = vpack.c.b16 %v2014, %v2014
  %v2026 = vpack.c.b16 %v2016, %v2016
  %v2027 = vpack.c.b16 %v2018, %v2018
  %v2028 = vpack.c.b16 %v2020, %v2020
  %v2165 = vunpack.c.l.b16 %v1139
  %v2166 = vunpack.c.l.b16 %v1140
  %v2167 = vunpack.c.l.b16 %v1141
  %v2168 = vunpack.c.l.b16 %v1142
  %v2169 = vunpack.c.l.b16 %v1143
  %v2170 = vunpack.c.l.b16 %v1144
  %v2171 = vunpack.c.l.b16 %v1145
  %v2172 = vunpack.c.l.b16 %v1146
  %v2173 = vunpack.c.l.b16 %v1147
  %v2174 = vunpack.c.l.b16 %v1148
  %v2175 = vunpack.c.l.b16 %v1149
  %v2176 = vunpack.c.l.b16 %v1150
  %v2177 = vunpack.c.l.b16 %v1151
  %v2178 = vunpack.c.l.b16 %v1152
  %v2179 = vunpack.c.l.b16 %v1153
  %v2180 = vunpack.c.l.b16 %v1154
  %v2181 = vunpack.c.l.b16 %v1155
  %v2182 = vunpack.c.l.b16 %v1156
  %v2183 = vunpack.c.l.b16 %v1157
  %v2184 = vunpack.c.l.b16 %v1158
  %v2185 = vunpack.c.l.b16 %v1159
  %v2186 = vunpack.c.l.b16 %v1160
  %v2187 = vunpack.c.l.b16 %v1161
  %v2188 = vunpack.c.l.b16 %v1162
  %v2189 = vunpack.c.l.b16 %v1163
  %v2190 = vunpack.c.l.b16 %v1164
  %v2191 = vunpack.c.l.b16 %v1165
  %v2192 = vunpack.c.l.b16 %v1166
  %v2193 = vunpack.c.l.b16 %v1167
  %v2194 = vunpack.c.l.b16 %v1168
  %v2195 = vunpack.c.l.b16 %v1169
  %v2196 = vunpack.c.l.b16 %v1170
  %v2197 = vunpack.c.l.b16 %v1171
  %v2198 = vunpack.c.l.b16 %v1172
  %v2199 = vunpack.c.l.b16 %v1173
  %v2200 = vunpack.c.l.b16 %v1174
  %v2201 = vunpack.c.l.b16 %v1175
  %v2202 = vunpack.c.l.b16 %v1176
  %v2203 = vunpack.c.l.b16 %v1177
  %v2204 = vunpack.c.l.b16 %v1178
  %v2205 = vunpack.c.l.b16 %v1179
  %v2206 = vunpack.c.l.b16 %v1180
  %v2207 = vunpack.c.l.b16 %v1181
  %v2208 = vunpack.c.l.b16 %v1182
  %v2209 = vunpack.c.l.b16 %v1183
  %v2210 = vunpack.c.l.b16 %v1184
  %v2211 = vunpack.c.l.b16 %v1185
  %v2212 = vunpack.c.l.b16 %v1186
  %v2213 = vunpack.c.l.b16 %v1187
  %v2214 = vunpack.c.l.b16 %v1188
  %v2215 = vunpack.c.l.b16 %v1189
  %v2216 = vunpack.c.l.b16 %v1190
  %v2217 = vunpack.c.l.b16 %v1191
  %v2218 = vunpack.c.l.b16 %v1192
  %v2219 = vunpack.c.l.b16 %v1193
  %v2220 = vunpack.c.l.b16 %v1194
  %v2221 = vunpack.c.l.b16 %v1195
  %v2222 = vunpack.c.l.b16 %v1196
  %v2223 = vunpack.c.l.b16 %v1197
  %v2224 = vunpack.c.l.b16 %v1198
  %v2225 = vunpack.c.l.b16 %v1199
  %v2226 = vunpack.c.l.b16 %v1200
  %v2227 = vunpack.c.l.b16 %v1201
  %v2228 = vunpack.c.l.b16 %v1202
  %v2229 = vunpack.c.l.b16 %v1203
  %v2230 = vunpack.c.l.b16 %v1204
  %v2231 = vunpack.c.l.b16 %v1205
  %v2232 = vunpack.c.l.b16 %v1206
  %v2233 = vunpack.c.l.b16 %v1207
  %v2234 = vunpack.c.l.b16 %v1208
  %v2235 = vunpack.c.l.b16 %v1209
  %v2236 = vunpack.c.l.b16 %v1210
  %v2237 = vunpack.c.l.b16 %v1211
  %v2238 = vunpack.c.l.b16 %v1212
  %v2239 = vunpack.c.l.b16 %v1213
  %v2240 = vunpack.c.l.b16 %v1214
  %v2241 = vunpack.c.l.b16 %v1215
  %v2242 = vunpack.c.l.b16 %v1216
  %v2243 = vunpack.c.l.b16 %v1217
  %v2244 = vunpack.c.l.b16 %v1218
  %v2245 = vunpack.c.l.b16 %v1219
  %v2246 = vunpack.c.l.b16 %v1220
  %v2247 = vunpack.c.l.b16 %v1221
  %v2248 = vunpack.c.l.b16 %v1222
  %v2249 = vunpack.c.l.b16 %v1223
  %v2250 = vunpack.c.l.b16 %v1224
  %v2251 = vunpack.c.l.b16 %v1225
  %v2252 = vunpack.c.l.b16 %v1226
  %v2253 = vunpack.c.l.b16 %v1227
  %v2254 = vunpack.c.l.b16 %v1228
  %v2255 = vunpack.c.l.b16 %v1229
  %v2256 = vunpack.c.l.b16 %v1230
  %v2257 = vunpack.c.l.b16 %v1231
  %v2258 = vunpack.c.l.b16 %v1232
  %v2259 = vunpack.c.l.b16 %v1233
  %v2260 = vunpack.c.l.b16 %v1234
  %v2261 = vunpack.c.l.b16 %v1235
  %v2262 = vunpack.c.l.b16 %v1236
  %v2263 = vunpack.c.l.b16 %v1237
  %v2264 = vunpack.c.l.b16 %v1238
  %v2265 = vunpack.c.l.b16 %v1239
  %v2266 = vunpack.c.l.b16 %v1240
  %v2267 = vunpack.c.l.b16 %v1241
  %v2268 = vunpack.c.l.b16 %v1242
  %v2269 = vunpack.c.l.b16 %v1243
  %v2270 = vunpack.c.l.b16 %v1244
  %v2271 = vunpack.c.l.b16 %v1245
  %v2272 = vunpack.c.l.b16 %v1246
  %v2273 = vunpack.c.l.b16 %v1247
  %v2274 = vunpack.c.l.b16 %v1248
  %v2275 = vunpack.c.l.b16 %v1249
  %v2276 = vunpack.c.l.b16 %v1250
  %v2277 = vunpack.c.l.b16 %v1251
  %v2278 = vunpack.c.l.b16 %v1252
  %v2279 = vunpack.c.l.b16 %v1253
  %v2280 = vunpack.c.l.b16 %v1254
  %v2281 = vunpack.c.l.b16 %v1255
  %v2282 = vunpack.c.l.b16 %v1256
  %v2283 = vunpack.c.l.b16 %v1257
  %v2284 = vunpack.c.l.b16 %v1258
  %v2285 = vunpack.c.l.b16 %v1259
  %v2286 = vunpack.c.l.b16 %v1260
  %v2287 = vunpack.c.l.b16 %v1261
  %v2288 = vunpack.c.l.b16 %v1262
  %v2289 = vunpack.c.l.b16 %v1263
  %v2290 = vunpack.c.l.b16 %v1264
  %v2291 = vunpack.c.l.b16 %v1265
  %v2292 = vunpack.c.l.b16 %v1266
  %v2293 = vpack.c.b16 %v2166, %v2165
  %v2294 = vpack.c.b16 %v2168, %v2167
  %v2295 = vpack.c.b16 %v2170, %v2169
  %v2296 = vpack.c.b16 %v2172, %v2171
  %v2297 = vpack.c.b16 %v2174, %v2173
  %v2298 = vpack.c.b16 %v2176, %v2175
  %v2299 = vpack.c.b16 %v2178, %v2177
  %v2300 = vpack.c.b16 %v2180, %v2179
  %v2301 = vpack.c.b16 %v2182, %v2181
  %v2302 = vpack.c.b16 %v2184, %v2183
  %v2303 = vpack.c.b16 %v2186, %v2185
  %v2304 = vpack.c.b16 %v2188, %v2187
  %v2305 = vpack.c.b16 %v2190, %v2189
  %v2306 = vpack.c.b16 %v2192, %v2191
  %v2307 = vpack.c.b16 %v2194, %v2193
  %v2308 = vpack.c.b16 %v2196, %v2195
  %v2309 = vpack.c.b16 %v2198, %v2197
  %v2310 = vpack.c.b16 %v2200, %v2199
  %v2311 = vpack.c.b16 %v2202, %v2201
  %v2312 = vpack.c.b16 %v2204, %v2203
  %v2313 = vpack.c.b16 %v2206, %v2205
  %v2314 = vpack.c.b16 %v2208, %v2207
  %v2315 = vpack.c.b16 %v2210, %v2209
  %v2316 = vpack.c.b16 %v2212, %v2211
  %v2317 = vpack.c.b16 %v2214, %v2213
  %v2318 = vpack.c.b16 %v2216, %v2215
  %v2319 = vpack.c.b16 %v2218, %v2217
  %v2320 = vpack.c.b16 %v2220, %v2219
  %v2321 = vpack.c.b16 %v2222, %v2221
  %v2322 = vpack.c.b16 %v2224, %v2223
  %v2323 = vpack.c.b16 %v2226, %v2225
  %v2324 = vpack.c.b16 %v2228, %v2227
  %v2325 = vpack.c.b16 %v2230, %v2229
  %v2326 = vpack.c.b16 %v2232, %v2231
  %v2327 = vpack.c.b16 %v2234, %v2233
  %v2328 = vpack.c.b16 %v2236, %v2235
  %v2329 = vpack.c.b16 %v2238, %v2237
  %v2330 = vpack.c.b16 %v2240, %v2239
  %v2331 = vpack.c.b16 %v2242, %v2241
  %v2332 = vpack.c.b16 %v2244, %v2243
  %v2333 = vpack.c.b16 %v2246, %v2245
  %v2334 = vpack.c.b16 %v2248, %v2247
  %v2335 = vpack.c.b16 %v2250, %v2249
  %v2336 = vpack.c.b16 %v2252, %v2251
  %v2337 = vpack.c.b16 %v2254, %v2253
  %v2338 = vpack.c.b16 %v2256, %v2255
  %v2339 = vpack.c.b16 %v2258, %v2257
  %v2340 = vpack.c.b16 %v2260, %v2259
  %v2341 = vpack.c.b16 %v2262, %v2261
  %v2342 = vpack.c.b16 %v2264, %v2263
  %v2343 = vpack.c.b16 %v2266, %v2265
  %v2344 = vpack.c.b16 %v2268, %v2267
  %v2345 = vpack.c.b16 %v2270, %v2269
  %v2346 = vpack.c.b16 %v2272, %v2271
  %v2347 = vpack.c.b16 %v2274, %v2273
  %v2348 = vpack.c.b16 %v2276, %v2275
  %v2349 = vpack.c.b16 %v2278, %v2277
  %v2350 = vpack.c.b16 %v2280, %v2279
  %v2351 = vpack.c.b16 %v2282, %v2281
  %v2352 = vpack.c.b16 %v2284, %v2283
  %v2353 = vpack.c.b16 %v2286, %v2285
  %v2354 = vpack.c.b16 %v2288, %v2287
  %v2355 = vpack.c.b16 %v2290, %v2289
  %v2356 = vpack.c.b16 %v2292, %v2291
  %2421 = vmatprep.subr.bf16.mxu0 0
  %2422 = vmatpush1.bf16.msra.mxu0 %v2293
  %2423 = vmatprep.subr.bf16.mxu0 0
  %2424 = vmatpush1.bf16.msra.mxu0 %v2294
  %2425 = vmatprep.subr.bf16.mxu0 0
  %2426 = vmatpush1.bf16.msra.mxu0 %v2295
  %2427 = vmatprep.subr.bf16.mxu0 0
  %2428 = vmatpush1.bf16.msra.mxu0 %v2296
  %2429 = vmatprep.subr.bf16.mxu0 0
  %2430 = vmatpush1.bf16.msra.mxu0 %v2297
  %2431 = vmatprep.subr.bf16.mxu0 0
  %2432 = vmatpush1.bf16.msra.mxu0 %v2298
  %2433 = vmatprep.subr.bf16.mxu0 0
  %2434 = vmatpush1.bf16.msra.mxu0 %v2299
  %2435 = vmatprep.subr.bf16.mxu0 0
  %2436 = vmatpush1.bf16.msra.mxu0 %v2300
  %2437 = vmatprep.subr.bf16.mxu0 0
  %2438 = vmatpush1.bf16.msra.mxu0 %v2301
  %2439 = vmatprep.subr.bf16.mxu0 0
  %2440 = vmatpush1.bf16.msra.mxu0 %v2302
  %2441 = vmatprep.subr.bf16.mxu0 0
  %2442 = vmatpush1.bf16.msra.mxu0 %v2303
  %2443 = vmatprep.subr.bf16.mxu0 0
  %2444 = vmatpush1.bf16.msra.mxu0 %v2304
  %2445 = vmatprep.subr.bf16.mxu0 0
  %2446 = vmatpush1.bf16.msra.mxu0 %v2305
  %2447 = vmatprep.subr.bf16.mxu0 0
  %2448 = vmatpush1.bf16.msra.mxu0 %v2306
  %2449 = vmatprep.subr.bf16.mxu0 0
  %2450 = vmatpush1.bf16.msra.mxu0 %v2307
  %2451 = vmatprep.subr.bf16.mxu0 0
  %2452 = vmatpush1.bf16.msra.mxu0 %v2308
  %2453 = vmatprep.mubr.bf16.mxu0 %v2022
  %2454 = vmatmul.mubr.bf16.gmra.mrb[0].mxu0 %v2021
  %v2455 = vpop.f32.mrb[0].mxu0
  %v2456 = vadd.f32 %v2000, %v2455
  %v2457 = vpop.f32.mrb[0].mxu0
  %v2458 = vpop.f32.mrb[0].mxu0
  %v2459 = vpop.f32.mrb[0].mxu0
  %2460 = vdwg.mxu0
  %2461 = vmatprep.subr.bf16.mxu0 0
  %2462 = vmatpush1.bf16.msra.mxu0 %v2309
  %2463 = vmatprep.subr.bf16.mxu0 0
  %2464 = vmatpush1.bf16.msra.mxu0 %v2310
  %2465 = vmatprep.subr.bf16.mxu0 0
  %2466 = vmatpush1.bf16.msra.mxu0 %v2311
  %2467 = vmatprep.subr.bf16.mxu0 0
  %2468 = vmatpush1.bf16.msra.mxu0 %v2312
  %2469 = vmatprep.subr.bf16.mxu0 0
  %2470 = vmatpush1.bf16.msra.mxu0 %v2313
  %2471 = vmatprep.subr.bf16.mxu0 0
  %2472 = vmatpush1.bf16.msra.mxu0 %v2314
  %2473 = vmatprep.subr.bf16.mxu0 0
  %2474 = vmatpush1.bf16.msra.mxu0 %v2315
  %2475 = vmatprep.subr.bf16.mxu0 0
  %2476 = vmatpush1.bf16.msra.mxu0 %v2316
  %2477 = vmatprep.subr.bf16.mxu0 0
  %2478 = vmatpush1.bf16.msra.mxu0 %v2317
  %2479 = vmatprep.subr.bf16.mxu0 0
  %2480 = vmatpush1.bf16.msra.mxu0 %v2318
  %2481 = vmatprep.subr.bf16.mxu0 0
  %2482 = vmatpush1.bf16.msra.mxu0 %v2319
  %2483 = vmatprep.subr.bf16.mxu0 0
  %2484 = vmatpush1.bf16.msra.mxu0 %v2320
  %2485 = vmatprep.subr.bf16.mxu0 0
  %2486 = vmatpush1.bf16.msra.mxu0 %v2321
  %2487 = vmatprep.subr.bf16.mxu0 0
  %2488 = vmatpush1.bf16.msra.mxu0 %v2322
  %2489 = vmatprep.subr.bf16.mxu0 0
  %2490 = vmatpush1.bf16.msra.mxu0 %v2323
  %2491 = vmatprep.subr.bf16.mxu0 0
  %2492 = vmatpush1.bf16.msra.mxu0 %v2324
  %2493 = vmatprep.mubr.bf16.mxu0 %v2024
  %2494 = vmatmul.mubr.bf16.gmra.mrb[0].mxu0 %v2023
  %v2495 = vpop.f32.mrb[0].mxu0
  %v2496 = vadd.f32 %v2456, %v2495
  %v2497 = vpop.f32.mrb[0].mxu0
  %v2498 = vpop.f32.mrb[0].mxu0
  %v2499 = vpop.f32.mrb[0].mxu0
  %2500 = vdwg.mxu0
  %2501 = vmatprep.subr.bf16.mxu0 0
  %2502 = vmatpush1.bf16.msra.mxu0 %v2325
  %2503 = vmatprep.subr.bf16.mxu0 0
  %2504 = vmatpush1.bf16.msra.mxu0 %v2326
  %2505 = vmatprep.subr.bf16.mxu0 0
  %2506 = vmatpush1.bf16.msra.mxu0 %v2327
  %2507 = vmatprep.subr.bf16.mxu0 0
  %2508 = vmatpush1.bf16.msra.mxu0 %v2328
  %2509 = vmatprep.subr.bf16.mxu0 0
  %2510 = vmatpush1.bf16.msra.mxu0 %v2329
  %2511 = vmatprep.subr.bf16.mxu0 0
  %2512 = vmatpush1.bf16.msra.mxu0 %v2330
  %2513 = vmatprep.subr.bf16.mxu0 0
  %2514 = vmatpush1.bf16.msra.mxu0 %v2331
  %2515 = vmatprep.subr.bf16.mxu0 0
  %2516 = vmatpush1.bf16.msra.mxu0 %v2332
  %2517 = vmatprep.subr.bf16.mxu0 0
  %2518 = vmatpush1.bf16.msra.mxu0 %v2333
  %2519 = vmatprep.subr.bf16.mxu0 0
  %2520 = vmatpush1.bf16.msra.mxu0 %v2334
  %2521 = vmatprep.subr.bf16.mxu0 0
  %2522 = vmatpush1.bf16.msra.mxu0 %v2335
  %2523 = vmatprep.subr.bf16.mxu0 0
  %2524 = vmatpush1.bf16.msra.mxu0 %v2336
  %2525 = vmatprep.subr.bf16.mxu0 0
  %2526 = vmatpush1.bf16.msra.mxu0 %v2337
  %2527 = vmatprep.subr.bf16.mxu0 0
  %2528 = vmatpush1.bf16.msra.mxu0 %v2338
  %2529 = vmatprep.subr.bf16.mxu0 0
  %2530 = vmatpush1.bf16.msra.mxu0 %v2339
  %2531 = vmatprep.subr.bf16.mxu0 0
  %2532 = vmatpush1.bf16.msra.mxu0 %v2340
  %2533 = vmatprep.mubr.bf16.mxu0 %v2026
  %2534 = vmatmul.mubr.bf16.gmra.mrb[0].mxu0 %v2025
  %v2535 = vpop.f32.mrb[0].mxu0
  %v2536 = vadd.f32 %v2496, %v2535
  %v2537 = vpop.f32.mrb[0].mxu0
  %v2538 = vpop.f32.mrb[0].mxu0
  %v2539 = vpop.f32.mrb[0].mxu0
  %2540 = vdwg.mxu0
  %2541 = vmatprep.subr.bf16.mxu0 0
  %2542 = vmatpush1.bf16.msra.mxu0 %v2341
  %2543 = vmatprep.subr.bf16.mxu0 0
  %2544 = vmatpush1.bf16.msra.mxu0 %v2342
  %2545 = vmatprep.subr.bf16.mxu0 0
  %2546 = vmatpush1.bf16.msra.mxu0 %v2343
  %2547 = vmatprep.subr.bf16.mxu0 0
  %2548 = vmatpush1.bf16.msra.mxu0 %v2344
  %2549 = vmatprep.subr.bf16.mxu0 0
  %2550 = vmatpush1.bf16.msra.mxu0 %v2345
  %2551 = vmatprep.subr.bf16.mxu0 0
  %2552 = vmatpush1.bf16.msra.mxu0 %v2346
  %2553 = vmatprep.subr.bf16.mxu0 0
  %2554 = vmatpush1.bf16.msra.mxu0 %v2347
  %2555 = vmatprep.subr.bf16.mxu0 0
  %2556 = vmatpush1.bf16.msra.mxu0 %v2348
  %2557 = vmatprep.subr.bf16.mxu0 0
  %2558 = vmatpush1.bf16.msra.mxu0 %v2349
  %2559 = vmatprep.subr.bf16.mxu0 0
  %2560 = vmatpush1.bf16.msra.mxu0 %v2350
  %2561 = vmatprep.subr.bf16.mxu0 0
  %2562 = vmatpush1.bf16.msra.mxu0 %v2351
  %2563 = vmatprep.subr.bf16.mxu0 0
  %2564 = vmatpush1.bf16.msra.mxu0 %v2352
  %2565 = vmatprep.subr.bf16.mxu0 0
  %2566 = vmatpush1.bf16.msra.mxu0 %v2353
  %2567 = vmatprep.subr.bf16.mxu0 0
  %2568 = vmatpush1.bf16.msra.mxu0 %v2354
  %2569 = vmatprep.subr.bf16.mxu0 0
  %2570 = vmatpush1.bf16.msra.mxu0 %v2355
  %2571 = vmatprep.subr.bf16.mxu0 0
  %2572 = vmatpush1.bf16.msra.mxu0 %v2356
  %2573 = vmatprep.mubr.bf16.mxu0 %v2028
  %2574 = vmatmul.mubr.bf16.gmra.mrb[0].mxu0 %v2027
  %v2575 = vpop.f32.mrb[0].mxu0
  %v2576 = vadd.f32 %v2536, %v2575
  %v2577 = vpop.f32.mrb[0].mxu0
  %v2578 = vpop.f32.mrb[0].mxu0
  %v2579 = vpop.f32.mrb[0].mxu0
  %2580 = vdwg.mxu0
  %v2581 = vld [vmem:[%s4] sm:$0x1]
  %v2583 = vlaneseq
  %v2584 = vshrl.u32 %v2583, 7
  %v2585 = vsub.s32 0, %v2584
  %v2586 = vrot.slane %v2581, %v2585
  %v2588 = vadd.f32 %v2576, %v2586
  %v2589 = vld [vmem:[%s3] sm:$0xff]
  %v2590 = vld [vmem:[%s3 + $0x8] sm:$0xff]
  %v2591 = vld [vmem:[%s3 + $0x10] sm:$0xff]
  %v2592 = vld [vmem:[%s3 + $0x18] sm:$0xff]
  %v2593 = vld [vmem:[%s3 + $0x20] sm:$0xff]
  %v2594 = vld [vmem:[%s3 + $0x28] sm:$0xff]
  %v2595 = vld [vmem:[%s3 + $0x30] sm:$0xff]
  %v2596 = vld [vmem:[%s3 + $0x38] sm:$0xff]
  %v2597 = vld [vmem:[%s3 + $0x40] sm:$0xff]
  %v2598 = vld [vmem:[%s3 + $0x48] sm:$0xff]
  %v2599 = vld [vmem:[%s3 + $0x50] sm:$0xff]
  %v2600 = vld [vmem:[%s3 + $0x58] sm:$0xff]
  %v2601 = vld [vmem:[%s3 + $0x60] sm:$0xff]
  %v2602 = vld [vmem:[%s3 + $0x68] sm:$0xff]
  %v2603 = vld [vmem:[%s3 + $0x70] sm:$0xff]
  %v2604 = vld [vmem:[%s3 + $0x78] sm:$0xff]
  %v2605 = vld [vmem:[%s3 + $0x80] sm:$0xff]
  %v2606 = vld [vmem:[%s3 + $0x88] sm:$0xff]
  %v2607 = vld [vmem:[%s3 + $0x90] sm:$0xff]
  %v2608 = vld [vmem:[%s3 + $0x98] sm:$0xff]
  %v2609 = vld [vmem:[%s3 + $0xa0] sm:$0xff]
  %v2610 = vld [vmem:[%s3 + $0xa8] sm:$0xff]
  %v2611 = vld [vmem:[%s3 + $0xb0] sm:$0xff]
  %v2612 = vld [vmem:[%s3 + $0xb8] sm:$0xff]
  %v2613 = vld [vmem:[%s3 + $0xc0] sm:$0xff]
  %v2614 = vld [vmem:[%s3 + $0xc8] sm:$0xff]
  %v2615 = vld [vmem:[%s3 + $0xd0] sm:$0xff]
  %v2616 = vld [vmem:[%s3 + $0xd8] sm:$0xff]
  %v2617 = vld [vmem:[%s3 + $0xe0] sm:$0xff]
  %v2618 = vld [vmem:[%s3 + $0xe8] sm:$0xff]
  %v2619 = vld [vmem:[%s3 + $0xf0] sm:$0xff]
  %v2620 = vld [vmem:[%s3 + $0xf8] sm:$0xff]
  %v2621 = vld [vmem:[%s3 + $0x100] sm:$0xff]
  %v2622 = vld [vmem:[%s3 + $0x108] sm:$0xff]
  %v2623 = vld [vmem:[%s3 + $0x110] sm:$0xff]
  %v2624 = vld [vmem:[%s3 + $0x118] sm:$0xff]
  %v2625 = vld [vmem:[%s3 + $0x120] sm:$0xff]
  %v2626 = vld [vmem:[%s3 + $0x128] sm:$0xff]
  %v2627 = vld [vmem:[%s3 + $0x130] sm:$0xff]
  %v2628 = vld [vmem:[%s3 + $0x138] sm:$0xff]
  %v2629 = vld [vmem:[%s3 + $0x140] sm:$0xff]
  %v2630 = vld [vmem:[%s3 + $0x148] sm:$0xff]
  %v2631 = vld [vmem:[%s3 + $0x150] sm:$0xff]
  %v2632 = vld [vmem:[%s3 + $0x158] sm:$0xff]
  %v2633 = vld [vmem:[%s3 + $0x160] sm:$0xff]
  %v2634 = vld [vmem:[%s3 + $0x168] sm:$0xff]
  %v2635 = vld [vmem:[%s3 + $0x170] sm:$0xff]
  %v2636 = vld [vmem:[%s3 + $0x178] sm:$0xff]
  %v2637 = vld [vmem:[%s3 + $0x180] sm:$0xff]
  %v2638 = vld [vmem:[%s3 + $0x188] sm:$0xff]
  %v2639 = vld [vmem:[%s3 + $0x190] sm:$0xff]
  %v2640 = vld [vmem:[%s3 + $0x198] sm:$0xff]
  %v2641 = vld [vmem:[%s3 + $0x1a0] sm:$0xff]
  %v2642 = vld [vmem:[%s3 + $0x1a8] sm:$0xff]
  %v2643 = vld [vmem:[%s3 + $0x1b0] sm:$0xff]
  %v2644 = vld [vmem:[%s3 + $0x1b8] sm:$0xff]
  %v2645 = vld [vmem:[%s3 + $0x1c0] sm:$0xff]
  %v2646 = vld [vmem:[%s3 + $0x1c8] sm:$0xff]
  %v2647 = vld [vmem:[%s3 + $0x1d0] sm:$0xff]
  %v2648 = vld [vmem:[%s3 + $0x1d8] sm:$0xff]
  %v2649 = vld [vmem:[%s3 + $0x1e0] sm:$0xff]
  %v2650 = vld [vmem:[%s3 + $0x1e8] sm:$0xff]
  %v2651 = vld [vmem:[%s3 + $0x1f0] sm:$0xff]
  %v2652 = vld [vmem:[%s3 + $0x1f8] sm:$0xff]
  %2653 = vxpose.xlu0.b32.start [1/16] %v2588, 128
  %2654 = vxpose.xlu0.b32.cont [2/16] 0.0, 128
  %2655 = vxpose.xlu0.b32.cont [3/16] 0.0, 128
  %2656 = vxpose.xlu0.b32.cont [4/16] 0.0, 128
  %2657 = vxpose.xlu0.b32.cont [5/16] 0.0, 128
  %2658 = vxpose.xlu0.b32.cont [6/16] 0.0, 128
  %2659 = vxpose.xlu0.b32.cont [7/16] 0.0, 128
  %2660 = vxpose.xlu0.b32.cont [8/16] 0.0, 128
  %2661 = vxpose.xlu0.b32.cont [9/16] 0.0, 128
  %2662 = vxpose.xlu0.b32.cont [10/16] 0.0, 128
  %2663 = vxpose.xlu0.b32.cont [11/16] 0.0, 128
  %2664 = vxpose.xlu0.b32.cont [12/16] 0.0, 128
  %2665 = vxpose.xlu0.b32.cont [13/16] 0.0, 128
  %2666 = vxpose.xlu0.b32.cont [14/16] 0.0, 128
  %2667 = vxpose.xlu0.b32.cont [15/16] 0.0, 128
  %2668 = vxpose.xlu0.b32.end [16/16] 0.0, 128
  %v2669 = vpop.trf.xlu0
  %v2670 = vpop.trf.xlu0
  %v2671 = vpop.trf.xlu0
  %v2672 = vpop.trf.xlu0
  %v2673 = vpop.trf.xlu0
  %v2674 = vpop.trf.xlu0
  %v2675 = vpop.trf.xlu0
  %v2676 = vpop.trf.xlu0
  %v2677 = vpop.trf.xlu0
  %v2678 = vpop.trf.xlu0
  %v2679 = vpop.trf.xlu0
  %v2680 = vpop.trf.xlu0
  %v2681 = vpop.trf.xlu0
  %v2682 = vpop.trf.xlu0
  %v2683 = vpop.trf.xlu0
  %v2684 = vpop.trf.xlu0
  %2686 = vset.pattern.permute.xlu0 0
  %2687 = vperm.xlu0 %2686, %v2669
  %v2688 = vpop.permute.xlu0 %2687
  %2691 = vset.pattern.permute.xlu0 0
  %2692 = vperm.xlu0 %2691, %v2670
  %v2693 = vpop.permute.xlu0 %2692
  %2696 = vset.pattern.permute.xlu0 0
  %2697 = vperm.xlu0 %2696, %v2671
  %v2698 = vpop.permute.xlu0 %2697
  %2701 = vset.pattern.permute.xlu0 0
  %2702 = vperm.xlu0 %2701, %v2672
  %v2703 = vpop.permute.xlu0 %2702
  %2706 = vset.pattern.permute.xlu0 0
  %2707 = vperm.xlu0 %2706, %v2673
  %v2708 = vpop.permute.xlu0 %2707
  %2711 = vset.pattern.permute.xlu0 0
  %2712 = vperm.xlu0 %2711, %v2674
  %v2713 = vpop.permute.xlu0 %2712
  %2716 = vset.pattern.permute.xlu0 0
  %2717 = vperm.xlu0 %2716, %v2675
  %v2718 = vpop.permute.xlu0 %2717
  %2721 = vset.pattern.permute.xlu0 0
  %2722 = vperm.xlu0 %2721, %v2676
  %v2723 = vpop.permute.xlu0 %2722
  %2726 = vset.pattern.permute.xlu0 0
  %2727 = vperm.xlu0 %2726, %v2677
  %v2728 = vpop.permute.xlu0 %2727
  %2731 = vset.pattern.permute.xlu0 0
  %2732 = vperm.xlu0 %2731, %v2678
  %v2733 = vpop.permute.xlu0 %2732
  %2736 = vset.pattern.permute.xlu0 0
  %2737 = vperm.xlu0 %2736, %v2679
  %v2738 = vpop.permute.xlu0 %2737
  %2741 = vset.pattern.permute.xlu0 0
  %2742 = vperm.xlu0 %2741, %v2680
  %v2743 = vpop.permute.xlu0 %2742
  %2746 = vset.pattern.permute.xlu0 0
  %2747 = vperm.xlu0 %2746, %v2681
  %v2748 = vpop.permute.xlu0 %2747
  %2751 = vset.pattern.permute.xlu0 0
  %2752 = vperm.xlu0 %2751, %v2682
  %v2753 = vpop.permute.xlu0 %2752
  %2756 = vset.pattern.permute.xlu0 0
  %2757 = vperm.xlu0 %2756, %v2683
  %v2758 = vpop.permute.xlu0 %2757
  %2761 = vset.pattern.permute.xlu0 0
  %2762 = vperm.xlu0 %2761, %v2684
  %v2763 = vpop.permute.xlu0 %2762
  %v2829 = vunpack.c.l.b16 %v2589
  %v2830 = vunpack.c.h.b16 %v2589
  %v2831 = vunpack.c.l.b16 %v2590
  %v2832 = vunpack.c.h.b16 %v2590
  %v2833 = vunpack.c.l.b16 %v2591
  %v2834 = vunpack.c.h.b16 %v2591
  %v2835 = vunpack.c.l.b16 %v2592
  %v2836 = vunpack.c.h.b16 %v2592
  %v2837 = vunpack.c.l.b16 %v2593
  %v2838 = vunpack.c.h.b16 %v2593
  %v2839 = vunpack.c.l.b16 %v2594
  %v2840 = vunpack.c.h.b16 %v2594
  %v2841 = vunpack.c.l.b16 %v2595
  %v2842 = vunpack.c.h.b16 %v2595
  %v2843 = vunpack.c.l.b16 %v2596
  %v2844 = vunpack.c.h.b16 %v2596
  %v2845 = vunpack.c.l.b16 %v2597
  %v2846 = vunpack.c.h.b16 %v2597
  %v2847 = vunpack.c.l.b16 %v2598
  %v2848 = vunpack.c.h.b16 %v2598
  %v2849 = vunpack.c.l.b16 %v2599
  %v2850 = vunpack.c.h.b16 %v2599
  %v2851 = vunpack.c.l.b16 %v2600
  %v2852 = vunpack.c.h.b16 %v2600
  %v2853 = vunpack.c.l.b16 %v2601
  %v2854 = vunpack.c.h.b16 %v2601
  %v2855 = vunpack.c.l.b16 %v2602
  %v2856 = vunpack.c.h.b16 %v2602
  %v2857 = vunpack.c.l.b16 %v2603
  %v2858 = vunpack.c.h.b16 %v2603
  %v2859 = vunpack.c.l.b16 %v2604
  %v2860 = vunpack.c.h.b16 %v2604
  %v2861 = vunpack.c.l.b16 %v2605
  %v2862 = vunpack.c.h.b16 %v2605
  %v2863 = vunpack.c.l.b16 %v2606
  %v2864 = vunpack.c.h.b16 %v2606
  %v2865 = vunpack.c.l.b16 %v2607
  %v2866 = vunpack.c.h.b16 %v2607
  %v2867 = vunpack.c.l.b16 %v2608
  %v2868 = vunpack.c.h.b16 %v2608
  %v2869 = vunpack.c.l.b16 %v2609
  %v2870 = vunpack.c.h.b16 %v2609
  %v2871 = vunpack.c.l.b16 %v2610
  %v2872 = vunpack.c.h.b16 %v2610
  %v2873 = vunpack.c.l.b16 %v2611
  %v2874 = vunpack.c.h.b16 %v2611
  %v2875 = vunpack.c.l.b16 %v2612
  %v2876 = vunpack.c.h.b16 %v2612
  %v2877 = vunpack.c.l.b16 %v2613
  %v2878 = vunpack.c.h.b16 %v2613
  %v2879 = vunpack.c.l.b16 %v2614
  %v2880 = vunpack.c.h.b16 %v2614
  %v2881 = vunpack.c.l.b16 %v2615
  %v2882 = vunpack.c.h.b16 %v2615
  %v2883 = vunpack.c.l.b16 %v2616
  %v2884 = vunpack.c.h.b16 %v2616
  %v2885 = vunpack.c.l.b16 %v2617
  %v2886 = vunpack.c.h.b16 %v2617
  %v2887 = vunpack.c.l.b16 %v2618
  %v2888 = vunpack.c.h.b16 %v2618
  %v2889 = vunpack.c.l.b16 %v2619
  %v2890 = vunpack.c.h.b16 %v2619
  %v2891 = vunpack.c.l.b16 %v2620
  %v2892 = vunpack.c.h.b16 %v2620
  %v2893 = vunpack.c.l.b16 %v2621
  %v2894 = vunpack.c.h.b16 %v2621
  %v2895 = vunpack.c.l.b16 %v2622
  %v2896 = vunpack.c.h.b16 %v2622
  %v2897 = vunpack.c.l.b16 %v2623
  %v2898 = vunpack.c.h.b16 %v2623
  %v2899 = vunpack.c.l.b16 %v2624
  %v2900 = vunpack.c.h.b16 %v2624
  %v2901 = vunpack.c.l.b16 %v2625
  %v2902 = vunpack.c.h.b16 %v2625
  %v2903 = vunpack.c.l.b16 %v2626
  %v2904 = vunpack.c.h.b16 %v2626
  %v2905 = vunpack.c.l.b16 %v2627
  %v2906 = vunpack.c.h.b16 %v2627
  %v2907 = vunpack.c.l.b16 %v2628
  %v2908 = vunpack.c.h.b16 %v2628
  %v2909 = vunpack.c.l.b16 %v2629
  %v2910 = vunpack.c.h.b16 %v2629
  %v2911 = vunpack.c.l.b16 %v2630
  %v2912 = vunpack.c.h.b16 %v2630
  %v2913 = vunpack.c.l.b16 %v2631
  %v2914 = vunpack.c.h.b16 %v2631
  %v2915 = vunpack.c.l.b16 %v2632
  %v2916 = vunpack.c.h.b16 %v2632
  %v2917 = vunpack.c.l.b16 %v2633
  %v2918 = vunpack.c.h.b16 %v2633
  %v2919 = vunpack.c.l.b16 %v2634
  %v2920 = vunpack.c.h.b16 %v2634
  %v2921 = vunpack.c.l.b16 %v2635
  %v2922 = vunpack.c.h.b16 %v2635
  %v2923 = vunpack.c.l.b16 %v2636
  %v2924 = vunpack.c.h.b16 %v2636
  %v2925 = vunpack.c.l.b16 %v2637
  %v2926 = vunpack.c.h.b16 %v2637
  %v2927 = vunpack.c.l.b16 %v2638
  %v2928 = vunpack.c.h.b16 %v2638
  %v2929 = vunpack.c.l.b16 %v2639
  %v2930 = vunpack.c.h.b16 %v2639
  %v2931 = vunpack.c.l.b16 %v2640
  %v2932 = vunpack.c.h.b16 %v2640
  %v2933 = vunpack.c.l.b16 %v2641
  %v2934 = vunpack.c.h.b16 %v2641
  %v2935 = vunpack.c.l.b16 %v2642
  %v2936 = vunpack.c.h.b16 %v2642
  %v2937 = vunpack.c.l.b16 %v2643
  %v2938 = vunpack.c.h.b16 %v2643
  %v2939 = vunpack.c.l.b16 %v2644
  %v2940 = vunpack.c.h.b16 %v2644
  %v2941 = vunpack.c.l.b16 %v2645
  %v2942 = vunpack.c.h.b16 %v2645
  %v2943 = vunpack.c.l.b16 %v2646
  %v2944 = vunpack.c.h.b16 %v2646
  %v2945 = vunpack.c.l.b16 %v2647
  %v2946 = vunpack.c.h.b16 %v2647
  %v2947 = vunpack.c.l.b16 %v2648
  %v2948 = vunpack.c.h.b16 %v2648
  %v2949 = vunpack.c.l.b16 %v2649
  %v2950 = vunpack.c.h.b16 %v2649
  %v2951 = vunpack.c.l.b16 %v2650
  %v2952 = vunpack.c.h.b16 %v2650
  %v2953 = vunpack.c.l.b16 %v2651
  %v2954 = vunpack.c.h.b16 %v2651
  %v2955 = vunpack.c.l.b16 %v2652
  %v2956 = vunpack.c.h.b16 %v2652
  %v2957 = vpack.c.b16 %v2837, %v2829
  %v2958 = vpack.c.b16 %v2838, %v2830
  %v2959 = vpack.c.b16 %v2839, %v2831
  %v2960 = vpack.c.b16 %v2840, %v2832
  %v2961 = vpack.c.b16 %v2841, %v2833
  %v2962 = vpack.c.b16 %v2842, %v2834
  %v2963 = vpack.c.b16 %v2843, %v2835
  %v2964 = vpack.c.b16 %v2844, %v2836
  %v2965 = vpack.c.b16 %v2853, %v2845
  %v2966 = vpack.c.b16 %v2854, %v2846
  %v2967 = vpack.c.b16 %v2855, %v2847
  %v2968 = vpack.c.b16 %v2856, %v2848
  %v2969 = vpack.c.b16 %v2857, %v2849
  %v2970 = vpack.c.b16 %v2858, %v2850
  %v2971 = vpack.c.b16 %v2859, %v2851
  %v2972 = vpack.c.b16 %v2860, %v2852
  %v2973 = vpack.c.b16 %v2869, %v2861
  %v2974 = vpack.c.b16 %v2870, %v2862
  %v2975 = vpack.c.b16 %v2871, %v2863
  %v2976 = vpack.c.b16 %v2872, %v2864
  %v2977 = vpack.c.b16 %v2873, %v2865
  %v2978 = vpack.c.b16 %v2874, %v2866
  %v2979 = vpack.c.b16 %v2875, %v2867
  %v2980 = vpack.c.b16 %v2876, %v2868
  %v2981 = vpack.c.b16 %v2885, %v2877
  %v2982 = vpack.c.b16 %v2886, %v2878
  %v2983 = vpack.c.b16 %v2887, %v2879
  %v2984 = vpack.c.b16 %v2888, %v2880
  %v2985 = vpack.c.b16 %v2889, %v2881
  %v2986 = vpack.c.b16 %v2890, %v2882
  %v2987 = vpack.c.b16 %v2891, %v2883
  %v2988 = vpack.c.b16 %v2892, %v2884
  %v2989 = vpack.c.b16 %v2901, %v2893
  %v2990 = vpack.c.b16 %v2902, %v2894
  %v2991 = vpack.c.b16 %v2903, %v2895
  %v2992 = vpack.c.b16 %v2904, %v2896
  %v2993 = vpack.c.b16 %v2905, %v2897
  %v2994 = vpack.c.b16 %v2906, %v2898
  %v2995 = vpack.c.b16 %v2907, %v2899
  %v2996 = vpack.c.b16 %v2908, %v2900
  %v2997 = vpack.c.b16 %v2917, %v2909
  %v2998 = vpack.c.b16 %v2918, %v2910
  %v2999 = vpack.c.b16 %v2919, %v2911
  %v3000 = vpack.c.b16 %v2920, %v2912
  %v3001 = vpack.c.b16 %v2921, %v2913
  %v3002 = vpack.c.b16 %v2922, %v2914
  %v3003 = vpack.c.b16 %v2923, %v2915
  %v3004 = vpack.c.b16 %v2924, %v2916
  %v3005 = vpack.c.b16 %v2933, %v2925
  %v3006 = vpack.c.b16 %v2934, %v2926
  %v3007 = vpack.c.b16 %v2935, %v2927
  %v3008 = vpack.c.b16 %v2936, %v2928
  %v3009 = vpack.c.b16 %v2937, %v2929
  %v3010 = vpack.c.b16 %v2938, %v2930
  %v3011 = vpack.c.b16 %v2939, %v2931
  %v3012 = vpack.c.b16 %v2940, %v2932
  %v3013 = vpack.c.b16 %v2949, %v2941
  %v3014 = vpack.c.b16 %v2950, %v2942
  %v3015 = vpack.c.b16 %v2951, %v2943
  %v3016 = vpack.c.b16 %v2952, %v2944
  %v3017 = vpack.c.b16 %v2953, %v2945
  %v3018 = vpack.c.b16 %v2954, %v2946
  %v3019 = vpack.c.b16 %v2955, %v2947
  %v3020 = vpack.c.b16 %v2956, %v2948
  %3085 = vmatprep.subr.bf16.mxu0 0
  %3086 = vmatpush1.bf16.msra.mxu0 %v277
  %3087 = vmatprep.subr.bf16.mxu0 0
  %3088 = vmatpush1.bf16.msra.mxu0 %v278
  %3089 = vmatprep.subr.bf16.mxu0 0
  %3090 = vmatpush1.bf16.msra.mxu0 %v279
  %3091 = vmatprep.subr.bf16.mxu0 0
  %3092 = vmatpush1.bf16.msra.mxu0 %v280
  %3093 = vmatprep.subr.bf16.mxu0 0
  %3094 = vmatpush1.bf16.msra.mxu0 %v281
  %3095 = vmatprep.subr.bf16.mxu0 0
  %3096 = vmatpush1.bf16.msra.mxu0 %v282
  %3097 = vmatprep.subr.bf16.mxu0 0
  %3098 = vmatpush1.bf16.msra.mxu0 %v283
  %3099 = vmatprep.subr.bf16.mxu0 0
  %3100 = vmatpush1.bf16.msra.mxu0 %v284
  %3101 = vmatprep.subr.bf16.mxu0 0
  %3102 = vmatpush1.bf16.msra.mxu0 %v285
  %3103 = vmatprep.subr.bf16.mxu0 0
  %3104 = vmatpush1.bf16.msra.mxu0 %v286
  %3105 = vmatprep.subr.bf16.mxu0 0
  %3106 = vmatpush1.bf16.msra.mxu0 %v287
  %3107 = vmatprep.subr.bf16.mxu0 0
  %3108 = vmatpush1.bf16.msra.mxu0 %v288
  %3109 = vmatprep.subr.bf16.mxu0 0
  %3110 = vmatpush1.bf16.msra.mxu0 %v289
  %3111 = vmatprep.subr.bf16.mxu0 0
  %3112 = vmatpush1.bf16.msra.mxu0 %v290
  %3113 = vmatprep.subr.bf16.mxu0 0
  %3114 = vmatpush1.bf16.msra.mxu0 %v291
  %3115 = vmatprep.subr.bf16.mxu0 0
  %3116 = vmatpush1.bf16.msra.mxu0 %v292
  %3117 = vmatprep.mubr.bf16.mxu0 %v2958
  %3118 = vmatmul.mubr.bf16.gmra.mrb[0].mxu0 %v2957
  %v3119 = vpop.f32.mrb[0].mxu0
  %v3120 = vadd.f32 %v2688, %v3119
  %v3121 = vpop.f32.mrb[0].mxu0
  %v3122 = vpop.f32.mrb[0].mxu0
  %v3123 = vadd.f32 %v2693, %v3122
  %v3124 = vpop.f32.mrb[0].mxu0
  %3125 = vmatprep.mubr.bf16.mxu0 %v2966
  %3126 = vmatmul.mubr.bf16.gmra.mrb[0].mxu0 %v2965
  %v3127 = vpop.f32.mrb[0].mxu0
  %v3128 = vadd.f32 %v2698, %v3127
  %v3129 = vpop.f32.mrb[0].mxu0
  %v3130 = vpop.f32.mrb[0].mxu0
  %v3131 = vadd.f32 %v2703, %v3130
  %v3132 = vpop.f32.mrb[0].mxu0
  %3133 = vmatprep.mubr.bf16.mxu0 %v2974
  %3134 = vmatmul.mubr.bf16.gmra.mrb[0].mxu0 %v2973
  %v3135 = vpop.f32.mrb[0].mxu0
  %v3136 = vadd.f32 %v2708, %v3135
  %v3137 = vpop.f32.mrb[0].mxu0
  %v3138 = vpop.f32.mrb[0].mxu0
  %v3139 = vadd.f32 %v2713, %v3138
  %v3140 = vpop.f32.mrb[0].mxu0
  %3141 = vmatprep.mubr.bf16.mxu0 %v2982
  %3142 = vmatmul.mubr.bf16.gmra.mrb[0].mxu0 %v2981
  %v3143 = vpop.f32.mrb[0].mxu0
  %v3144 = vadd.f32 %v2718, %v3143
  %v3145 = vpop.f32.mrb[0].mxu0
  %v3146 = vpop.f32.mrb[0].mxu0
  %v3147 = vadd.f32 %v2723, %v3146
  %v3148 = vpop.f32.mrb[0].mxu0
  %3149 = vmatprep.mubr.bf16.mxu0 %v2990
  %3150 = vmatmul.mubr.bf16.gmra.mrb[0].mxu0 %v2989
  %v3151 = vpop.f32.mrb[0].mxu0
  %v3152 = vadd.f32 %v2728, %v3151
  %v3153 = vpop.f32.mrb[0].mxu0
  %v3154 = vpop.f32.mrb[0].mxu0
  %v3155 = vadd.f32 %v2733, %v3154
  %v3156 = vpop.f32.mrb[0].mxu0
  %3157 = vmatprep.mubr.bf16.mxu0 %v2998
  %3158 = vmatmul.mubr.bf16.gmra.mrb[0].mxu0 %v2997
  %v3159 = vpop.f32.mrb[0].mxu0
  %v3160 = vadd.f32 %v2738, %v3159
  %v3161 = vpop.f32.mrb[0].mxu0
  %v3162 = vpop.f32.mrb[0].mxu0
  %v3163 = vadd.f32 %v2743, %v3162
  %v3164 = vpop.f32.mrb[0].mxu0
  %3165 = vmatprep.mubr.bf16.mxu0 %v3006
  %3166 = vmatmul.mubr.bf16.gmra.mrb[0].mxu0 %v3005
  %v3167 = vpop.f32.mrb[0].mxu0
  %v3168 = vadd.f32 %v2748, %v3167
  %v3169 = vpop.f32.mrb[0].mxu0
  %v3170 = vpop.f32.mrb[0].mxu0
  %v3171 = vadd.f32 %v2753, %v3170
  %v3172 = vpop.f32.mrb[0].mxu0
  %3173 = vmatprep.mubr.bf16.mxu0 %v3014
  %3174 = vmatmul.mubr.bf16.gmra.mrb[0].mxu0 %v3013
  %v3175 = vpop.f32.mrb[0].mxu0
  %v3176 = vadd.f32 %v2758, %v3175
  %v3177 = vpop.f32.mrb[0].mxu0
  %v3178 = vpop.f32.mrb[0].mxu0
  %v3179 = vadd.f32 %v2763, %v3178
  %v3180 = vpop.f32.mrb[0].mxu0
  %3181 = vdwg.mxu0
  %3182 = vmatprep.subr.bf16.mxu0 0
  %3183 = vmatpush1.bf16.msra.mxu0 %v293
  %3184 = vmatprep.subr.bf16.mxu0 0
  %3185 = vmatpush1.bf16.msra.mxu0 %v294
  %3186 = vmatprep.subr.bf16.mxu0 0
  %3187 = vmatpush1.bf16.msra.mxu0 %v295
  %3188 = vmatprep.subr.bf16.mxu0 0
  %3189 = vmatpush1.bf16.msra.mxu0 %v296
  %3190 = vmatprep.subr.bf16.mxu0 0
  %3191 = vmatpush1.bf16.msra.mxu0 %v297
  %3192 = vmatprep.subr.bf16.mxu0 0
  %3193 = vmatpush1.bf16.msra.mxu0 %v298
  %3194 = vmatprep.subr.bf16.mxu0 0
  %3195 = vmatpush1.bf16.msra.mxu0 %v299
  %3196 = vmatprep.subr.bf16.mxu0 0
  %3197 = vmatpush1.bf16.msra.mxu0 %v300
  %3198 = vmatprep.subr.bf16.mxu0 0
  %3199 = vmatpush1.bf16.msra.mxu0 %v301
  %3200 = vmatprep.subr.bf16.mxu0 0
  %3201 = vmatpush1.bf16.msra.mxu0 %v302
  %3202 = vmatprep.subr.bf16.mxu0 0
  %3203 = vmatpush1.bf16.msra.mxu0 %v303
  %3204 = vmatprep.subr.bf16.mxu0 0
  %3205 = vmatpush1.bf16.msra.mxu0 %v304
  %3206 = vmatprep.subr.bf16.mxu0 0
  %3207 = vmatpush1.bf16.msra.mxu0 %v305
  %3208 = vmatprep.subr.bf16.mxu0 0
  %3209 = vmatpush1.bf16.msra.mxu0 %v306
  %3210 = vmatprep.subr.bf16.mxu0 0
  %3211 = vmatpush1.bf16.msra.mxu0 %v307
  %3212 = vmatprep.subr.bf16.mxu0 0
  %3213 = vmatpush1.bf16.msra.mxu0 %v308
  %3214 = vmatprep.mubr.bf16.mxu0 %v2960
  %3215 = vmatmul.mubr.bf16.gmra.mrb[0].mxu0 %v2959
  %v3216 = vpop.f32.mrb[0].mxu0
  %v3217 = vadd.f32 %v3120, %v3216
  %v3218 = vpop.f32.mrb[0].mxu0
  %v3219 = vpop.f32.mrb[0].mxu0
  %v3220 = vadd.f32 %v3123, %v3219
  %v3221 = vpop.f32.mrb[0].mxu0
  %3222 = vmatprep.mubr.bf16.mxu0 %v2968
  %3223 = vmatmul.mubr.bf16.gmra.mrb[0].mxu0 %v2967
  %v3224 = vpop.f32.mrb[0].mxu0
  %v3225 = vadd.f32 %v3128, %v3224
  %v3226 = vpop.f32.mrb[0].mxu0
  %v3227 = vpop.f32.mrb[0].mxu0
  %v3228 = vadd.f32 %v3131, %v3227
  %v3229 = vpop.f32.mrb[0].mxu0
  %3230 = vmatprep.mubr.bf16.mxu0 %v2976
  %3231 = vmatmul.mubr.bf16.gmra.mrb[0].mxu0 %v2975
  %v3232 = vpop.f32.mrb[0].mxu0
  %v3233 = vadd.f32 %v3136, %v3232
  %v3234 = vpop.f32.mrb[0].mxu0
  %v3235 = vpop.f32.mrb[0].mxu0
  %v3236 = vadd.f32 %v3139, %v3235
  %v3237 = vpop.f32.mrb[0].mxu0
  %3238 = vmatprep.mubr.bf16.mxu0 %v2984
  %3239 = vmatmul.mubr.bf16.gmra.mrb[0].mxu0 %v2983
  %v3240 = vpop.f32.mrb[0].mxu0
  %v3241 = vadd.f32 %v3144, %v3240
  %v3242 = vpop.f32.mrb[0].mxu0
  %v3243 = vpop.f32.mrb[0].mxu0
  %v3244 = vadd.f32 %v3147, %v3243
  %v3245 = vpop.f32.mrb[0].mxu0
  %3246 = vmatprep.mubr.bf16.mxu0 %v2992
  %3247 = vmatmul.mubr.bf16.gmra.mrb[0].mxu0 %v2991
  %v3248 = vpop.f32.mrb[0].mxu0
  %v3249 = vadd.f32 %v3152, %v3248
  %v3250 = vpop.f32.mrb[0].mxu0
  %v3251 = vpop.f32.mrb[0].mxu0
  %v3252 = vadd.f32 %v3155, %v3251
  %v3253 = vpop.f32.mrb[0].mxu0
  %3254 = vmatprep.mubr.bf16.mxu0 %v3000
  %3255 = vmatmul.mubr.bf16.gmra.mrb[0].mxu0 %v2999
  %v3256 = vpop.f32.mrb[0].mxu0
  %v3257 = vadd.f32 %v3160, %v3256
  %v3258 = vpop.f32.mrb[0].mxu0
  %v3259 = vpop.f32.mrb[0].mxu0
  %v3260 = vadd.f32 %v3163, %v3259
  %v3261 = vpop.f32.mrb[0].mxu0
  %3262 = vmatprep.mubr.bf16.mxu0 %v3008
  %3263 = vmatmul.mubr.bf16.gmra.mrb[0].mxu0 %v3007
  %v3264 = vpop.f32.mrb[0].mxu0
  %v3265 = vadd.f32 %v3168, %v3264
  %v3266 = vpop.f32.mrb[0].mxu0
  %v3267 = vpop.f32.mrb[0].mxu0
  %v3268 = vadd.f32 %v3171, %v3267
  %v3269 = vpop.f32.mrb[0].mxu0
  %3270 = vmatprep.mubr.bf16.mxu0 %v3016
  %3271 = vmatmul.mubr.bf16.gmra.mrb[0].mxu0 %v3015
  %v3272 = vpop.f32.mrb[0].mxu0
  %v3273 = vadd.f32 %v3176, %v3272
  %v3274 = vpop.f32.mrb[0].mxu0
  %v3275 = vpop.f32.mrb[0].mxu0
  %v3276 = vadd.f32 %v3179, %v3275
  %v3277 = vpop.f32.mrb[0].mxu0
  %3278 = vdwg.mxu0
  %3279 = vmatprep.subr.bf16.mxu0 0
  %3280 = vmatpush1.bf16.msra.mxu0 %v309
  %3281 = vmatprep.subr.bf16.mxu0 0
  %3282 = vmatpush1.bf16.msra.mxu0 %v310
  %3283 = vmatprep.subr.bf16.mxu0 0
  %3284 = vmatpush1.bf16.msra.mxu0 %v311
  %3285 = vmatprep.subr.bf16.mxu0 0
  %3286 = vmatpush1.bf16.msra.mxu0 %v312
  %3287 = vmatprep.subr.bf16.mxu0 0
  %3288 = vmatpush1.bf16.msra.mxu0 %v313
  %3289 = vmatprep.subr.bf16.mxu0 0
  %3290 = vmatpush1.bf16.msra.mxu0 %v314
  %3291 = vmatprep.subr.bf16.mxu0 0
  %3292 = vmatpush1.bf16.msra.mxu0 %v315
  %3293 = vmatprep.subr.bf16.mxu0 0
  %3294 = vmatpush1.bf16.msra.mxu0 %v316
  %3295 = vmatprep.subr.bf16.mxu0 0
  %3296 = vmatpush1.bf16.msra.mxu0 %v317
  %3297 = vmatprep.subr.bf16.mxu0 0
  %3298 = vmatpush1.bf16.msra.mxu0 %v318
  %3299 = vmatprep.subr.bf16.mxu0 0
  %3300 = vmatpush1.bf16.msra.mxu0 %v319
  %3301 = vmatprep.subr.bf16.mxu0 0
  %3302 = vmatpush1.bf16.msra.mxu0 %v320
  %3303 = vmatprep.subr.bf16.mxu0 0
  %3304 = vmatpush1.bf16.msra.mxu0 %v321
  %3305 = vmatprep.subr.bf16.mxu0 0
  %3306 = vmatpush1.bf16.msra.mxu0 %v322
  %3307 = vmatprep.subr.bf16.mxu0 0
  %3308 = vmatpush1.bf16.msra.mxu0 %v323
  %3309 = vmatprep.subr.bf16.mxu0 0
  %3310 = vmatpush1.bf16.msra.mxu0 %v324
  %3311 = vmatprep.mubr.bf16.mxu0 %v2962
  %3312 = vmatmul.mubr.bf16.gmra.mrb[0].mxu0 %v2961
  %v3313 = vpop.f32.mrb[0].mxu0
  %v3314 = vadd.f32 %v3217, %v3313
  %v3315 = vpop.f32.mrb[0].mxu0
  %v3316 = vpop.f32.mrb[0].mxu0
  %v3317 = vadd.f32 %v3220, %v3316
  %v3318 = vpop.f32.mrb[0].mxu0
  %3319 = vmatprep.mubr.bf16.mxu0 %v2970
  %3320 = vmatmul.mubr.bf16.gmra.mrb[0].mxu0 %v2969
  %v3321 = vpop.f32.mrb[0].mxu0
  %v3322 = vadd.f32 %v3225, %v3321
  %v3323 = vpop.f32.mrb[0].mxu0
  %v3324 = vpop.f32.mrb[0].mxu0
  %v3325 = vadd.f32 %v3228, %v3324
  %v3326 = vpop.f32.mrb[0].mxu0
  %3327 = vmatprep.mubr.bf16.mxu0 %v2978
  %3328 = vmatmul.mubr.bf16.gmra.mrb[0].mxu0 %v2977
  %v3329 = vpop.f32.mrb[0].mxu0
  %v3330 = vadd.f32 %v3233, %v3329
  %v3331 = vpop.f32.mrb[0].mxu0
  %v3332 = vpop.f32.mrb[0].mxu0
  %v3333 = vadd.f32 %v3236, %v3332
  %v3334 = vpop.f32.mrb[0].mxu0
  %3335 = vmatprep.mubr.bf16.mxu0 %v2986
  %3336 = vmatmul.mubr.bf16.gmra.mrb[0].mxu0 %v2985
  %v3337 = vpop.f32.mrb[0].mxu0
  %v3338 = vadd.f32 %v3241, %v3337
  %v3339 = vpop.f32.mrb[0].mxu0
  %v3340 = vpop.f32.mrb[0].mxu0
  %v3341 = vadd.f32 %v3244, %v3340
  %v3342 = vpop.f32.mrb[0].mxu0
  %3343 = vmatprep.mubr.bf16.mxu0 %v2994
  %3344 = vmatmul.mubr.bf16.gmra.mrb[0].mxu0 %v2993
  %v3345 = vpop.f32.mrb[0].mxu0
  %v3346 = vadd.f32 %v3249, %v3345
  %v3347 = vpop.f32.mrb[0].mxu0
  %v3348 = vpop.f32.mrb[0].mxu0
  %v3349 = vadd.f32 %v3252, %v3348
  %v3350 = vpop.f32.mrb[0].mxu0
  %3351 = vmatprep.mubr.bf16.mxu0 %v3002
  %3352 = vmatmul.mubr.bf16.gmra.mrb[0].mxu0 %v3001
  %v3353 = vpop.f32.mrb[0].mxu0
  %v3354 = vadd.f32 %v3257, %v3353
  %v3355 = vpop.f32.mrb[0].mxu0
  %v3356 = vpop.f32.mrb[0].mxu0
  %v3357 = vadd.f32 %v3260, %v3356
  %v3358 = vpop.f32.mrb[0].mxu0
  %3359 = vmatprep.mubr.bf16.mxu0 %v3010
  %3360 = vmatmul.mubr.bf16.gmra.mrb[0].mxu0 %v3009
  %v3361 = vpop.f32.mrb[0].mxu0
  %v3362 = vadd.f32 %v3265, %v3361
  %v3363 = vpop.f32.mrb[0].mxu0
  %v3364 = vpop.f32.mrb[0].mxu0
  %v3365 = vadd.f32 %v3268, %v3364
  %v3366 = vpop.f32.mrb[0].mxu0
  %3367 = vmatprep.mubr.bf16.mxu0 %v3018
  %3368 = vmatmul.mubr.bf16.gmra.mrb[0].mxu0 %v3017
  %v3369 = vpop.f32.mrb[0].mxu0
  %v3370 = vadd.f32 %v3273, %v3369
  %v3371 = vpop.f32.mrb[0].mxu0
  %v3372 = vpop.f32.mrb[0].mxu0
  %v3373 = vadd.f32 %v3276, %v3372
  %v3374 = vpop.f32.mrb[0].mxu0
  %3375 = vdwg.mxu0
  %3376 = vmatprep.subr.bf16.mxu0 0
  %3377 = vmatpush1.bf16.msra.mxu0 %v325
  %3378 = vmatprep.subr.bf16.mxu0 0
  %3379 = vmatpush1.bf16.msra.mxu0 %v326
  %3380 = vmatprep.subr.bf16.mxu0 0
  %3381 = vmatpush1.bf16.msra.mxu0 %v327
  %3382 = vmatprep.subr.bf16.mxu0 0
  %3383 = vmatpush1.bf16.msra.mxu0 %v328
  %3384 = vmatprep.subr.bf16.mxu0 0
  %3385 = vmatpush1.bf16.msra.mxu0 %v329
  %3386 = vmatprep.subr.bf16.mxu0 0
  %3387 = vmatpush1.bf16.msra.mxu0 %v330
  %3388 = vmatprep.subr.bf16.mxu0 0
  %3389 = vmatpush1.bf16.msra.mxu0 %v331
  %3390 = vmatprep.subr.bf16.mxu0 0
  %3391 = vmatpush1.bf16.msra.mxu0 %v332
  %3392 = vmatprep.subr.bf16.mxu0 0
  %3393 = vmatpush1.bf16.msra.mxu0 %v333
  %3394 = vmatprep.subr.bf16.mxu0 0
  %3395 = vmatpush1.bf16.msra.mxu0 %v334
  %3396 = vmatprep.subr.bf16.mxu0 0
  %3397 = vmatpush1.bf16.msra.mxu0 %v335
  %3398 = vmatprep.subr.bf16.mxu0 0
  %3399 = vmatpush1.bf16.msra.mxu0 %v336
  %3400 = vmatprep.subr.bf16.mxu0 0
  %3401 = vmatpush1.bf16.msra.mxu0 %v337
  %3402 = vmatprep.subr.bf16.mxu0 0
  %3403 = vmatpush1.bf16.msra.mxu0 %v338
  %3404 = vmatprep.subr.bf16.mxu0 0
  %3405 = vmatpush1.bf16.msra.mxu0 %v339
  %3406 = vmatprep.subr.bf16.mxu0 0
  %3407 = vmatpush1.bf16.msra.mxu0 %v340
  %3408 = vmatprep.mubr.bf16.mxu0 %v2964
  %3409 = vmatmul.mubr.bf16.gmra.mrb[0].mxu0 %v2963
  %v3410 = vpop.f32.mrb[0].mxu0
  %v3411 = vadd.f32 %v3314, %v3410
  %v3412 = vpop.f32.mrb[0].mxu0
  %v3413 = vpop.f32.mrb[0].mxu0
  %v3414 = vadd.f32 %v3317, %v3413
  %v3415 = vpop.f32.mrb[0].mxu0
  %3416 = vmatprep.mubr.bf16.mxu0 %v2972
  %3417 = vmatmul.mubr.bf16.gmra.mrb[0].mxu0 %v2971
  %v3418 = vpop.f32.mrb[0].mxu0
  %v3419 = vadd.f32 %v3322, %v3418
  %v3420 = vpop.f32.mrb[0].mxu0
  %v3421 = vpop.f32.mrb[0].mxu0
  %v3422 = vadd.f32 %v3325, %v3421
  %v3423 = vpop.f32.mrb[0].mxu0
  %3424 = vmatprep.mubr.bf16.mxu0 %v2980
  %3425 = vmatmul.mubr.bf16.gmra.mrb[0].mxu0 %v2979
  %v3426 = vpop.f32.mrb[0].mxu0
  %v3427 = vadd.f32 %v3330, %v3426
  %v3428 = vpop.f32.mrb[0].mxu0
  %v3429 = vpop.f32.mrb[0].mxu0
  %v3430 = vadd.f32 %v3333, %v3429
  %v3431 = vpop.f32.mrb[0].mxu0
  %3432 = vmatprep.mubr.bf16.mxu0 %v2988
  %3433 = vmatmul.mubr.bf16.gmra.mrb[0].mxu0 %v2987
  %v3434 = vpop.f32.mrb[0].mxu0
  %v3435 = vadd.f32 %v3338, %v3434
  %v3436 = vpop.f32.mrb[0].mxu0
  %v3437 = vpop.f32.mrb[0].mxu0
  %v3438 = vadd.f32 %v3341, %v3437
  %v3439 = vpop.f32.mrb[0].mxu0
  %3440 = vmatprep.mubr.bf16.mxu0 %v2996
  %3441 = vmatmul.mubr.bf16.gmra.mrb[0].mxu0 %v2995
  %v3442 = vpop.f32.mrb[0].mxu0
  %v3443 = vadd.f32 %v3346, %v3442
  %v3444 = vpop.f32.mrb[0].mxu0
  %v3445 = vpop.f32.mrb[0].mxu0
  %v3446 = vadd.f32 %v3349, %v3445
  %v3447 = vpop.f32.mrb[0].mxu0
  %3448 = vmatprep.mubr.bf16.mxu0 %v3004
  %3449 = vmatmul.mubr.bf16.gmra.mrb[0].mxu0 %v3003
  %v3450 = vpop.f32.mrb[0].mxu0
  %v3451 = vadd.f32 %v3354, %v3450
  %v3452 = vpop.f32.mrb[0].mxu0
  %v3453 = vpop.f32.mrb[0].mxu0
  %v3454 = vadd.f32 %v3357, %v3453
  %v3455 = vpop.f32.mrb[0].mxu0
  %3456 = vmatprep.mubr.bf16.mxu0 %v3012
  %3457 = vmatmul.mubr.bf16.gmra.mrb[0].mxu0 %v3011
  %v3458 = vpop.f32.mrb[0].mxu0
  %v3459 = vadd.f32 %v3362, %v3458
  %v3460 = vpop.f32.mrb[0].mxu0
  %v3461 = vpop.f32.mrb[0].mxu0
  %v3462 = vadd.f32 %v3365, %v3461
  %v3463 = vpop.f32.mrb[0].mxu0
  %3464 = vmatprep.mubr.bf16.mxu0 %v3020
  %3465 = vmatmul.mubr.bf16.gmra.mrb[0].mxu0 %v3019
  %v3466 = vpop.f32.mrb[0].mxu0
  %v3467 = vadd.f32 %v3370, %v3466
  %v3468 = vpop.f32.mrb[0].mxu0
  %v3469 = vpop.f32.mrb[0].mxu0
  %v3470 = vadd.f32 %v3373, %v3469
  %v3471 = vpop.f32.mrb[0].mxu0
  %3472 = vdwg.mxu0
  %3473 = vst.msk [vmem:[%s5] sm:$0xff] %vm407, %v3411
  %3474 = vst.msk [vmem:[%s5 + $0x8] sm:$0xff] %vm407, %v3414
  %3475 = vst.msk [vmem:[%s5 + $0x10] sm:$0xff] %vm407, %v3419
  %3476 = vst.msk [vmem:[%s5 + $0x18] sm:$0xff] %vm407, %v3422
  %3477 = vst.msk [vmem:[%s5 + $0x20] sm:$0xff] %vm407, %v3427
  %3478 = vst.msk [vmem:[%s5 + $0x28] sm:$0xff] %vm407, %v3430
  %3479 = vst.msk [vmem:[%s5 + $0x30] sm:$0xff] %vm407, %v3435
  %3480 = vst.msk [vmem:[%s5 + $0x38] sm:$0xff] %vm407, %v3438
  %3481 = vst.msk [vmem:[%s5 + $0x40] sm:$0xff] %vm407, %v3443
  %3482 = vst.msk [vmem:[%s5 + $0x48] sm:$0xff] %vm407, %v3446
  %3483 = vst.msk [vmem:[%s5 + $0x50] sm:$0xff] %vm407, %v3451
  %3484 = vst.msk [vmem:[%s5 + $0x58] sm:$0xff] %vm407, %v3454
  %3485 = vst.msk [vmem:[%s5 + $0x60] sm:$0xff] %vm407, %v3459
  %3486 = vst.msk [vmem:[%s5 + $0x68] sm:$0xff] %vm407, %v3462
  %3487 = vst.msk [vmem:[%s5 + $0x70] sm:$0xff] %vm407, %v3467
  %3488 = vst.msk [vmem:[%s5 + $0x78] sm:$0xff] %vm407, %v3470
  %v3490 = vrot.slane %v2588, 1
  %3492 = vxpose.xlu0.b32.start [1/16] %v3490, 128
  %3493 = vxpose.xlu0.b32.cont [2/16] 0.0, 128
  %3494 = vxpose.xlu0.b32.cont [3/16] 0.0, 128
  %3495 = vxpose.xlu0.b32.cont [4/16] 0.0, 128
  %3496 = vxpose.xlu0.b32.cont [5/16] 0.0, 128
  %3497 = vxpose.xlu0.b32.cont [6/16] 0.0, 128
  %3498 = vxpose.xlu0.b32.cont [7/16] 0.0, 128
  %3499 = vxpose.xlu0.b32.cont [8/16] 0.0, 128
  %3500 = vxpose.xlu0.b32.cont [9/16] 0.0, 128
  %3501 = vxpose.xlu0.b32.cont [10/16] 0.0, 128
  %3502 = vxpose.xlu0.b32.cont [11/16] 0.0, 128
  %3503 = vxpose.xlu0.b32.cont [12/16] 0.0, 128
  %3504 = vxpose.xlu0.b32.cont [13/16] 0.0, 128
  %3505 = vxpose.xlu0.b32.cont [14/16] 0.0, 128
  %3506 = vxpose.xlu0.b32.cont [15/16] 0.0, 128
  %3507 = vxpose.xlu0.b32.end [16/16] 0.0, 128
  %v3508 = vpop.trf.xlu0
  %v3509 = vpop.trf.xlu0
  %v3510 = vpop.trf.xlu0
  %v3511 = vpop.trf.xlu0
  %v3512 = vpop.trf.xlu0
  %v3513 = vpop.trf.xlu0
  %v3514 = vpop.trf.xlu0
  %v3515 = vpop.trf.xlu0
  %v3516 = vpop.trf.xlu0
  %v3517 = vpop.trf.xlu0
  %v3518 = vpop.trf.xlu0
  %v3519 = vpop.trf.xlu0
  %v3520 = vpop.trf.xlu0
  %v3521 = vpop.trf.xlu0
  %v3522 = vpop.trf.xlu0
  %v3523 = vpop.trf.xlu0
  %3525 = vset.pattern.permute.xlu0 0
  %3526 = vperm.xlu0 %3525, %v3508
  %v3527 = vpop.permute.xlu0 %3526
  %3530 = vset.pattern.permute.xlu0 0
  %3531 = vperm.xlu0 %3530, %v3509
  %v3532 = vpop.permute.xlu0 %3531
  %3535 = vset.pattern.permute.xlu0 0
  %3536 = vperm.xlu0 %3535, %v3510
  %v3537 = vpop.permute.xlu0 %3536
  %3540 = vset.pattern.permute.xlu0 0
  %3541 = vperm.xlu0 %3540, %v3511
  %v3542 = vpop.permute.xlu0 %3541
  %3545 = vset.pattern.permute.xlu0 0
  %3546 = vperm.xlu0 %3545, %v3512
  %v3547 = vpop.permute.xlu0 %3546
  %3550 = vset.pattern.permute.xlu0 0
  %3551 = vperm.xlu0 %3550, %v3513
  %v3552 = vpop.permute.xlu0 %3551
  %3555 = vset.pattern.permute.xlu0 0
  %3556 = vperm.xlu0 %3555, %v3514
  %v3557 = vpop.permute.xlu0 %3556
  %3560 = vset.pattern.permute.xlu0 0
  %3561 = vperm.xlu0 %3560, %v3515
  %v3562 = vpop.permute.xlu0 %3561
  %3565 = vset.pattern.permute.xlu0 0
  %3566 = vperm.xlu0 %3565, %v3516
  %v3567 = vpop.permute.xlu0 %3566
  %3570 = vset.pattern.permute.xlu0 0
  %3571 = vperm.xlu0 %3570, %v3517
  %v3572 = vpop.permute.xlu0 %3571
  %3575 = vset.pattern.permute.xlu0 0
  %3576 = vperm.xlu0 %3575, %v3518
  %v3577 = vpop.permute.xlu0 %3576
  %3580 = vset.pattern.permute.xlu0 0
  %3581 = vperm.xlu0 %3580, %v3519
  %v3582 = vpop.permute.xlu0 %3581
  %3585 = vset.pattern.permute.xlu0 0
  %3586 = vperm.xlu0 %3585, %v3520
  %v3587 = vpop.permute.xlu0 %3586
  %3590 = vset.pattern.permute.xlu0 0
  %3591 = vperm.xlu0 %3590, %v3521
  %v3592 = vpop.permute.xlu0 %3591
  %3595 = vset.pattern.permute.xlu0 0
  %3596 = vperm.xlu0 %3595, %v3522
  %v3597 = vpop.permute.xlu0 %3596
  %3600 = vset.pattern.permute.xlu0 0
  %3601 = vperm.xlu0 %3600, %v3523
  %v3602 = vpop.permute.xlu0 %3601
  %3604 = vmatprep.subr.bf16.mxu0 0
  %3605 = vmatpush1.bf16.msra.mxu0 %v341
  %3606 = vmatprep.subr.bf16.mxu0 0
  %3607 = vmatpush1.bf16.msra.mxu0 %v342
  %3608 = vmatprep.subr.bf16.mxu0 0
  %3609 = vmatpush1.bf16.msra.mxu0 %v343
  %3610 = vmatprep.subr.bf16.mxu0 0
  %3611 = vmatpush1.bf16.msra.mxu0 %v344
  %3612 = vmatprep.subr.bf16.mxu0 0
  %3613 = vmatpush1.bf16.msra.mxu0 %v345
  %3614 = vmatprep.subr.bf16.mxu0 0
  %3615 = vmatpush1.bf16.msra.mxu0 %v346
  %3616 = vmatprep.subr.bf16.mxu0 0
  %3617 = vmatpush1.bf16.msra.mxu0 %v347
  %3618 = vmatprep.subr.bf16.mxu0 0
  %3619 = vmatpush1.bf16.msra.mxu0 %v348
  %3620 = vmatprep.subr.bf16.mxu0 0
  %3621 = vmatpush1.bf16.msra.mxu0 %v349
  %3622 = vmatprep.subr.bf16.mxu0 0
  %3623 = vmatpush1.bf16.msra.mxu0 %v350
  %3624 = vmatprep.subr.bf16.mxu0 0
  %3625 = vmatpush1.bf16.msra.mxu0 %v351
  %3626 = vmatprep.subr.bf16.mxu0 0
  %3627 = vmatpush1.bf16.msra.mxu0 %v352
  %3628 = vmatprep.subr.bf16.mxu0 0
  %3629 = vmatpush1.bf16.msra.mxu0 %v353
  %3630 = vmatprep.subr.bf16.mxu0 0
  %3631 = vmatpush1.bf16.msra.mxu0 %v354
  %3632 = vmatprep.subr.bf16.mxu0 0
  %3633 = vmatpush1.bf16.msra.mxu0 %v355
  %3634 = vmatprep.subr.bf16.mxu0 0
  %3635 = vmatpush1.bf16.msra.mxu0 %v356
  %3636 = vmatprep.mubr.bf16.mxu0 %v2958
  %3637 = vmatmul.mubr.bf16.gmra.mrb[0].mxu0 %v2957
  %v3638 = vpop.f32.mrb[0].mxu0
  %v3639 = vadd.f32 %v3527, %v3638
  %v3640 = vpop.f32.mrb[0].mxu0
  %v3641 = vpop.f32.mrb[0].mxu0
  %v3642 = vadd.f32 %v3532, %v3641
  %v3643 = vpop.f32.mrb[0].mxu0
  %3644 = vmatprep.mubr.bf16.mxu0 %v2966
  %3645 = vmatmul.mubr.bf16.gmra.mrb[0].mxu0 %v2965
  %v3646 = vpop.f32.mrb[0].mxu0
  %v3647 = vadd.f32 %v3537, %v3646
  %v3648 = vpop.f32.mrb[0].mxu0
  %v3649 = vpop.f32.mrb[0].mxu0
  %v3650 = vadd.f32 %v3542, %v3649
  %v3651 = vpop.f32.mrb[0].mxu0
  %3652 = vmatprep.mubr.bf16.mxu0 %v2974
  %3653 = vmatmul.mubr.bf16.gmra.mrb[0].mxu0 %v2973
  %v3654 = vpop.f32.mrb[0].mxu0
  %v3655 = vadd.f32 %v3547, %v3654
  %v3656 = vpop.f32.mrb[0].mxu0
  %v3657 = vpop.f32.mrb[0].mxu0
  %v3658 = vadd.f32 %v3552, %v3657
  %v3659 = vpop.f32.mrb[0].mxu0
  %3660 = vmatprep.mubr.bf16.mxu0 %v2982
  %3661 = vmatmul.mubr.bf16.gmra.mrb[0].mxu0 %v2981
  %v3662 = vpop.f32.mrb[0].mxu0
  %v3663 = vadd.f32 %v3557, %v3662
  %v3664 = vpop.f32.mrb[0].mxu0
  %v3665 = vpop.f32.mrb[0].mxu0
  %v3666 = vadd.f32 %v3562, %v3665
  %v3667 = vpop.f32.mrb[0].mxu0
  %3668 = vmatprep.mubr.bf16.mxu0 %v2990
  %3669 = vmatmul.mubr.bf16.gmra.mrb[0].mxu0 %v2989
  %v3670 = vpop.f32.mrb[0].mxu0
  %v3671 = vadd.f32 %v3567, %v3670
  %v3672 = vpop.f32.mrb[0].mxu0
  %v3673 = vpop.f32.mrb[0].mxu0
  %v3674 = vadd.f32 %v3572, %v3673
  %v3675 = vpop.f32.mrb[0].mxu0
  %3676 = vmatprep.mubr.bf16.mxu0 %v2998
  %3677 = vmatmul.mubr.bf16.gmra.mrb[0].mxu0 %v2997
  %v3678 = vpop.f32.mrb[0].mxu0
  %v3679 = vadd.f32 %v3577, %v3678
  %v3680 = vpop.f32.mrb[0].mxu0
  %v3681 = vpop.f32.mrb[0].mxu0
  %v3682 = vadd.f32 %v3582, %v3681
  %v3683 = vpop.f32.mrb[0].mxu0
  %3684 = vmatprep.mubr.bf16.mxu0 %v3006
  %3685 = vmatmul.mubr.bf16.gmra.mrb[0].mxu0 %v3005
  %v3686 = vpop.f32.mrb[0].mxu0
  %v3687 = vadd.f32 %v3587, %v3686
  %v3688 = vpop.f32.mrb[0].mxu0
  %v3689 = vpop.f32.mrb[0].mxu0
  %v3690 = vadd.f32 %v3592, %v3689
  %v3691 = vpop.f32.mrb[0].mxu0
  %3692 = vmatprep.mubr.bf16.mxu0 %v3014
  %3693 = vmatmul.mubr.bf16.gmra.mrb[0].mxu0 %v3013
  %v3694 = vpop.f32.mrb[0].mxu0
  %v3695 = vadd.f32 %v3597, %v3694
  %v3696 = vpop.f32.mrb[0].mxu0
  %v3697 = vpop.f32.mrb[0].mxu0
  %v3698 = vadd.f32 %v3602, %v3697
  %v3699 = vpop.f32.mrb[0].mxu0
  %3700 = vdwg.mxu0
  %3701 = vmatprep.subr.bf16.mxu0 0
  %3702 = vmatpush1.bf16.msra.mxu0 %v357
  %3703 = vmatprep.subr.bf16.mxu0 0
  %3704 = vmatpush1.bf16.msra.mxu0 %v358
  %3705 = vmatprep.subr.bf16.mxu0 0
  %3706 = vmatpush1.bf16.msra.mxu0 %v359
  %3707 = vmatprep.subr.bf16.mxu0 0
  %3708 = vmatpush1.bf16.msra.mxu0 %v360
  %3709 = vmatprep.subr.bf16.mxu0 0
  %3710 = vmatpush1.bf16.msra.mxu0 %v361
  %3711 = vmatprep.subr.bf16.mxu0 0
  %3712 = vmatpush1.bf16.msra.mxu0 %v362
  %3713 = vmatprep.subr.bf16.mxu0 0
  %3714 = vmatpush1.bf16.msra.mxu0 %v363
  %3715 = vmatprep.subr.bf16.mxu0 0
  %3716 = vmatpush1.bf16.msra.mxu0 %v364
  %3717 = vmatprep.subr.bf16.mxu0 0
  %3718 = vmatpush1.bf16.msra.mxu0 %v365
  %3719 = vmatprep.subr.bf16.mxu0 0
  %3720 = vmatpush1.bf16.msra.mxu0 %v366
  %3721 = vmatprep.subr.bf16.mxu0 0
  %3722 = vmatpush1.bf16.msra.mxu0 %v367
  %3723 = vmatprep.subr.bf16.mxu0 0
  %3724 = vmatpush1.bf16.msra.mxu0 %v368
  %3725 = vmatprep.subr.bf16.mxu0 0
  %3726 = vmatpush1.bf16.msra.mxu0 %v369
  %3727 = vmatprep.subr.bf16.mxu0 0
  %3728 = vmatpush1.bf16.msra.mxu0 %v370
  %3729 = vmatprep.subr.bf16.mxu0 0
  %3730 = vmatpush1.bf16.msra.mxu0 %v371
  %3731 = vmatprep.subr.bf16.mxu0 0
  %3732 = vmatpush1.bf16.msra.mxu0 %v372
  %3733 = vmatprep.mubr.bf16.mxu0 %v2960
  %3734 = vmatmul.mubr.bf16.gmra.mrb[0].mxu0 %v2959
  %v3735 = vpop.f32.mrb[0].mxu0
  %v3736 = vadd.f32 %v3639, %v3735
  %v3737 = vpop.f32.mrb[0].mxu0
  %v3738 = vpop.f32.mrb[0].mxu0
  %v3739 = vadd.f32 %v3642, %v3738
  %v3740 = vpop.f32.mrb[0].mxu0
  %3741 = vmatprep.mubr.bf16.mxu0 %v2968
  %3742 = vmatmul.mubr.bf16.gmra.mrb[0].mxu0 %v2967
  %v3743 = vpop.f32.mrb[0].mxu0
  %v3744 = vadd.f32 %v3647, %v3743
  %v3745 = vpop.f32.mrb[0].mxu0
  %v3746 = vpop.f32.mrb[0].mxu0
  %v3747 = vadd.f32 %v3650, %v3746
  %v3748 = vpop.f32.mrb[0].mxu0
  %3749 = vmatprep.mubr.bf16.mxu0 %v2976
  %3750 = vmatmul.mubr.bf16.gmra.mrb[0].mxu0 %v2975
  %v3751 = vpop.f32.mrb[0].mxu0
  %v3752 = vadd.f32 %v3655, %v3751
  %v3753 = vpop.f32.mrb[0].mxu0
  %v3754 = vpop.f32.mrb[0].mxu0
  %v3755 = vadd.f32 %v3658, %v3754
  %v3756 = vpop.f32.mrb[0].mxu0
  %3757 = vmatprep.mubr.bf16.mxu0 %v2984
  %3758 = vmatmul.mubr.bf16.gmra.mrb[0].mxu0 %v2983
  %v3759 = vpop.f32.mrb[0].mxu0
  %v3760 = vadd.f32 %v3663, %v3759
  %v3761 = vpop.f32.mrb[0].mxu0
  %v3762 = vpop.f32.mrb[0].mxu0
  %v3763 = vadd.f32 %v3666, %v3762
  %v3764 = vpop.f32.mrb[0].mxu0
  %3765 = vmatprep.mubr.bf16.mxu0 %v2992
  %3766 = vmatmul.mubr.bf16.gmra.mrb[0].mxu0 %v2991
  %v3767 = vpop.f32.mrb[0].mxu0
  %v3768 = vadd.f32 %v3671, %v3767
  %v3769 = vpop.f32.mrb[0].mxu0
  %v3770 = vpop.f32.mrb[0].mxu0
  %v3771 = vadd.f32 %v3674, %v3770
  %v3772 = vpop.f32.mrb[0].mxu0
  %3773 = vmatprep.mubr.bf16.mxu0 %v3000
  %3774 = vmatmul.mubr.bf16.gmra.mrb[0].mxu0 %v2999
  %v3775 = vpop.f32.mrb[0].mxu0
  %v3776 = vadd.f32 %v3679, %v3775
  %v3777 = vpop.f32.mrb[0].mxu0
  %v3778 = vpop.f32.mrb[0].mxu0
  %v3779 = vadd.f32 %v3682, %v3778
  %v3780 = vpop.f32.mrb[0].mxu0
  %3781 = vmatprep.mubr.bf16.mxu0 %v3008
  %3782 = vmatmul.mubr.bf16.gmra.mrb[0].mxu0 %v3007
  %v3783 = vpop.f32.mrb[0].mxu0
  %v3784 = vadd.f32 %v3687, %v3783
  %v3785 = vpop.f32.mrb[0].mxu0
  %v3786 = vpop.f32.mrb[0].mxu0
  %v3787 = vadd.f32 %v3690, %v3786
  %v3788 = vpop.f32.mrb[0].mxu0
  %3789 = vmatprep.mubr.bf16.mxu0 %v3016
  %3790 = vmatmul.mubr.bf16.gmra.mrb[0].mxu0 %v3015
  %v3791 = vpop.f32.mrb[0].mxu0
  %v3792 = vadd.f32 %v3695, %v3791
  %v3793 = vpop.f32.mrb[0].mxu0
  %v3794 = vpop.f32.mrb[0].mxu0
  %v3795 = vadd.f32 %v3698, %v3794
  %v3796 = vpop.f32.mrb[0].mxu0
  %3797 = vdwg.mxu0
  %3798 = vmatprep.subr.bf16.mxu0 0
  %3799 = vmatpush1.bf16.msra.mxu0 %v373
  %3800 = vmatprep.subr.bf16.mxu0 0
  %3801 = vmatpush1.bf16.msra.mxu0 %v374
  %3802 = vmatprep.subr.bf16.mxu0 0
  %3803 = vmatpush1.bf16.msra.mxu0 %v375
  %3804 = vmatprep.subr.bf16.mxu0 0
  %3805 = vmatpush1.bf16.msra.mxu0 %v376
  %3806 = vmatprep.subr.bf16.mxu0 0
  %3807 = vmatpush1.bf16.msra.mxu0 %v377
  %3808 = vmatprep.subr.bf16.mxu0 0
  %3809 = vmatpush1.bf16.msra.mxu0 %v378
  %3810 = vmatprep.subr.bf16.mxu0 0
  %3811 = vmatpush1.bf16.msra.mxu0 %v379
  %3812 = vmatprep.subr.bf16.mxu0 0
  %3813 = vmatpush1.bf16.msra.mxu0 %v380
  %3814 = vmatprep.subr.bf16.mxu0 0
  %3815 = vmatpush1.bf16.msra.mxu0 %v381
  %3816 = vmatprep.subr.bf16.mxu0 0
  %3817 = vmatpush1.bf16.msra.mxu0 %v382
  %3818 = vmatprep.subr.bf16.mxu0 0
  %3819 = vmatpush1.bf16.msra.mxu0 %v383
  %3820 = vmatprep.subr.bf16.mxu0 0
  %3821 = vmatpush1.bf16.msra.mxu0 %v384
  %3822 = vmatprep.subr.bf16.mxu0 0
  %3823 = vmatpush1.bf16.msra.mxu0 %v385
  %3824 = vmatprep.subr.bf16.mxu0 0
  %3825 = vmatpush1.bf16.msra.mxu0 %v386
  %3826 = vmatprep.subr.bf16.mxu0 0
  %3827 = vmatpush1.bf16.msra.mxu0 %v387
  %3828 = vmatprep.subr.bf16.mxu0 0
  %3829 = vmatpush1.bf16.msra.mxu0 %v388
  %3830 = vmatprep.mubr.bf16.mxu0 %v2962
  %3831 = vmatmul.mubr.bf16.gmra.mrb[0].mxu0 %v2961
  %v3832 = vpop.f32.mrb[0].mxu0
  %v3833 = vadd.f32 %v3736, %v3832
  %v3834 = vpop.f32.mrb[0].mxu0
  %v3835 = vpop.f32.mrb[0].mxu0
  %v3836 = vadd.f32 %v3739, %v3835
  %v3837 = vpop.f32.mrb[0].mxu0
  %3838 = vmatprep.mubr.bf16.mxu0 %v2970
  %3839 = vmatmul.mubr.bf16.gmra.mrb[0].mxu0 %v2969
  %v3840 = vpop.f32.mrb[0].mxu0
  %v3841 = vadd.f32 %v3744, %v3840
  %v3842 = vpop.f32.mrb[0].mxu0
  %v3843 = vpop.f32.mrb[0].mxu0
  %v3844 = vadd.f32 %v3747, %v3843
  %v3845 = vpop.f32.mrb[0].mxu0
  %3846 = vmatprep.mubr.bf16.mxu0 %v2978
  %3847 = vmatmul.mubr.bf16.gmra.mrb[0].mxu0 %v2977
  %v3848 = vpop.f32.mrb[0].mxu0
  %v3849 = vadd.f32 %v3752, %v3848
  %v3850 = vpop.f32.mrb[0].mxu0
  %v3851 = vpop.f32.mrb[0].mxu0
  %v3852 = vadd.f32 %v3755, %v3851
  %v3853 = vpop.f32.mrb[0].mxu0
  %3854 = vmatprep.mubr.bf16.mxu0 %v2986
  %3855 = vmatmul.mubr.bf16.gmra.mrb[0].mxu0 %v2985
  %v3856 = vpop.f32.mrb[0].mxu0
  %v3857 = vadd.f32 %v3760, %v3856
  %v3858 = vpop.f32.mrb[0].mxu0
  %v3859 = vpop.f32.mrb[0].mxu0
  %v3860 = vadd.f32 %v3763, %v3859
  %v3861 = vpop.f32.mrb[0].mxu0
  %3862 = vmatprep.mubr.bf16.mxu0 %v2994
  %3863 = vmatmul.mubr.bf16.gmra.mrb[0].mxu0 %v2993
  %v3864 = vpop.f32.mrb[0].mxu0
  %v3865 = vadd.f32 %v3768, %v3864
  %v3866 = vpop.f32.mrb[0].mxu0
  %v3867 = vpop.f32.mrb[0].mxu0
  %v3868 = vadd.f32 %v3771, %v3867
  %v3869 = vpop.f32.mrb[0].mxu0
  %3870 = vmatprep.mubr.bf16.mxu0 %v3002
  %3871 = vmatmul.mubr.bf16.gmra.mrb[0].mxu0 %v3001
  %v3872 = vpop.f32.mrb[0].mxu0
  %v3873 = vadd.f32 %v3776, %v3872
  %v3874 = vpop.f32.mrb[0].mxu0
  %v3875 = vpop.f32.mrb[0].mxu0
  %v3876 = vadd.f32 %v3779, %v3875
  %v3877 = vpop.f32.mrb[0].mxu0
  %3878 = vmatprep.mubr.bf16.mxu0 %v3010
  %3879 = vmatmul.mubr.bf16.gmra.mrb[0].mxu0 %v3009
  %v3880 = vpop.f32.mrb[0].mxu0
  %v3881 = vadd.f32 %v3784, %v3880
  %v3882 = vpop.f32.mrb[0].mxu0
  %v3883 = vpop.f32.mrb[0].mxu0
  %v3884 = vadd.f32 %v3787, %v3883
  %v3885 = vpop.f32.mrb[0].mxu0
  %3886 = vmatprep.mubr.bf16.mxu0 %v3018
  %3887 = vmatmul.mubr.bf16.gmra.mrb[0].mxu0 %v3017
  %v3888 = vpop.f32.mrb[0].mxu0
  %v3889 = vadd.f32 %v3792, %v3888
  %v3890 = vpop.f32.mrb[0].mxu0
  %v3891 = vpop.f32.mrb[0].mxu0
  %v3892 = vadd.f32 %v3795, %v3891
  %v3893 = vpop.f32.mrb[0].mxu0
  %3894 = vdwg.mxu0
  %3895 = vmatprep.subr.bf16.mxu0 0
  %3896 = vmatpush1.bf16.msra.mxu0 %v389
  %3897 = vmatprep.subr.bf16.mxu0 0
  %3898 = vmatpush1.bf16.msra.mxu0 %v390
  %3899 = vmatprep.subr.bf16.mxu0 0
  %3900 = vmatpush1.bf16.msra.mxu0 %v391
  %3901 = vmatprep.subr.bf16.mxu0 0
  %3902 = vmatpush1.bf16.msra.mxu0 %v392
  %3903 = vmatprep.subr.bf16.mxu0 0
  %3904 = vmatpush1.bf16.msra.mxu0 %v393
  %3905 = vmatprep.subr.bf16.mxu0 0
  %3906 = vmatpush1.bf16.msra.mxu0 %v394
  %3907 = vmatprep.subr.bf16.mxu0 0
  %3908 = vmatpush1.bf16.msra.mxu0 %v395
  %3909 = vmatprep.subr.bf16.mxu0 0
  %3910 = vmatpush1.bf16.msra.mxu0 %v396
  %3911 = vmatprep.subr.bf16.mxu0 0
  %3912 = vmatpush1.bf16.msra.mxu0 %v397
  %3913 = vmatprep.subr.bf16.mxu0 0
  %3914 = vmatpush1.bf16.msra.mxu0 %v398
  %3915 = vmatprep.subr.bf16.mxu0 0
  %3916 = vmatpush1.bf16.msra.mxu0 %v399
  %3917 = vmatprep.subr.bf16.mxu0 0
  %3918 = vmatpush1.bf16.msra.mxu0 %v400
  %3919 = vmatprep.subr.bf16.mxu0 0
  %3920 = vmatpush1.bf16.msra.mxu0 %v401
  %3921 = vmatprep.subr.bf16.mxu0 0
  %3922 = vmatpush1.bf16.msra.mxu0 %v402
  %3923 = vmatprep.subr.bf16.mxu0 0
  %3924 = vmatpush1.bf16.msra.mxu0 %v403
  %3925 = vmatprep.subr.bf16.mxu0 0
  %3926 = vmatpush1.bf16.msra.mxu0 %v404
  %3927 = vmatprep.mubr.bf16.mxu0 %v2964
  %3928 = vmatmul.mubr.bf16.gmra.mrb[0].mxu0 %v2963
  %v3929 = vpop.f32.mrb[0].mxu0
  %v3930 = vadd.f32 %v3833, %v3929
  %v3931 = vpop.f32.mrb[0].mxu0
  %v3932 = vpop.f32.mrb[0].mxu0
  %v3933 = vadd.f32 %v3836, %v3932
  %v3934 = vpop.f32.mrb[0].mxu0
  %3935 = vmatprep.mubr.bf16.mxu0 %v2972
  %3936 = vmatmul.mubr.bf16.gmra.mrb[0].mxu0 %v2971
  %v3937 = vpop.f32.mrb[0].mxu0
  %v3938 = vadd.f32 %v3841, %v3937
  %v3939 = vpop.f32.mrb[0].mxu0
  %v3940 = vpop.f32.mrb[0].mxu0
  %v3941 = vadd.f32 %v3844, %v3940
  %v3942 = vpop.f32.mrb[0].mxu0
  %3943 = vmatprep.mubr.bf16.mxu0 %v2980
  %3944 = vmatmul.mubr.bf16.gmra.mrb[0].mxu0 %v2979
  %v3945 = vpop.f32.mrb[0].mxu0
  %v3946 = vadd.f32 %v3849, %v3945
  %v3947 = vpop.f32.mrb[0].mxu0
  %v3948 = vpop.f32.mrb[0].mxu0
  %v3949 = vadd.f32 %v3852, %v3948
  %v3950 = vpop.f32.mrb[0].mxu0
  %3951 = vmatprep.mubr.bf16.mxu0 %v2988
  %3952 = vmatmul.mubr.bf16.gmra.mrb[0].mxu0 %v2987
  %v3953 = vpop.f32.mrb[0].mxu0
  %v3954 = vadd.f32 %v3857, %v3953
  %v3955 = vpop.f32.mrb[0].mxu0
  %v3956 = vpop.f32.mrb[0].mxu0
  %v3957 = vadd.f32 %v3860, %v3956
  %v3958 = vpop.f32.mrb[0].mxu0
  %3959 = vmatprep.mubr.bf16.mxu0 %v2996
  %3960 = vmatmul.mubr.bf16.gmra.mrb[0].mxu0 %v2995
  %v3961 = vpop.f32.mrb[0].mxu0
  %v3962 = vadd.f32 %v3865, %v3961
  %v3963 = vpop.f32.mrb[0].mxu0
  %v3964 = vpop.f32.mrb[0].mxu0
  %v3965 = vadd.f32 %v3868, %v3964
  %v3966 = vpop.f32.mrb[0].mxu0
  %3967 = vmatprep.mubr.bf16.mxu0 %v3004
  %3968 = vmatmul.mubr.bf16.gmra.mrb[0].mxu0 %v3003
  %v3969 = vpop.f32.mrb[0].mxu0
  %v3970 = vadd.f32 %v3873, %v3969
  %v3971 = vpop.f32.mrb[0].mxu0
  %v3972 = vpop.f32.mrb[0].mxu0
  %v3973 = vadd.f32 %v3876, %v3972
  %v3974 = vpop.f32.mrb[0].mxu0
  %3975 = vmatprep.mubr.bf16.mxu0 %v3012
  %3976 = vmatmul.mubr.bf16.gmra.mrb[0].mxu0 %v3011
  %v3977 = vpop.f32.mrb[0].mxu0
  %v3978 = vadd.f32 %v3881, %v3977
  %v3979 = vpop.f32.mrb[0].mxu0
  %v3980 = vpop.f32.mrb[0].mxu0
  %v3981 = vadd.f32 %v3884, %v3980
  %v3982 = vpop.f32.mrb[0].mxu0
  %3983 = vmatprep.mubr.bf16.mxu0 %v3020
  %3984 = vmatmul.mubr.bf16.gmra.mrb[0].mxu0 %v3019
  %v3985 = vpop.f32.mrb[0].mxu0
  %v3986 = vadd.f32 %v3889, %v3985
  %v3987 = vpop.f32.mrb[0].mxu0
  %v3988 = vpop.f32.mrb[0].mxu0
  %v3989 = vadd.f32 %v3892, %v3988
  %v3990 = vpop.f32.mrb[0].mxu0
  %3991 = vdwg.mxu0
  %s3992 = scalar_lea.vmem %s5, 128
  %3993 = vst.msk [vmem:[%s3992] sm:$0xff] %vm407, %v3930
  %3994 = vst.msk [vmem:[%s3992 + $0x8] sm:$0xff] %vm407, %v3933
  %3995 = vst.msk [vmem:[%s3992 + $0x10] sm:$0xff] %vm407, %v3938
  %3996 = vst.msk [vmem:[%s3992 + $0x18] sm:$0xff] %vm407, %v3941
  %3997 = vst.msk [vmem:[%s3992 + $0x20] sm:$0xff] %vm407, %v3946
  %3998 = vst.msk [vmem:[%s3992 + $0x28] sm:$0xff] %vm407, %v3949
  %3999 = vst.msk [vmem:[%s3992 + $0x30] sm:$0xff] %vm407, %v3954
  %4000 = vst.msk [vmem:[%s3992 + $0x38] sm:$0xff] %vm407, %v3957
  %4001 = vst.msk [vmem:[%s3992 + $0x40] sm:$0xff] %vm407, %v3962
  %4002 = vst.msk [vmem:[%s3992 + $0x48] sm:$0xff] %vm407, %v3965
  %4003 = vst.msk [vmem:[%s3992 + $0x50] sm:$0xff] %vm407, %v3970
  %4004 = vst.msk [vmem:[%s3992 + $0x58] sm:$0xff] %vm407, %v3973
  %4005 = vst.msk [vmem:[%s3992 + $0x60] sm:$0xff] %vm407, %v3978
  %4006 = vst.msk [vmem:[%s3992 + $0x68] sm:$0xff] %vm407, %v3981
  %4007 = vst.msk [vmem:[%s3992 + $0x70] sm:$0xff] %vm407, %v3986
  %4008 = vst.msk [vmem:[%s3992 + $0x78] sm:$0xff] %vm407, %v3989
  // Predicated region
  $region22: #{super_event_forward.1} parent=0 // pred_check
    _
  $region23: #{super_event_forward.1} parent=0 // pred_check_branch
    %4010 = sbr.rel (0) target = $region25
  $region24: #{super_event_forward.1} parent=0 // pred_region
    _
  $region25: #{super_event_forward.1} parent=0 // pred_fallthru
    _
  // Predicated region
  $region26: #{super_event_forward.1} parent=0 // pred_check
    _
  $region27: #{super_event_forward.1} parent=0 // pred_check_branch
    %4012 = sbr.rel (0) target = $region29
  $region28: #{super_event_forward.1} parent=0 // pred_region
    _
  $region29: #{super_event_forward.1} parent=0 // pred_fallthru
    _

</llo_original>
